<compile_context>
chip_gen: v7x
topology: tpu7x:2x2x1
jax: 0.10.0
libtpu: 0.0.40
codegen_flags: <defaults>
</compile_context>

<pallas_src>
import math
from functools import partial

import jax
import jax.numpy as jnp
from jax.experimental import pallas as pl
from jax.experimental.pallas import tpu as pltpu

F32 = jnp.float32
BF16 = jnp.bfloat16
NEG_BIG = -1e30            # "minus infinity" for masked attention logits

# Tile preferences.  v5e: keep multiples of 128; v6e/v7x: prefer multiples of
# 256 to fill the 256-wide MXU.  Src (reduction) tiles can be larger on
# v5e/v6e (128 MiB VMEM); on v7x (64 MiB) keep them modest or raise
# VMEM_LIMIT_BYTES explicitly (<= ~48-56 MiB, leaving double-buffer headroom).
ROW_TILE_M = 256           # row tile for plain matmul kernels
ROW_TILE_Q = 256           # GAT/GCN dst-row tile
ROW_TILE_K = 512           # GAT/GCN src-row (reduction) tile
VMEM_LIMIT_BYTES = None    # e.g. 48 * 1024 * 1024 when scaling tiles on v7x


def _cparams(dimension_semantics):
    kw = dict(dimension_semantics=dimension_semantics)
    if VMEM_LIMIT_BYTES is not None:
        kw["vmem_limit_bytes"] = VMEM_LIMIT_BYTES
    return pltpu.CompilerParams(**kw)


def _row_tile(n, pref):
    """Largest tile <= pref that divides n (multiple of 8 for sublane tiling)."""
    if n <= pref:
        return n
    t = (pref // 8) * 8
    while t >= 8:
        if n % t == 0:
            return t
        t -= 8
    # TODO(synk): pad the row count to a multiple of 8 and mask instead of a
    # single whole-axis block (hurts v7x dual-TC sharding and VMEM).
    return n


# ------------------------------ Pallas kernels ------------------------------

def _linear_bias_kernel(x_ref, w_ref, b_ref, o_ref):
    y = jnp.dot(x_ref[...].astype(BF16), w_ref[...],
                preferred_element_type=F32) + b_ref[...]
    o_ref[...] = y.astype(o_ref.dtype)


def _linear_nobias_kernel(x_ref, w_ref, o_ref):
    y = jnp.dot(x_ref[...].astype(BF16), w_ref[...], preferred_element_type=F32)
    o_ref[...] = y.astype(o_ref.dtype)


def _gat_attention_kernel(v_ref, asrc_ref, adst_ref, mask_ref, bias_ref,
                          o_ref, m_ref, l_ref, acc_ref):
    """Head-batched masked-softmax aggregation (GATConv, PyG semantics).

    Blocks: v (H, tk, dh) bf16 values, asrc (H, 1, tk) / adst (H, tq, 1) f32
    pre-folded attention logits, mask (tq, tk) int8, bias (H, 1, dh).
    Online softmax over the src (k) grid axis; m/l/acc scratch are full-width
    reads/writes (lane-dense stores).
    """
    k = pl.program_id(1)

    @pl.when(k == 0)
    def _init():
        m_ref[...] = jnp.full(m_ref.shape, NEG_BIG, dtype=m_ref.dtype)
        l_ref[...] = jnp.zeros(l_ref.shape, dtype=l_ref.dtype)
        acc_ref[...] = jnp.zeros(acc_ref.shape, dtype=acc_ref.dtype)

    # scores: s[h, i, j] = leaky_relu(a_dst[h, i] + a_src[h, j], 0.2)
    s = adst_ref[...] + asrc_ref[...]                     # (H, tq, tk)
    s = jnp.where(s > 0.0, s, 0.2 * s)
    edge = mask_ref[...].astype(F32) > 0.0                # (tq, tk) bool
    s = jnp.where(edge, s, NEG_BIG)                       # broadcast over heads

    # online softmax (explicitly zero masked probs -> robust to all-masked blocks)
    m_prev = m_ref[...]
    m_new = jnp.maximum(m_prev, jnp.max(s, axis=-1, keepdims=True))
    alpha = jnp.exp(m_prev - m_new)
    p = jnp.where(edge, jnp.exp(s - m_new), 0.0)          # (H, tq, tk)
    l_ref[...] = alpha * l_ref[...] + jnp.sum(p, axis=-1, keepdims=True)
    acc_ref[...] = alpha * acc_ref[...] + jnp.einsum(
        "hqk,hkd->hqd", p.astype(BF16), v_ref[...], preferred_element_type=F32)
    m_ref[...] = m_new

    @pl.when(k == pl.num_programs(1) - 1)
    def _finalize():
        # exact division (runs once per output tile), + GAT bias, then F.relu
        out = acc_ref[...] / l_ref[...] + bias_ref[...]
        o_ref[...] = jnp.maximum(out, 0.0).astype(o_ref.dtype)


def _gcn_kernel(a_ref, xw_ref, b_ref, o_ref, acc_ref):
    """GCNConv aggregation: relu(A_norm @ (X W) + b); X W precomputed outside."""
    k = pl.program_id(1)

    @pl.when(k == 0)
    def _init():
        acc_ref[...] = jnp.zeros(acc_ref.shape, dtype=acc_ref.dtype)

    acc_ref[...] += jnp.dot(a_ref[...], xw_ref[...], preferred_element_type=F32)

    @pl.when(k == pl.num_programs(1) - 1)
    def _finalize():
        o_ref[...] = jnp.maximum(acc_ref[...] + b_ref[...], 0.0).astype(o_ref.dtype)


def _fuse_kernel(hg_ref, hc_ref, wt_ref, wb_ref, b_ref, o_ref):
    """concat([h_gat, h_gcn]) @ W + b  ==  h_gat @ W_top + h_gcn @ W_bot + b."""
    y = jnp.dot(hg_ref[...].astype(BF16), wt_ref[...], preferred_element_type=F32)
    y = y + jnp.dot(hc_ref[...].astype(BF16), wb_ref[...], preferred_element_type=F32)
    o_ref[...] = (y + b_ref[...]).astype(o_ref.dtype)


def _edge_enc_kernel(ea_ref, w1_ref, b1_ref, w2_ref, b2_ref, o_ref):
    """Linear(1, D/4) + ReLU + Linear(D/4, D/2) fused (first layer K=1 -> VPU bcast)."""
    y = ea_ref[...] * w1_ref[...] + b1_ref[...]
    y = jnp.maximum(y, 0.0)
    y = jnp.dot(y.astype(BF16), w2_ref[...], preferred_element_type=F32) + b2_ref[...]
    o_ref[...] = y.astype(o_ref.dtype)


def _edge_head_kernel(hs_ref, hd_ref, ef_ref,
                      cw1s, cw1d, cw1e, cb1, cw2, cb2, cw3, cb3,
                      pw1s, pw1d, pw1e, pb1, pw2, pb2, pw3, pb3,
                      logit_ref, param_ref):
    """Both 3-layer MLP heads (edge classifier + param predictor) fused, concat-free."""
    hs = hs_ref[...].astype(BF16)
    hd = hd_ref[...].astype(BF16)
    ef = ef_ref[...].astype(BF16)

    def mlp3(w1s, w1d, w1e, b1, w2, b2, w3, b3):
        # concat([hs, hd, ef]) @ W1 == hs@W1s + hd@W1d + ef@W1e
        y = (jnp.dot(hs, w1s[...], preferred_element_type=F32)
             + jnp.dot(hd, w1d[...], preferred_element_type=F32)
             + jnp.dot(ef, w1e[...], preferred_element_type=F32) + b1[...])
        y = jnp.maximum(y, 0.0)
        y = jnp.dot(y.astype(BF16), w2[...], preferred_element_type=F32) + b2[...]
        y = jnp.maximum(y, 0.0)
        return jnp.dot(y.astype(BF16), w3[...], preferred_element_type=F32) + b3[...]

    logit_ref[...] = mlp3(cw1s, cw1d, cw1e, cb1, cw2, cb2, cw3, cb3)
    p = mlp3(pw1s, pw1d, pw1e, pb1, pw2, pb2, pw3, pb3)
    # F.softplus(p) + 1e-6 (threshold-20, like torch)
    param_ref[...] = jnp.where(
        p > 20.0, p, jnp.log(1.0 + jnp.exp(jnp.minimum(p, 20.0)))) + 1e-6


# ------------------------------ layer wrappers ------------------------------

def pallas_linear(x, w_bf16, b2d=None, out_dtype=BF16, tm_pref=ROW_TILE_M):
    """y = x @ w (+ b), row-tiled; bf16 MXU inputs, f32 accumulation."""
    M, K = x.shape
    Nout = w_bf16.shape[1]
    tm = _row_tile(M, tm_pref)
    in_specs = [pl.BlockSpec((tm, K), lambda i: (i, 0)),
                pl.BlockSpec((K, Nout), lambda i: (0, 0))]
    args = [x, w_bf16]
    kernel = _linear_nobias_kernel
    if b2d is not None:
        in_specs.append(pl.BlockSpec((1, Nout), lambda i: (0, 0)))
        args.append(b2d)
        kernel = _linear_bias_kernel
    return pl.pallas_call(
        kernel,
        out_shape=jax.ShapeDtypeStruct((M, Nout), out_dtype),
        grid_spec=pltpu.PrefetchScalarGridSpec(
            num_scalar_prefetch=0, grid=(M // tm,),
            in_specs=in_specs,
            out_specs=pl.BlockSpec((tm, Nout), lambda i: (i, 0)),
        ),
        compiler_params=_cparams(("parallel",)),
    )(*args)


def gat_layer(h, mask_i8, lp, n_heads, tq_pref=ROW_TILE_Q, tk_pref=ROW_TILE_K):
    """GATConv(concat=True) + bias + ReLU with a hoisted fused projection."""
    N = h.shape[0]
    D = lp["w_comb"].shape[1] - 2 * n_heads
    dh = D // n_heads

    # 1) hoisted projection, one MXU pass per layer:  [x W | x(W att_src) | x(W att_dst)]
    proj = pallas_linear(h, lp["w_comb"])                      # (N, D + 2H) bf16
    xw = proj[:, :D]
    asrc = proj[:, D:D + n_heads].astype(F32)
    adst = proj[:, D + n_heads:].astype(F32)

    # head-major layouts for the attention kernel (cheap O(N*D) XLA glue)
    v_hm = xw.reshape(N, n_heads, dh).transpose(1, 0, 2)       # (H, N, dh) bf16
    asrc3 = asrc.T.reshape(n_heads, 1, N)                      # (H, 1, N)  f32
    adst3 = adst.T.reshape(n_heads, N, 1)                      # (H, N, 1)  f32

    tq = _row_tile(N, tq_pref)
    tk = _row_tile(N, tk_pref)

    out_hm = pl.pallas_call(
        _gat_attention_kernel,
        out_shape=jax.ShapeDtypeStruct((n_heads, N, dh), BF16),
        grid_spec=pltpu.PrefetchScalarGridSpec(
            num_scalar_prefetch=0,
            grid=(N // tq, N // tk),
            in_specs=[
                pl.BlockSpec((n_heads, tk, dh), lambda q, k: (0, k, 0)),  # values (src)
                pl.BlockSpec((n_heads, 1, tk), lambda q, k: (0, 0, k)),   # a_src
                pl.BlockSpec((n_heads, tq, 1), lambda q, k: (0, q, 0)),   # a_dst
                pl.BlockSpec((tq, tk), lambda q, k: (q, k)),              # int8 edge mask
                pl.BlockSpec((n_heads, 1, dh), lambda q, k: (0, 0, 0)),   # GAT bias
            ],
            out_specs=pl.BlockSpec((n_heads, tq, dh), lambda q, k: (0, q, 0)),
            scratch_shapes=[pltpu.VMEM((n_heads, tq, 1), F32),   # m (online max)
                            pltpu.VMEM((n_heads, tq, 1), F32),   # l (denominator)
                            pltpu.VMEM((n_heads, tq, dh), F32)], # acc
        ),
        compiler_params=_cparams(("parallel", "arbitrary")),
    )(v_hm, asrc3, adst3, mask_i8, lp["bias_hm"])

    # back to node-major (N, D) for the next layer / fusion (XLA glue)
    return out_hm.transpose(1, 0, 2).reshape(N, D)


def gcn_layer(h, a_norm, lp, tq_pref=ROW_TILE_Q, tk_pref=ROW_TILE_K):
    """GCNConv: relu(D^-1/2 (A+I) D^-1/2 @ (X W) + b); X W precomputed once."""
    N = h.shape[0]
    Dout = lp["w"].shape[1]
    xw = pallas_linear(h, lp["w"])                             # (N, Dout) bf16
    tq = _row_tile(N, tq_pref)
    tk = _row_tile(N, tk_pref)
    return pl.pallas_call(
        _gcn_kernel,
        out_shape=jax.ShapeDtypeStruct((N, Dout), BF16),
        grid_spec=pltpu.PrefetchScalarGridSpec(
            num_scalar_prefetch=0,
            grid=(N // tq, N // tk),
            in_specs=[
                pl.BlockSpec((tq, tk), lambda q, k: (q, k)),    # normalized adjacency (bf16)
                pl.BlockSpec((tk, Dout), lambda q, k: (k, 0)),  # precomputed X W (bf16)
                pl.BlockSpec((1, Dout), lambda q, k: (0, 0)),   # bias
            ],
            out_specs=pl.BlockSpec((tq, Dout), lambda q, k: (q, 0)),
            scratch_shapes=[pltpu.VMEM((tq, Dout), F32)],
        ),
        compiler_params=_cparams(("parallel", "arbitrary")),
    )(a_norm, xw, lp["b"])


def fuse_features(h_gat, h_gcn, fp, tm_pref=ROW_TILE_M):
    N, D = h_gat.shape
    Dout = fp["w_top"].shape[1]
    tm = _row_tile(N, tm_pref)
    return pl.pallas_call(
        _fuse_kernel,
        out_shape=jax.ShapeDtypeStruct((N, Dout), BF16),
        grid_spec=pltpu.PrefetchScalarGridSpec(
            num_scalar_prefetch=0, grid=(N // tm,),
            in_specs=[pl.BlockSpec((tm, D), lambda i: (i, 0)),
                      pl.BlockSpec((tm, D), lambda i: (i, 0)),
                      pl.BlockSpec((D, Dout), lambda i: (0, 0)),
                      pl.BlockSpec((D, Dout), lambda i: (0, 0)),
                      pl.BlockSpec((1, Dout), lambda i: (0, 0))],
            out_specs=pl.BlockSpec((tm, Dout), lambda i: (i, 0)),
        ),
        compiler_params=_cparams(("parallel",)),
    )(h_gat, h_gcn, fp["w_top"], fp["w_bot"], fp["b"])


def edge_encoder(edge_attr, ep, te_pref=ROW_TILE_M):
    E = edge_attr.shape[0]
    D4 = ep["w1"].shape[1]
    D2 = ep["w2"].shape[1]
    te = _row_tile(E, te_pref)
    return pl.pallas_call(
        _edge_enc_kernel,
        out_shape=jax.ShapeDtypeStruct((E, D2), BF16),
        grid_spec=pltpu.PrefetchScalarGridSpec(
            num_scalar_prefetch=0, grid=(E // te,),
            in_specs=[pl.BlockSpec((te, 1), lambda i: (i, 0)),
                      pl.BlockSpec((1, D4), lambda i: (0, 0)),
                      pl.BlockSpec((1, D4), lambda i: (0, 0)),
                      pl.BlockSpec((D4, D2), lambda i: (0, 0)),
                      pl.BlockSpec((1, D2), lambda i: (0, 0))],
            out_specs=pl.BlockSpec((te, D2), lambda i: (i, 0)),
        ),
        compiler_params=_cparams(("parallel",)),
    )(edge_attr, ep["w1"], ep["b1"], ep["w2"], ep["b2"])


def edge_heads(h_src, h_dst, ef, cls_p, pp_p, te_pref=ROW_TILE_M):
    E, D = h_src.shape
    D2 = ef.shape[1]
    P = pp_p["w3"].shape[1]
    te = _row_tile(E, te_pref)

    row = lambda i: (i, 0)
    full = lambda i: (0, 0)
    keys = ("w1s", "w1d", "w1e", "b1", "w2", "b2", "w3", "b3")
    head_args = [cls_p[k] for k in keys] + [pp_p[k] for k in keys]

    in_specs = ([pl.BlockSpec((te, D), row),
                 pl.BlockSpec((te, D), row),
                 pl.BlockSpec((te, D2), row)]
                + [pl.BlockSpec(a.shape, full) for a in head_args])

    return pl.pallas_call(
        _edge_head_kernel,
        out_shape=(jax.ShapeDtypeStruct((E, 1), F32),
                   jax.ShapeDtypeStruct((E, P), F32)),
        grid_spec=pltpu.PrefetchScalarGridSpec(
            num_scalar_prefetch=0, grid=(E // te,),
            in_specs=in_specs,
            out_specs=(pl.BlockSpec((te, 1), row),
                       pl.BlockSpec((te, P), row)),
        ),
        compiler_params=_cparams(("parallel",)),
    )(h_src, h_dst, ef, *head_args)


# ------------------------------ full forward --------------------------------

def hybrid_graph_transformer_forward(params, x, edge_index, edge_attr, n_heads):
    N = x.shape[0]
    src, dst = edge_index[0], edge_index[1]

    # graph-structure prep (XLA glue: scatter has no clean Pallas equivalent)
    A = jnp.zeros((N, N), F32).at[dst, src].set(1.0)         # A[i, j] = 1 iff edge j -> i
    adj_sl = jnp.maximum(A, jnp.eye(N, dtype=F32))           # + self loops (PyG default)
    mask_i8 = (adj_sl > 0.5).astype(jnp.int8)                # 1-byte GAT edge mask
    deg = jnp.sum(adj_sl, axis=1)
    dinv = jax.lax.rsqrt(deg)
    a_norm = (adj_sl * dinv[:, None] * dinv[None, :]).astype(BF16)  # GCN normalization
    # TODO(synk): for sparse graphs, add a scalar-prefetched block-occupancy table and
    # pl.when-skip fully-masked (q, k) blocks in the GAT/GCN kernels.

    # input projection (bf16 activations between layers)
    h = pallas_linear(x, params["in_proj"]["w"], params["in_proj"]["b"])

    # GAT branch (dropout = identity at inference)
    h_gat = h
    for lp in params["gat_layers"]:
        h_gat = gat_layer(h_gat, mask_i8, lp, n_heads)

    # GCN branch
    h_gcn = h
    for lp in params["gcn_layers"]:
        h_gcn = gcn_layer(h_gcn, a_norm, lp)

    # feature fusion (concat-free, split weights)
    h_comb = fuse_features(h_gat, h_gcn, params["fuse"])

    # edge encoder (both layers fused)
    ef = edge_encoder(edge_attr, params["edge_enc"])

    # TODO(synk): for very large E, gather h_comb[src]/h_comb[dst] inside the edge-head
    # kernel (scalar-prefetched indices + manual row DMA) instead of two (E, D) arrays.
    h_src = h_comb[src]
    h_dst = h_comb[dst]

    logits, edge_params = edge_heads(h_src, h_dst, ef, params["cls"], params["pp"])
    return logits[:, 0], edge_params


# ------------------------------ parameters ----------------------------------

def _glorot(key, shape):
    fan_in, fan_out = shape[0], shape[-1]
    limit = math.sqrt(6.0 / (fan_in + fan_out))
    return jax.random.uniform(key, shape, F32, -limit, limit)


def init_params(key, d_input, d_hidden, n_heads, n_layers, n_edge_params):
    d_head = d_hidden // n_heads
    keys = iter(jax.random.split(key, 64))
    nk = lambda: next(keys)
    z = lambda n: jnp.zeros((n,), F32)

    params = {
        "in_proj": {"w": _glorot(nk(), (d_input, d_hidden)), "b": z(d_hidden)},
        "gat_layers": [],
        "gcn_layers": [],
        "fuse": {"w": _glorot(nk(), (2 * d_hidden, d_hidden)), "b": z(d_hidden)},
        "edge_enc": {"w1": _glorot(nk(), (1, d_hidden // 4)), "b1": z(d_hidden // 4),
                     "w2": _glorot(nk(), (d_hidden // 4, d_hidden // 2)),
                     "b2": z(d_hidden // 2)},
    }
    d_ef = 2 * d_hidden + d_hidden // 2
    for name, out_dim in (("cls", 1), ("pp", n_edge_params)):
        params[name] = {
            "w1": _glorot(nk(), (d_ef, d_hidden)), "b1": z(d_hidden),
            "w2": _glorot(nk(), (d_hidden, d_hidden // 2)), "b2": z(d_hidden // 2),
            "w3": _glorot(nk(), (d_hidden // 2, out_dim)), "b3": z(out_dim),
        }
    for _ in range(n_layers // 2):
        params["gat_layers"].append({
            "w": _glorot(nk(), (d_hidden, n_heads * d_head)),
            "att_src": _glorot(nk(), (n_heads, d_head)),
            "att_dst": _glorot(nk(), (n_heads, d_head)),
            "bias": z(n_heads * d_head),
        })
        params["gcn_layers"].append({
            "w": _glorot(nk(), (d_hidden, d_hidden)),
            "bias": z(d_hidden),
        })
    return params


def prepare_params(raw, n_heads):
    """Kernel-ready parameters: bf16 matmul weights, GAT attention vectors folded
    into a single combined projection, concat-free weight splits, 2-D biases."""
    r2 = lambda b: b.reshape(1, -1)
    d_hidden = raw["in_proj"]["w"].shape[1]
    prep = {
        "in_proj": {"w": raw["in_proj"]["w"].astype(BF16), "b": r2(raw["in_proj"]["b"])},
        "gat_layers": [], "gcn_layers": [],
    }
    for lp in raw["gat_layers"]:
        d_in, d_out = lp["w"].shape
        dh = d_out // n_heads
        w3 = lp["w"].reshape(d_in, n_heads, dh)
        # fold att vectors into the projection:  (x W)_h . att_h == x (W_h att_h)
        w_src = jnp.einsum("dhe,he->dh", w3, lp["att_src"])
        w_dst = jnp.einsum("dhe,he->dh", w3, lp["att_dst"])
        prep["gat_layers"].append({
            "w_comb": jnp.concatenate([lp["w"], w_src, w_dst], axis=1).astype(BF16),
            "bias_hm": lp["bias"].reshape(n_heads, 1, dh),       # head-major bias (f32)
        })
    for lp in raw["gcn_layers"]:
        prep["gcn_layers"].append({"w": lp["w"].astype(BF16), "b": r2(lp["bias"])})
    prep["fuse"] = {"w_top": raw["fuse"]["w"][:d_hidden].astype(BF16),
                    "w_bot": raw["fuse"]["w"][d_hidden:].astype(BF16),
                    "b": r2(raw["fuse"]["b"])}
    ee = raw["edge_enc"]
    prep["edge_enc"] = {"w1": ee["w1"], "b1": r2(ee["b1"]),
                        "w2": ee["w2"].astype(BF16), "b2": r2(ee["b2"])}
    for name in ("cls", "pp"):
        p = raw[name]
        w1 = p["w1"]
        prep[name] = {
            "w1s": w1[:d_hidden].astype(BF16),                # rows multiplying h_comb[src]
            "w1d": w1[d_hidden:2 * d_hidden].astype(BF16),    # rows multiplying h_comb[dst]
            "w1e": w1[2 * d_hidden:].astype(BF16),            # rows multiplying edge features
            "b1": r2(p["b1"]),
            "w2": p["w2"].astype(BF16), "b2": r2(p["b2"]),
            "w3": p["w3"].astype(BF16), "b3": r2(p["b3"]),
        }
    return prep


# ----------------------------------- main ------------------------------------

if __name__ == "__main__":
    # Small config: d_input=8, d_hidden=32, n_heads=4, n_layers=2, n_edge_params=3
    N, D_IN, D_HID, H, N_LAYERS, N_EP = 8, 8, 32, 4, 2, 3

    key = jax.random.PRNGKey(0)
    k_x, k_ea, k_p = jax.random.split(key, 3)

    x = jax.random.normal(k_x, (N, D_IN), dtype=jnp.float32)

    # Directed ring + skip edges: 16 edges, no self loops, no duplicates
    src = jnp.array(list(range(N)) + list(range(N)), dtype=jnp.int32)
    dst = jnp.array([(i + 1) % N for i in range(N)] + [(i + 2) % N for i in range(N)],
                    dtype=jnp.int32)
    edge_index = jnp.stack([src, dst])            # (2, E), E = 16
    E = edge_index.shape[1]
    edge_attr = jax.random.normal(k_ea, (E, 1), dtype=jnp.float32)

    raw_params = init_params(k_p, D_IN, D_HID, H, N_LAYERS, N_EP)
    params = prepare_params(raw_params, H)

    fwd = jax.jit(partial(hybrid_graph_transformer_forward, n_heads=H))
    edge_logits, edge_params = fwd(params, x, edge_index, edge_attr)
    jax.block_until_ready((edge_logits, edge_params))

    assert edge_logits.shape == (E,)
    assert edge_params.shape == (E, N_EP)
    assert bool(jnp.all(edge_params > 0.0))       # softplus + eps > 0

    print("KERNEL_OK")
</pallas_src>

<mosaic_0001>
module attributes {stable_mosaic.version = 11 : i64} {
  func.func @_linear_nobias_kernel(%arg0: i32, %arg1: memref<8x32xbf16, #tpu.memory_space<vmem>>, %arg2: memref<32x40xbf16, #tpu.memory_space<vmem>>, %arg3: memref<8x40xbf16, #tpu.memory_space<vmem>>) attributes {dimension_semantics = [#tpu.dimension_semantics<parallel>], iteration_bounds = array<i64: 1>, scalar_prefetch = 0 : i64, scratch_operands = 0 : i64, tpu.core_type = #tpu.core_type<tc>, window_params = [{transform_indices = @transform_0, window_bounds = array<i64: 8, 32>}, {pipeline_mode = #tpu.pipeline_mode<synchronous>, transform_indices = @transform_1, window_bounds = array<i64: 32, 40>}, {transform_indices = @transform_2, window_bounds = array<i64: 8, 40>}]} {
    %c0 = arith.constant 0 : index
    %c0_0 = arith.constant 0 : index
    %0 = vector.load %arg1[%c0, %c0_0] : memref<8x32xbf16, #tpu.memory_space<vmem>>, vector<8x32xbf16>
    %c0_1 = arith.constant 0 : index
    %c0_2 = arith.constant 0 : index
    %1 = vector.load %arg2[%c0_1, %c0_2] : memref<32x40xbf16, #tpu.memory_space<vmem>>, vector<32x40xbf16>
    %cst = arith.constant dense<0.000000e+00> : vector<8x40xf32>
    %2 = tpu.matmul %0, %1, %cst {dimension_numbers = #tpu.dot_dimension_numbers<[1], [0], [0], [1], [0, 0, 1, 1], [], []>} : vector<8x32xbf16>, vector<32x40xbf16>, vector<8x40xf32> -> vector<8x40xf32>
    %3 = arith.truncf %2 : vector<8x40xf32> to vector<8x40xbf16>
    %c0_3 = arith.constant 0 : index
    %c0_4 = arith.constant 0 : index
    %4 = vector.load %arg3[%c0_3, %c0_4] : memref<8x40xbf16, #tpu.memory_space<vmem>>, vector<8x40xbf16>
    tpu.vector_store %arg3[%c0_3, %c0_4], %3 {strides = array<i32>} : memref<8x40xbf16, #tpu.memory_space<vmem>>, vector<8x40xbf16>,
    return
  }
  func.func @transform_0(%arg0: i32) -> (i32, i32) {
    %c0_i32 = arith.constant 0 : i32
    %c0_i32_0 = arith.constant 0 : i32
    return %arg0, %c0_i32 : i32, i32
  }
  func.func @transform_1(%arg0: i32) -> (i32, i32) {
    %c0_i32 = arith.constant 0 : i32
    %c0_i32_0 = arith.constant 0 : i32
    %c0_i32_1 = arith.constant 0 : i32
    return %c0_i32, %c0_i32_0 : i32, i32
  }
  func.func @transform_2(%arg0: i32) -> (i32, i32) {
    %c0_i32 = arith.constant 0 : i32
    %c0_i32_0 = arith.constant 0 : i32
    return %arg0, %c0_i32 : i32, i32
  }
}

module attributes {stable_mosaic.version = 11 : i64} {
  func.func @_linear_bias_kernel(%arg0: i32, %arg1: memref<8x8xf32, #tpu.memory_space<vmem>>, %arg2: memref<8x32xbf16, #tpu.memory_space<vmem>>, %arg3: memref<1x32xf32, #tpu.memory_space<vmem>>, %arg4: memref<8x32xbf16, #tpu.memory_space<vmem>>) attributes {dimension_semantics = [#tpu.dimension_semantics<parallel>], iteration_bounds = array<i64: 1>, scalar_prefetch = 0 : i64, scratch_operands = 0 : i64, tpu.core_type = #tpu.core_type<tc>, window_params = [{transform_indices = @transform_0, window_bounds = array<i64: 8, 8>}, {pipeline_mode = #tpu.pipeline_mode<synchronous>, transform_indices = @transform_1, window_bounds = array<i64: 8, 32>}, {pipeline_mode = #tpu.pipeline_mode<synchronous>, transform_indices = @transform_2, window_bounds = array<i64: 1, 32>}, {transform_indices = @transform_3, window_bounds = array<i64: 8, 32>}]} {
    %c0 = arith.constant 0 : index
    %c0_0 = arith.constant 0 : index
    %0 = vector.load %arg1[%c0, %c0_0] : memref<8x8xf32, #tpu.memory_space<vmem>>, vector<8x8xf32>
    %1 = arith.truncf %0 : vector<8x8xf32> to vector<8x8xbf16>
    %c0_1 = arith.constant 0 : index
    %c0_2 = arith.constant 0 : index
    %2 = vector.load %arg2[%c0_1, %c0_2] : memref<8x32xbf16, #tpu.memory_space<vmem>>, vector<8x32xbf16>
    %cst = arith.constant dense<0.000000e+00> : vector<8x32xf32>
    %3 = tpu.matmul %1, %2, %cst {dimension_numbers = #tpu.dot_dimension_numbers<[1], [0], [0], [1], [0, 0, 1, 1], [], []>} : vector<8x8xbf16>, vector<8x32xbf16>, vector<8x32xf32> -> vector<8x32xf32>
    %c0_3 = arith.constant 0 : index
    %c0_4 = arith.constant 0 : index
    %4 = vector.load %arg3[%c0_3, %c0_4] : memref<1x32xf32, #tpu.memory_space<vmem>>, vector<1x32xf32>
    %5 = vector.broadcast %4 : vector<1x32xf32> to vector<8x32xf32>
    %6 = arith.addf %3, %5 : vector<8x32xf32>
    %7 = arith.truncf %6 : vector<8x32xf32> to vector<8x32xbf16>
    %c0_5 = arith.constant 0 : index
    %c0_6 = arith.constant 0 : index
    %8 = vector.load %arg4[%c0_5, %c0_6] : memref<8x32xbf16, #tpu.memory_space<vmem>>, vector<8x32xbf16>
    tpu.vector_store %arg4[%c0_5, %c0_6], %7 {strides = array<i32>} : memref<8x32xbf16, #tpu.memory_space<vmem>>, vector<8x32xbf16>,
    return
  }
  func.func @transform_0(%arg0: i32) -> (i32, i32) {
    %c0_i32 = arith.constant 0 : i32
    %c0_i32_0 = arith.constant 0 : i32
    return %arg0, %c0_i32 : i32, i32
  }
  func.func @transform_1(%arg0: i32) -> (i32, i32) {
    %c0_i32 = arith.constant 0 : i32
    %c0_i32_0 = arith.constant 0 : i32
    %c0_i32_1 = arith.constant 0 : i32
    return %c0_i32, %c0_i32_0 : i32, i32
  }
  func.func @transform_2(%arg0: i32) -> (i32, i32) {
    %c0_i32 = arith.constant 0 : i32
    %c0_i32_0 = arith.constant 0 : i32
    %c0_i32_1 = arith.constant 0 : i32
    return %c0_i32, %c0_i32_0 : i32, i32
  }
  func.func @transform_3(%arg0: i32) -> (i32, i32) {
    %c0_i32 = arith.constant 0 : i32
    %c0_i32_0 = arith.constant 0 : i32
    return %arg0, %c0_i32 : i32, i32
  }
}

module attributes {stable_mosaic.version = 11 : i64} {
  func.func @_gat_attention_kernel(%arg0: i32, %arg1: i32, %arg2: memref<4x8x8xbf16, #tpu.memory_space<vmem>>, %arg3: memref<4x1x8xf32, #tpu.memory_space<vmem>>, %arg4: memref<4x8x1xf32, #tpu.memory_space<vmem>>, %arg5: memref<8x8xi8, #tpu.memory_space<vmem>>, %arg6: memref<4x1x8xf32, #tpu.memory_space<vmem>>, %arg7: memref<4x8x8xbf16, #tpu.memory_space<vmem>>, %arg8: memref<4x8x1xf32, #tpu.memory_space<vmem>>, %arg9: memref<4x8x1xf32, #tpu.memory_space<vmem>>, %arg10: memref<4x8x8xf32, #tpu.memory_space<vmem>>) attributes {dimension_semantics = [#tpu.dimension_semantics<parallel>, #tpu.dimension_semantics<arbitrary>], iteration_bounds = array<i64: 1, 1>, scalar_prefetch = 0 : i64, scratch_operands = 3 : i64, tpu.core_type = #tpu.core_type<tc>, window_params = [{transform_indices = @transform_0, window_bounds = array<i64: 4, 8, 8>}, {transform_indices = @transform_1, window_bounds = array<i64: 4, 1, 8>}, {transform_indices = @transform_2, window_bounds = array<i64: 4, 8, 1>}, {transform_indices = @transform_3, window_bounds = array<i64: 8, 8>}, {pipeline_mode = #tpu.pipeline_mode<synchronous>, transform_indices = @transform_4, window_bounds = array<i64: 4, 1, 8>}, {transform_indices = @transform_5, window_bounds = array<i64: 4, 8, 8>}]} {
    %c0_i32 = arith.constant 0 : i32
    %0 = arith.cmpi eq, %arg1, %c0_i32 : i32
    %1 = arith.extui %0 : i1 to i32
    %c0_i32_0 = arith.constant 0 : i32
    %2 = arith.cmpi ne, %1, %c0_i32_0 : i32
    scf.if %2 {
      %cst_38 = arith.constant -1.000000e+30 : f32
      %52 = vector.broadcast %cst_38 : f32 to vector<4x8x1xf32>
      %c0_39 = arith.constant 0 : index
      %c0_40 = arith.constant 0 : index
      %c0_41 = arith.constant 0 : index
      %53 = vector.load %arg8[%c0_39, %c0_40, %c0_41] : memref<4x8x1xf32, #tpu.memory_space<vmem>>, vector<4x8x1xf32>
      tpu.vector_store %arg8[%c0_39, %c0_40, %c0_41], %52 {strides = array<i32>} : memref<4x8x1xf32, #tpu.memory_space<vmem>>, vector<4x8x1xf32>,
      %cst_42 = arith.constant 0.000000e+00 : f32
      %54 = vector.broadcast %cst_42 : f32 to vector<4x8x1xf32>
      %c0_43 = arith.constant 0 : index
      %c0_44 = arith.constant 0 : index
      %c0_45 = arith.constant 0 : index
      %55 = vector.load %arg9[%c0_43, %c0_44, %c0_45] : memref<4x8x1xf32, #tpu.memory_space<vmem>>, vector<4x8x1xf32>
      tpu.vector_store %arg9[%c0_43, %c0_44, %c0_45], %54 {strides = array<i32>} : memref<4x8x1xf32, #tpu.memory_space<vmem>>, vector<4x8x1xf32>,
      %cst_46 = arith.constant 0.000000e+00 : f32
      %56 = vector.broadcast %cst_46 : f32 to vector<4x8x8xf32>
      %c0_47 = arith.constant 0 : index
      %c0_48 = arith.constant 0 : index
      %c0_49 = arith.constant 0 : index
      %57 = vector.load %arg10[%c0_47, %c0_48, %c0_49] : memref<4x8x8xf32, #tpu.memory_space<vmem>>, vector<4x8x8xf32>
      tpu.vector_store %arg10[%c0_47, %c0_48, %c0_49], %56 {strides = array<i32>} : memref<4x8x8xf32, #tpu.memory_space<vmem>>, vector<4x8x8xf32>,
    } else {
    }
    %c0 = arith.constant 0 : index
    %c0_1 = arith.constant 0 : index
    %c0_2 = arith.constant 0 : index
    %3 = vector.load %arg4[%c0, %c0_1, %c0_2] : memref<4x8x1xf32, #tpu.memory_space<vmem>>, vector<4x8x1xf32>
    %c0_3 = arith.constant 0 : index
    %c0_4 = arith.constant 0 : index
    %c0_5 = arith.constant 0 : index
    %4 = vector.load %arg3[%c0_3, %c0_4, %c0_5] : memref<4x1x8xf32, #tpu.memory_space<vmem>>, vector<4x1x8xf32>
    %5 = vector.broadcast %3 : vector<4x8x1xf32> to vector<4x8x8xf32>
    %6 = vector.broadcast %4 : vector<4x1x8xf32> to vector<4x8x8xf32>
    %7 = arith.addf %5, %6 : vector<4x8x8xf32>
    %cst = arith.constant 0.000000e+00 : f32
    %8 = vector.broadcast %cst : f32 to vector<4x8x8xf32>
    %9 = arith.cmpf ogt, %7, %8 : vector<4x8x8xf32>
    %cst_6 = arith.constant 2.000000e-01 : f32
    %10 = vector.broadcast %cst_6 : f32 to vector<4x8x8xf32>
    %11 = arith.mulf %10, %7 : vector<4x8x8xf32>
    %12 = arith.select %9, %7, %11 : vector<4x8x8xi1>, vector<4x8x8xf32>
    %c0_7 = arith.constant 0 : index
    %c0_8 = arith.constant 0 : index
    %13 = vector.load %arg5[%c0_7, %c0_8] : memref<8x8xi8, #tpu.memory_space<vmem>>, vector<8x8xi8>
    %14 = arith.sitofp %13 : vector<8x8xi8> to vector<8x8xf32>
    %cst_9 = arith.constant 0.000000e+00 : f32
    %15 = vector.broadcast %cst_9 : f32 to vector<8x8xf32>
    %16 = arith.cmpf ogt, %14, %15 : vector<8x8xf32>
    %cst_10 = arith.constant -1.000000e+30 : f32
    %17 = vector.shape_cast %16 : vector<8x8xi1> to vector<1x8x8xi1>
    %18 = vector.broadcast %17 : vector<1x8x8xi1> to vector<4x8x8xi1>
    %19 = vector.broadcast %cst_10 : f32 to vector<4x8x8xf32>
    %20 = arith.select %18, %12, %19 : vector<4x8x8xi1>, vector<4x8x8xf32>
    %c0_11 = arith.constant 0 : index
    %c0_12 = arith.constant 0 : index
    %c0_13 = arith.constant 0 : index
    %21 = vector.load %arg8[%c0_11, %c0_12, %c0_13] : memref<4x8x1xf32, #tpu.memory_space<vmem>>, vector<4x8x1xf32>
    %cst_14 = arith.constant dense<0xFF800000> : vector<4x8xf32>
    %22 = vector.multi_reduction <maximumf>, %20, %cst_14 [2] : vector<4x8x8xf32> to vector<4x8xf32>
    %23 = vector.shape_cast %22 : vector<4x8xf32> to vector<4x8x1xf32>
    %24 = arith.maximumf %21, %23 : vector<4x8x1xf32>
    %25 = arith.subf %21, %24 : vector<4x8x1xf32>
    %26 = math.exp %25 : vector<4x8x1xf32>
    %27 = vector.broadcast %24 : vector<4x8x1xf32> to vector<4x8x8xf32>
    %28 = arith.subf %20, %27 : vector<4x8x8xf32>
    %29 = math.exp %28 : vector<4x8x8xf32>
    %cst_15 = arith.constant 0.000000e+00 : f32
    %30 = vector.shape_cast %16 : vector<8x8xi1> to vector<1x8x8xi1>
    %31 = vector.broadcast %30 : vector<1x8x8xi1> to vector<4x8x8xi1>
    %32 = vector.broadcast %cst_15 : f32 to vector<4x8x8xf32>
    %33 = arith.select %31, %29, %32 : vector<4x8x8xi1>, vector<4x8x8xf32>
    %c0_16 = arith.constant 0 : index
    %c0_17 = arith.constant 0 : index
    %c0_18 = arith.constant 0 : index
    %34 = vector.load %arg9[%c0_16, %c0_17, %c0_18] : memref<4x8x1xf32, #tpu.memory_space<vmem>>, vector<4x8x1xf32>
    %35 = arith.mulf %26, %34 : vector<4x8x1xf32>
    %cst_19 = arith.constant dense<0.000000e+00> : vector<4x8xf32>
    %36 = vector.multi_reduction <add>, %33, %cst_19 [2] : vector<4x8x8xf32> to vector<4x8xf32>
    %37 = vector.shape_cast %36 : vector<4x8xf32> to vector<4x8x1xf32>
    %38 = arith.addf %35, %37 : vector<4x8x1xf32>
    %c0_20 = arith.constant 0 : index
    %c0_21 = arith.constant 0 : index
    %c0_22 = arith.constant 0 : index
    %39 = vector.load %arg9[%c0_20, %c0_21, %c0_22] : memref<4x8x1xf32, #tpu.memory_space<vmem>>, vector<4x8x1xf32>
    tpu.vector_store %arg9[%c0_20, %c0_21, %c0_22], %38 {strides = array<i32>} : memref<4x8x1xf32, #tpu.memory_space<vmem>>, vector<4x8x1xf32>,
    %c0_23 = arith.constant 0 : index
    %c0_24 = arith.constant 0 : index
    %c0_25 = arith.constant 0 : index
    %40 = vector.load %arg10[%c0_23, %c0_24, %c0_25] : memref<4x8x8xf32, #tpu.memory_space<vmem>>, vector<4x8x8xf32>
    %41 = vector.broadcast %26 : vector<4x8x1xf32> to vector<4x8x8xf32>
    %42 = arith.mulf %41, %40 : vector<4x8x8xf32>
    %43 = arith.truncf %33 : vector<4x8x8xf32> to vector<4x8x8xbf16>
    %c0_26 = arith.constant 0 : index
    %c0_27 = arith.constant 0 : index
    %c0_28 = arith.constant 0 : index
    %44 = vector.load %arg2[%c0_26, %c0_27, %c0_28] : memref<4x8x8xbf16, #tpu.memory_space<vmem>>, vector<4x8x8xbf16>
    "tpu.trace_start"() <{level = 10 : i32, message = "hqk,hkd->hqd"}> : () -> ()
    %cst_29 = arith.constant dense<0.000000e+00> : vector<4x8x8xf32>
    %45 = tpu.matmul %43, %44, %cst_29 {dimension_numbers = #tpu.dot_dimension_numbers<[2], [1], [1], [2], [0, 0, 0, 1, 1, 2], [0], [0]>} : vector<4x8x8xbf16>, vector<4x8x8xbf16>, vector<4x8x8xf32> -> vector<4x8x8xf32>
    "tpu.trace_stop"() : () -> ()
    %46 = arith.addf %42, %45 : vector<4x8x8xf32>
    %c0_30 = arith.constant 0 : index
    %c0_31 = arith.constant 0 : index
    %c0_32 = arith.constant 0 : index
    %47 = vector.load %arg10[%c0_30, %c0_31, %c0_32] : memref<4x8x8xf32, #tpu.memory_space<vmem>>, vector<4x8x8xf32>
    tpu.vector_store %arg10[%c0_30, %c0_31, %c0_32], %46 {strides = array<i32>} : memref<4x8x8xf32, #tpu.memory_space<vmem>>, vector<4x8x8xf32>,
    %c0_33 = arith.constant 0 : index
    %c0_34 = arith.constant 0 : index
    %c0_35 = arith.constant 0 : index
    %48 = vector.load %arg8[%c0_33, %c0_34, %c0_35] : memref<4x8x1xf32, #tpu.memory_space<vmem>>, vector<4x8x1xf32>
    tpu.vector_store %arg8[%c0_33, %c0_34, %c0_35], %24 {strides = array<i32>} : memref<4x8x1xf32, #tpu.memory_space<vmem>>, vector<4x8x1xf32>,
    %c0_i32_36 = arith.constant 0 : i32
    %49 = arith.cmpi eq, %arg1, %c0_i32_36 : i32
    %50 = arith.extui %49 : i1 to i32
    %c0_i32_37 = arith.constant 0 : i32
    %51 = arith.cmpi ne, %50, %c0_i32_37 : i32
    scf.if %51 {
      %c0_38 = arith.constant 0 : index
      %c0_39 = arith.constant 0 : index
      %c0_40 = arith.constant 0 : index
      %52 = vector.load %arg10[%c0_38, %c0_39, %c0_40] : memref<4x8x8xf32, #tpu.memory_space<vmem>>, vector<4x8x8xf32>
      %c0_41 = arith.constant 0 : index
      %c0_42 = arith.constant 0 : index
      %c0_43 = arith.constant 0 : index
      %53 = vector.load %arg9[%c0_41, %c0_42, %c0_43] : memref<4x8x1xf32, #tpu.memory_space<vmem>>, vector<4x8x1xf32>
      %54 = vector.broadcast %53 : vector<4x8x1xf32> to vector<4x8x8xf32>
      %55 = arith.divf %52, %54 : vector<4x8x8xf32>
      %c0_44 = arith.constant 0 : index
      %c0_45 = arith.constant 0 : index
      %c0_46 = arith.constant 0 : index
      %56 = vector.load %arg6[%c0_44, %c0_45, %c0_46] : memref<4x1x8xf32, #tpu.memory_space<vmem>>, vector<4x1x8xf32>
      %57 = vector.broadcast %56 : vector<4x1x8xf32> to vector<4x8x8xf32>
      %58 = arith.addf %55, %57 : vector<4x8x8xf32>
      %cst_47 = arith.constant 0.000000e+00 : f32
      %59 = vector.broadcast %cst_47 : f32 to vector<4x8x8xf32>
      %60 = arith.maximumf %58, %59 : vector<4x8x8xf32>
      %61 = arith.truncf %60 : vector<4x8x8xf32> to vector<4x8x8xbf16>
      %c0_48 = arith.constant 0 : index
      %c0_49 = arith.constant 0 : index
      %c0_50 = arith.constant 0 : index
      %62 = vector.load %arg7[%c0_48, %c0_49, %c0_50] : memref<4x8x8xbf16, #tpu.memory_space<vmem>>, vector<4x8x8xbf16>
      tpu.vector_store %arg7[%c0_48, %c0_49, %c0_50], %61 {strides = array<i32>} : memref<4x8x8xbf16, #tpu.memory_space<vmem>>, vector<4x8x8xbf16>,
    } else {
    }
    return
  }
  func.func @transform_0(%arg0: i32, %arg1: i32) -> (i32, i32, i32) {
    %c0_i32 = arith.constant 0 : i32
    %c0_i32_0 = arith.constant 0 : i32
    %c0_i32_1 = arith.constant 0 : i32
    return %c0_i32, %arg1, %c0_i32_0 : i32, i32, i32
  }
  func.func @transform_1(%arg0: i32, %arg1: i32) -> (i32, i32, i32) {
    %c0_i32 = arith.constant 0 : i32
    %c0_i32_0 = arith.constant 0 : i32
    %c0_i32_1 = arith.constant 0 : i32
    return %c0_i32, %c0_i32_0, %arg1 : i32, i32, i32
  }
  func.func @transform_2(%arg0: i32, %arg1: i32) -> (i32, i32, i32) {
    %c0_i32 = arith.constant 0 : i32
    %c0_i32_0 = arith.constant 0 : i32
    %c0_i32_1 = arith.constant 0 : i32
    return %c0_i32, %arg0, %c0_i32_0 : i32, i32, i32
  }
  func.func @transform_3(%arg0: i32, %arg1: i32) -> (i32, i32) {
    %c0_i32 = arith.constant 0 : i32
    return %arg0, %arg1 : i32, i32
  }
  func.func @transform_4(%arg0: i32, %arg1: i32) -> (i32, i32, i32) {
    %c0_i32 = arith.constant 0 : i32
    %c0_i32_0 = arith.constant 0 : i32
    %c0_i32_1 = arith.constant 0 : i32
    %c0_i32_2 = arith.constant 0 : i32
    return %c0_i32, %c0_i32_0, %c0_i32_1 : i32, i32, i32
  }
  func.func @transform_5(%arg0: i32, %arg1: i32) -> (i32, i32, i32) {
    %c0_i32 = arith.constant 0 : i32
    %c0_i32_0 = arith.constant 0 : i32
    %c0_i32_1 = arith.constant 0 : i32
    return %c0_i32, %arg0, %c0_i32_0 : i32, i32, i32
  }
}

module attributes {stable_mosaic.version = 11 : i64} {
  func.func @_linear_nobias_kernel(%arg0: i32, %arg1: memref<8x32xbf16, #tpu.memory_space<vmem>>, %arg2: memref<32x32xbf16, #tpu.memory_space<vmem>>, %arg3: memref<8x32xbf16, #tpu.memory_space<vmem>>) attributes {dimension_semantics = [#tpu.dimension_semantics<parallel>], iteration_bounds = array<i64: 1>, scalar_prefetch = 0 : i64, scratch_operands = 0 : i64, tpu.core_type = #tpu.core_type<tc>, window_params = [{transform_indices = @transform_0, window_bounds = array<i64: 8, 32>}, {pipeline_mode = #tpu.pipeline_mode<synchronous>, transform_indices = @transform_1, window_bounds = array<i64: 32, 32>}, {transform_indices = @transform_2, window_bounds = array<i64: 8, 32>}]} {
    %c0 = arith.constant 0 : index
    %c0_0 = arith.constant 0 : index
    %0 = vector.load %arg1[%c0, %c0_0] : memref<8x32xbf16, #tpu.memory_space<vmem>>, vector<8x32xbf16>
    %c0_1 = arith.constant 0 : index
    %c0_2 = arith.constant 0 : index
    %1 = vector.load %arg2[%c0_1, %c0_2] : memref<32x32xbf16, #tpu.memory_space<vmem>>, vector<32x32xbf16>
    %cst = arith.constant dense<0.000000e+00> : vector<8x32xf32>
    %2 = tpu.matmul %0, %1, %cst {dimension_numbers = #tpu.dot_dimension_numbers<[1], [0], [0], [1], [0, 0, 1, 1], [], []>} : vector<8x32xbf16>, vector<32x32xbf16>, vector<8x32xf32> -> vector<8x32xf32>
    %3 = arith.truncf %2 : vector<8x32xf32> to vector<8x32xbf16>
    %c0_3 = arith.constant 0 : index
    %c0_4 = arith.constant 0 : index
    %4 = vector.load %arg3[%c0_3, %c0_4] : memref<8x32xbf16, #tpu.memory_space<vmem>>, vector<8x32xbf16>
    tpu.vector_store %arg3[%c0_3, %c0_4], %3 {strides = array<i32>} : memref<8x32xbf16, #tpu.memory_space<vmem>>, vector<8x32xbf16>,
    return
  }
  func.func @transform_0(%arg0: i32) -> (i32, i32) {
    %c0_i32 = arith.constant 0 : i32
    %c0_i32_0 = arith.constant 0 : i32
    return %arg0, %c0_i32 : i32, i32
  }
  func.func @transform_1(%arg0: i32) -> (i32, i32) {
    %c0_i32 = arith.constant 0 : i32
    %c0_i32_0 = arith.constant 0 : i32
    %c0_i32_1 = arith.constant 0 : i32
    return %c0_i32, %c0_i32_0 : i32, i32
  }
  func.func @transform_2(%arg0: i32) -> (i32, i32) {
    %c0_i32 = arith.constant 0 : i32
    %c0_i32_0 = arith.constant 0 : i32
    return %arg0, %c0_i32 : i32, i32
  }
}

module attributes {stable_mosaic.version = 11 : i64} {
  func.func @_fuse_kernel(%arg0: i32, %arg1: memref<8x32xbf16, #tpu.memory_space<vmem>>, %arg2: memref<8x32xbf16, #tpu.memory_space<vmem>>, %arg3: memref<32x32xbf16, #tpu.memory_space<vmem>>, %arg4: memref<32x32xbf16, #tpu.memory_space<vmem>>, %arg5: memref<1x32xf32, #tpu.memory_space<vmem>>, %arg6: memref<8x32xbf16, #tpu.memory_space<vmem>>) attributes {dimension_semantics = [#tpu.dimension_semantics<parallel>], iteration_bounds = array<i64: 1>, scalar_prefetch = 0 : i64, scratch_operands = 0 : i64, tpu.core_type = #tpu.core_type<tc>, window_params = [{transform_indices = @transform_0, window_bounds = array<i64: 8, 32>}, {transform_indices = @transform_1, window_bounds = array<i64: 8, 32>}, {pipeline_mode = #tpu.pipeline_mode<synchronous>, transform_indices = @transform_2, window_bounds = array<i64: 32, 32>}, {pipeline_mode = #tpu.pipeline_mode<synchronous>, transform_indices = @transform_3, window_bounds = array<i64: 32, 32>}, {pipeline_mode = #tpu.pipeline_mode<synchronous>, transform_indices = @transform_4, window_bounds = array<i64: 1, 32>}, {transform_indices = @transform_5, window_bounds = array<i64: 8, 32>}]} {
    %c0 = arith.constant 0 : index
    %c0_0 = arith.constant 0 : index
    %0 = vector.load %arg1[%c0, %c0_0] : memref<8x32xbf16, #tpu.memory_space<vmem>>, vector<8x32xbf16>
    %c0_1 = arith.constant 0 : index
    %c0_2 = arith.constant 0 : index
    %1 = vector.load %arg3[%c0_1, %c0_2] : memref<32x32xbf16, #tpu.memory_space<vmem>>, vector<32x32xbf16>
    %cst = arith.constant dense<0.000000e+00> : vector<8x32xf32>
    %2 = tpu.matmul %0, %1, %cst {dimension_numbers = #tpu.dot_dimension_numbers<[1], [0], [0], [1], [0, 0, 1, 1], [], []>} : vector<8x32xbf16>, vector<32x32xbf16>, vector<8x32xf32> -> vector<8x32xf32>
    %c0_3 = arith.constant 0 : index
    %c0_4 = arith.constant 0 : index
    %3 = vector.load %arg2[%c0_3, %c0_4] : memref<8x32xbf16, #tpu.memory_space<vmem>>, vector<8x32xbf16>
    %c0_5 = arith.constant 0 : index
    %c0_6 = arith.constant 0 : index
    %4 = vector.load %arg4[%c0_5, %c0_6] : memref<32x32xbf16, #tpu.memory_space<vmem>>, vector<32x32xbf16>
    %cst_7 = arith.constant dense<0.000000e+00> : vector<8x32xf32>
    %5 = tpu.matmul %3, %4, %cst_7 {dimension_numbers = #tpu.dot_dimension_numbers<[1], [0], [0], [1], [0, 0, 1, 1], [], []>} : vector<8x32xbf16>, vector<32x32xbf16>, vector<8x32xf32> -> vector<8x32xf32>
    %6 = arith.addf %2, %5 : vector<8x32xf32>
    %c0_8 = arith.constant 0 : index
    %c0_9 = arith.constant 0 : index
    %7 = vector.load %arg5[%c0_8, %c0_9] : memref<1x32xf32, #tpu.memory_space<vmem>>, vector<1x32xf32>
    %8 = vector.broadcast %7 : vector<1x32xf32> to vector<8x32xf32>
    %9 = arith.addf %6, %8 : vector<8x32xf32>
    %10 = arith.truncf %9 : vector<8x32xf32> to vector<8x32xbf16>
    %c0_10 = arith.constant 0 : index
    %c0_11 = arith.constant 0 : index
    %11 = vector.load %arg6[%c0_10, %c0_11] : memref<8x32xbf16, #tpu.memory_space<vmem>>, vector<8x32xbf16>
    tpu.vector_store %arg6[%c0_10, %c0_11], %10 {strides = array<i32>} : memref<8x32xbf16, #tpu.memory_space<vmem>>, vector<8x32xbf16>,
    return
  }
  func.func @transform_0(%arg0: i32) -> (i32, i32) {
    %c0_i32 = arith.constant 0 : i32
    %c0_i32_0 = arith.constant 0 : i32
    return %arg0, %c0_i32 : i32, i32
  }
  func.func @transform_1(%arg0: i32) -> (i32, i32) {
    %c0_i32 = arith.constant 0 : i32
    %c0_i32_0 = arith.constant 0 : i32
    return %arg0, %c0_i32 : i32, i32
  }
  func.func @transform_2(%arg0: i32) -> (i32, i32) {
    %c0_i32 = arith.constant 0 : i32
    %c0_i32_0 = arith.constant 0 : i32
    %c0_i32_1 = arith.constant 0 : i32
    return %c0_i32, %c0_i32_0 : i32, i32
  }
  func.func @transform_3(%arg0: i32) -> (i32, i32) {
    %c0_i32 = arith.constant 0 : i32
    %c0_i32_0 = arith.constant 0 : i32
    %c0_i32_1 = arith.constant 0 : i32
    return %c0_i32, %c0_i32_0 : i32, i32
  }
  func.func @transform_4(%arg0: i32) -> (i32, i32) {
    %c0_i32 = arith.constant 0 : i32
    %c0_i32_0 = arith.constant 0 : i32
    %c0_i32_1 = arith.constant 0 : i32
    return %c0_i32, %c0_i32_0 : i32, i32
  }
  func.func @transform_5(%arg0: i32) -> (i32, i32) {
    %c0_i32 = arith.constant 0 : i32
    %c0_i32_0 = arith.constant 0 : i32
    return %arg0, %c0_i32 : i32, i32
  }
}

module attributes {stable_mosaic.version = 11 : i64} {
  func.func @_gcn_kernel(%arg0: i32, %arg1: i32, %arg2: memref<8x8xbf16, #tpu.memory_space<vmem>>, %arg3: memref<8x32xbf16, #tpu.memory_space<vmem>>, %arg4: memref<1x32xf32, #tpu.memory_space<vmem>>, %arg5: memref<8x32xbf16, #tpu.memory_space<vmem>>, %arg6: memref<8x32xf32, #tpu.memory_space<vmem>>) attributes {dimension_semantics = [#tpu.dimension_semantics<parallel>, #tpu.dimension_semantics<arbitrary>], iteration_bounds = array<i64: 1, 1>, scalar_prefetch = 0 : i64, scratch_operands = 1 : i64, tpu.core_type = #tpu.core_type<tc>, window_params = [{transform_indices = @transform_0, window_bounds = array<i64: 8, 8>}, {transform_indices = @transform_1, window_bounds = array<i64: 8, 32>}, {pipeline_mode = #tpu.pipeline_mode<synchronous>, transform_indices = @transform_2, window_bounds = array<i64: 1, 32>}, {transform_indices = @transform_3, window_bounds = array<i64: 8, 32>}]} {
    %c0_i32 = arith.constant 0 : i32
    %0 = arith.cmpi eq, %arg1, %c0_i32 : i32
    %1 = arith.extui %0 : i1 to i32
    %c0_i32_0 = arith.constant 0 : i32
    %2 = arith.cmpi ne, %1, %c0_i32_0 : i32
    scf.if %2 {
      %cst_10 = arith.constant 0.000000e+00 : f32
      %12 = vector.broadcast %cst_10 : f32 to vector<8x32xf32>
      %c0_11 = arith.constant 0 : index
      %c0_12 = arith.constant 0 : index
      %13 = vector.load %arg6[%c0_11, %c0_12] : memref<8x32xf32, #tpu.memory_space<vmem>>, vector<8x32xf32>
      tpu.vector_store %arg6[%c0_11, %c0_12], %12 {strides = array<i32>} : memref<8x32xf32, #tpu.memory_space<vmem>>, vector<8x32xf32>,
    } else {
    }
    %c0 = arith.constant 0 : index
    %c0_1 = arith.constant 0 : index
    %3 = vector.load %arg6[%c0, %c0_1] : memref<8x32xf32, #tpu.memory_space<vmem>>, vector<8x32xf32>
    %c0_2 = arith.constant 0 : index
    %c0_3 = arith.constant 0 : index
    %4 = vector.load %arg2[%c0_2, %c0_3] : memref<8x8xbf16, #tpu.memory_space<vmem>>, vector<8x8xbf16>
    %c0_4 = arith.constant 0 : index
    %c0_5 = arith.constant 0 : index
    %5 = vector.load %arg3[%c0_4, %c0_5] : memref<8x32xbf16, #tpu.memory_space<vmem>>, vector<8x32xbf16>
    %cst = arith.constant dense<0.000000e+00> : vector<8x32xf32>
    %6 = tpu.matmul %4, %5, %cst {dimension_numbers = #tpu.dot_dimension_numbers<[1], [0], [0], [1], [0, 0, 1, 1], [], []>} : vector<8x8xbf16>, vector<8x32xbf16>, vector<8x32xf32> -> vector<8x32xf32>
    %7 = arith.addf %3, %6 : vector<8x32xf32>
    %c0_6 = arith.constant 0 : index
    %c0_7 = arith.constant 0 : index
    %8 = vector.load %arg6[%c0_6, %c0_7] : memref<8x32xf32, #tpu.memory_space<vmem>>, vector<8x32xf32>
    tpu.vector_store %arg6[%c0_6, %c0_7], %7 {strides = array<i32>} : memref<8x32xf32, #tpu.memory_space<vmem>>, vector<8x32xf32>,
    %c0_i32_8 = arith.constant 0 : i32
    %9 = arith.cmpi eq, %arg1, %c0_i32_8 : i32
    %10 = arith.extui %9 : i1 to i32
    %c0_i32_9 = arith.constant 0 : i32
    %11 = arith.cmpi ne, %10, %c0_i32_9 : i32
    scf.if %11 {
      %c0_10 = arith.constant 0 : index
      %c0_11 = arith.constant 0 : index
      %12 = vector.load %arg6[%c0_10, %c0_11] : memref<8x32xf32, #tpu.memory_space<vmem>>, vector<8x32xf32>
      %c0_12 = arith.constant 0 : index
      %c0_13 = arith.constant 0 : index
      %13 = vector.load %arg4[%c0_12, %c0_13] : memref<1x32xf32, #tpu.memory_space<vmem>>, vector<1x32xf32>
      %14 = vector.broadcast %13 : vector<1x32xf32> to vector<8x32xf32>
      %15 = arith.addf %12, %14 : vector<8x32xf32>
      %cst_14 = arith.constant 0.000000e+00 : f32
      %16 = vector.broadcast %cst_14 : f32 to vector<8x32xf32>
      %17 = arith.maximumf %15, %16 : vector<8x32xf32>
      %18 = arith.truncf %17 : vector<8x32xf32> to vector<8x32xbf16>
      %c0_15 = arith.constant 0 : index
      %c0_16 = arith.constant 0 : index
      %19 = vector.load %arg5[%c0_15, %c0_16] : memref<8x32xbf16, #tpu.memory_space<vmem>>, vector<8x32xbf16>
      tpu.vector_store %arg5[%c0_15, %c0_16], %18 {strides = array<i32>} : memref<8x32xbf16, #tpu.memory_space<vmem>>, vector<8x32xbf16>,
    } else {
    }
    return
  }
  func.func @transform_0(%arg0: i32, %arg1: i32) -> (i32, i32) {
    %c0_i32 = arith.constant 0 : i32
    return %arg0, %arg1 : i32, i32
  }
  func.func @transform_1(%arg0: i32, %arg1: i32) -> (i32, i32) {
    %c0_i32 = arith.constant 0 : i32
    %c0_i32_0 = arith.constant 0 : i32
    return %arg1, %c0_i32 : i32, i32
  }
  func.func @transform_2(%arg0: i32, %arg1: i32) -> (i32, i32) {
    %c0_i32 = arith.constant 0 : i32
    %c0_i32_0 = arith.constant 0 : i32
    %c0_i32_1 = arith.constant 0 : i32
    return %c0_i32, %c0_i32_0 : i32, i32
  }
  func.func @transform_3(%arg0: i32, %arg1: i32) -> (i32, i32) {
    %c0_i32 = arith.constant 0 : i32
    %c0_i32_0 = arith.constant 0 : i32
    return %arg0, %c0_i32 : i32, i32
  }
}

module attributes {stable_mosaic.version = 11 : i64} {
  func.func @_edge_enc_kernel(%arg0: i32, %arg1: memref<16x1xf32, #tpu.memory_space<vmem>>, %arg2: memref<1x8xf32, #tpu.memory_space<vmem>>, %arg3: memref<1x8xf32, #tpu.memory_space<vmem>>, %arg4: memref<8x16xbf16, #tpu.memory_space<vmem>>, %arg5: memref<1x16xf32, #tpu.memory_space<vmem>>, %arg6: memref<16x16xbf16, #tpu.memory_space<vmem>>) attributes {dimension_semantics = [#tpu.dimension_semantics<parallel>], iteration_bounds = array<i64: 1>, scalar_prefetch = 0 : i64, scratch_operands = 0 : i64, tpu.core_type = #tpu.core_type<tc>, window_params = [{transform_indices = @transform_0, window_bounds = array<i64: 16, 1>}, {pipeline_mode = #tpu.pipeline_mode<synchronous>, transform_indices = @transform_1, window_bounds = array<i64: 1, 8>}, {pipeline_mode = #tpu.pipeline_mode<synchronous>, transform_indices = @transform_2, window_bounds = array<i64: 1, 8>}, {pipeline_mode = #tpu.pipeline_mode<synchronous>, transform_indices = @transform_3, window_bounds = array<i64: 8, 16>}, {pipeline_mode = #tpu.pipeline_mode<synchronous>, transform_indices = @transform_4, window_bounds = array<i64: 1, 16>}, {transform_indices = @transform_5, window_bounds = array<i64: 16, 16>}]} {
    %c0 = arith.constant 0 : index
    %c0_0 = arith.constant 0 : index
    %0 = vector.load %arg1[%c0, %c0_0] : memref<16x1xf32, #tpu.memory_space<vmem>>, vector<16x1xf32>
    %c0_1 = arith.constant 0 : index
    %c0_2 = arith.constant 0 : index
    %1 = vector.load %arg2[%c0_1, %c0_2] : memref<1x8xf32, #tpu.memory_space<vmem>>, vector<1x8xf32>
    %2 = vector.broadcast %0 : vector<16x1xf32> to vector<16x8xf32>
    %3 = vector.broadcast %1 : vector<1x8xf32> to vector<16x8xf32>
    %4 = arith.mulf %2, %3 : vector<16x8xf32>
    %c0_3 = arith.constant 0 : index
    %c0_4 = arith.constant 0 : index
    %5 = vector.load %arg3[%c0_3, %c0_4] : memref<1x8xf32, #tpu.memory_space<vmem>>, vector<1x8xf32>
    %6 = vector.broadcast %5 : vector<1x8xf32> to vector<16x8xf32>
    %7 = arith.addf %4, %6 : vector<16x8xf32>
    %cst = arith.constant 0.000000e+00 : f32
    %8 = vector.broadcast %cst : f32 to vector<16x8xf32>
    %9 = arith.maximumf %7, %8 : vector<16x8xf32>
    %10 = arith.truncf %9 : vector<16x8xf32> to vector<16x8xbf16>
    %c0_5 = arith.constant 0 : index
    %c0_6 = arith.constant 0 : index
    %11 = vector.load %arg4[%c0_5, %c0_6] : memref<8x16xbf16, #tpu.memory_space<vmem>>, vector<8x16xbf16>
    %cst_7 = arith.constant dense<0.000000e+00> : vector<16x16xf32>
    %12 = tpu.matmul %10, %11, %cst_7 {dimension_numbers = #tpu.dot_dimension_numbers<[1], [0], [0], [1], [0, 0, 1, 1], [], []>} : vector<16x8xbf16>, vector<8x16xbf16>, vector<16x16xf32> -> vector<16x16xf32>
    %c0_8 = arith.constant 0 : index
    %c0_9 = arith.constant 0 : index
    %13 = vector.load %arg5[%c0_8, %c0_9] : memref<1x16xf32, #tpu.memory_space<vmem>>, vector<1x16xf32>
    %14 = vector.broadcast %13 : vector<1x16xf32> to vector<16x16xf32>
    %15 = arith.addf %12, %14 : vector<16x16xf32>
    %16 = arith.truncf %15 : vector<16x16xf32> to vector<16x16xbf16>
    %c0_10 = arith.constant 0 : index
    %c0_11 = arith.constant 0 : index
    %17 = vector.load %arg6[%c0_10, %c0_11] : memref<16x16xbf16, #tpu.memory_space<vmem>>, vector<16x16xbf16>
    tpu.vector_store %arg6[%c0_10, %c0_11], %16 {strides = array<i32>} : memref<16x16xbf16, #tpu.memory_space<vmem>>, vector<16x16xbf16>,
    return
  }
  func.func @transform_0(%arg0: i32) -> (i32, i32) {
    %c0_i32 = arith.constant 0 : i32
    %c0_i32_0 = arith.constant 0 : i32
    return %arg0, %c0_i32 : i32, i32
  }
  func.func @transform_1(%arg0: i32) -> (i32, i32) {
    %c0_i32 = arith.constant 0 : i32
    %c0_i32_0 = arith.constant 0 : i32
    %c0_i32_1 = arith.constant 0 : i32
    return %c0_i32, %c0_i32_0 : i32, i32
  }
  func.func @transform_2(%arg0: i32) -> (i32, i32) {
    %c0_i32 = arith.constant 0 : i32
    %c0_i32_0 = arith.constant 0 : i32
    %c0_i32_1 = arith.constant 0 : i32
    return %c0_i32, %c0_i32_0 : i32, i32
  }
  func.func @transform_3(%arg0: i32) -> (i32, i32) {
    %c0_i32 = arith.constant 0 : i32
    %c0_i32_0 = arith.constant 0 : i32
    %c0_i32_1 = arith.constant 0 : i32
    return %c0_i32, %c0_i32_0 : i32, i32
  }
  func.func @transform_4(%arg0: i32) -> (i32, i32) {
    %c0_i32 = arith.constant 0 : i32
    %c0_i32_0 = arith.constant 0 : i32
    %c0_i32_1 = arith.constant 0 : i32
    return %c0_i32, %c0_i32_0 : i32, i32
  }
  func.func @transform_5(%arg0: i32) -> (i32, i32) {
    %c0_i32 = arith.constant 0 : i32
    %c0_i32_0 = arith.constant 0 : i32
    return %arg0, %c0_i32 : i32, i32
  }
}

module attributes {stable_mosaic.version = 11 : i64} {
  func.func @_edge_head_kernel(%arg0: i32, %arg1: memref<16x32xbf16, #tpu.memory_space<vmem>>, %arg2: memref<16x32xbf16, #tpu.memory_space<vmem>>, %arg3: memref<16x16xbf16, #tpu.memory_space<vmem>>, %arg4: memref<32x32xbf16, #tpu.memory_space<vmem>>, %arg5: memref<32x32xbf16, #tpu.memory_space<vmem>>, %arg6: memref<16x32xbf16, #tpu.memory_space<vmem>>, %arg7: memref<1x32xf32, #tpu.memory_space<vmem>>, %arg8: memref<32x16xbf16, #tpu.memory_space<vmem>>, %arg9: memref<1x16xf32, #tpu.memory_space<vmem>>, %arg10: memref<16x1xbf16, #tpu.memory_space<vmem>>, %arg11: memref<1x1xf32, #tpu.memory_space<vmem>>, %arg12: memref<32x32xbf16, #tpu.memory_space<vmem>>, %arg13: memref<32x32xbf16, #tpu.memory_space<vmem>>, %arg14: memref<16x32xbf16, #tpu.memory_space<vmem>>, %arg15: memref<1x32xf32, #tpu.memory_space<vmem>>, %arg16: memref<32x16xbf16, #tpu.memory_space<vmem>>, %arg17: memref<1x16xf32, #tpu.memory_space<vmem>>, %arg18: memref<16x3xbf16, #tpu.memory_space<vmem>>, %arg19: memref<1x3xf32, #tpu.memory_space<vmem>>, %arg20: memref<16x1xf32, #tpu.memory_space<vmem>>, %arg21: memref<16x3xf32, #tpu.memory_space<vmem>>) attributes {dimension_semantics = [#tpu.dimension_semantics<parallel>], iteration_bounds = array<i64: 1>, scalar_prefetch = 0 : i64, scratch_operands = 0 : i64, tpu.core_type = #tpu.core_type<tc>, window_params = [{transform_indices = @transform_0, window_bounds = array<i64: 16, 32>}, {transform_indices = @transform_1, window_bounds = array<i64: 16, 32>}, {transform_indices = @transform_2, window_bounds = array<i64: 16, 16>}, {pipeline_mode = #tpu.pipeline_mode<synchronous>, transform_indices = @transform_3, window_bounds = array<i64: 32, 32>}, {pipeline_mode = #tpu.pipeline_mode<synchronous>, transform_indices = @transform_4, window_bounds = array<i64: 32, 32>}, {pipeline_mode = #tpu.pipeline_mode<synchronous>, transform_indices = @transform_5, window_bounds = array<i64: 16, 32>}, {pipeline_mode = #tpu.pipeline_mode<synchronous>, transform_indices = @transform_6, window_bounds = array<i64: 1, 32>}, {pipeline_mode = #tpu.pipeline_mode<synchronous>, transform_indices = @transform_7, window_bounds = array<i64: 32, 16>}, {pipeline_mode = #tpu.pipeline_mode<synchronous>, transform_indices = @transform_8, window_bounds = array<i64: 1, 16>}, {pipeline_mode = #tpu.pipeline_mode<synchronous>, transform_indices = @transform_9, window_bounds = array<i64: 16, 1>}, {pipeline_mode = #tpu.pipeline_mode<synchronous>, transform_indices = @transform_10, window_bounds = array<i64: 1, 1>}, {pipeline_mode = #tpu.pipeline_mode<synchronous>, transform_indices = @transform_11, window_bounds = array<i64: 32, 32>}, {pipeline_mode = #tpu.pipeline_mode<synchronous>, transform_indices = @transform_12, window_bounds = array<i64: 32, 32>}, {pipeline_mode = #tpu.pipeline_mode<synchronous>, transform_indices = @transform_13, window_bounds = array<i64: 16, 32>}, {pipeline_mode = #tpu.pipeline_mode<synchronous>, transform_indices = @transform_14, window_bounds = array<i64: 1, 32>}, {pipeline_mode = #tpu.pipeline_mode<synchronous>, transform_indices = @transform_15, window_bounds = array<i64: 32, 16>}, {pipeline_mode = #tpu.pipeline_mode<synchronous>, transform_indices = @transform_16, window_bounds = array<i64: 1, 16>}, {pipeline_mode = #tpu.pipeline_mode<synchronous>, transform_indices = @transform_17, window_bounds = array<i64: 16, 3>}, {pipeline_mode = #tpu.pipeline_mode<synchronous>, transform_indices = @transform_18, window_bounds = array<i64: 1, 3>}, {transform_indices = @transform_19, window_bounds = array<i64: 16, 1>}, {transform_indices = @transform_20, window_bounds = array<i64: 16, 3>}]} {
    %c0 = arith.constant 0 : index
    %c0_0 = arith.constant 0 : index
    %0 = vector.load %arg1[%c0, %c0_0] : memref<16x32xbf16, #tpu.memory_space<vmem>>, vector<16x32xbf16>
    %c0_1 = arith.constant 0 : index
    %c0_2 = arith.constant 0 : index
    %1 = vector.load %arg2[%c0_1, %c0_2] : memref<16x32xbf16, #tpu.memory_space<vmem>>, vector<16x32xbf16>
    %c0_3 = arith.constant 0 : index
    %c0_4 = arith.constant 0 : index
    %2 = vector.load %arg3[%c0_3, %c0_4] : memref<16x16xbf16, #tpu.memory_space<vmem>>, vector<16x16xbf16>
    %c0_5 = arith.constant 0 : index
    %c0_6 = arith.constant 0 : index
    %3 = vector.load %arg4[%c0_5, %c0_6] : memref<32x32xbf16, #tpu.memory_space<vmem>>, vector<32x32xbf16>
    %cst = arith.constant dense<0.000000e+00> : vector<16x32xf32>
    %4 = tpu.matmul %0, %3, %cst {dimension_numbers = #tpu.dot_dimension_numbers<[1], [0], [0], [1], [0, 0, 1, 1], [], []>} : vector<16x32xbf16>, vector<32x32xbf16>, vector<16x32xf32> -> vector<16x32xf32>
    %c0_7 = arith.constant 0 : index
    %c0_8 = arith.constant 0 : index
    %5 = vector.load %arg5[%c0_7, %c0_8] : memref<32x32xbf16, #tpu.memory_space<vmem>>, vector<32x32xbf16>
    %cst_9 = arith.constant dense<0.000000e+00> : vector<16x32xf32>
    %6 = tpu.matmul %1, %5, %cst_9 {dimension_numbers = #tpu.dot_dimension_numbers<[1], [0], [0], [1], [0, 0, 1, 1], [], []>} : vector<16x32xbf16>, vector<32x32xbf16>, vector<16x32xf32> -> vector<16x32xf32>
    %7 = arith.addf %4, %6 : vector<16x32xf32>
    %c0_10 = arith.constant 0 : index
    %c0_11 = arith.constant 0 : index
    %8 = vector.load %arg6[%c0_10, %c0_11] : memref<16x32xbf16, #tpu.memory_space<vmem>>, vector<16x32xbf16>
    %cst_12 = arith.constant dense<0.000000e+00> : vector<16x32xf32>
    %9 = tpu.matmul %2, %8, %cst_12 {dimension_numbers = #tpu.dot_dimension_numbers<[1], [0], [0], [1], [0, 0, 1, 1], [], []>} : vector<16x16xbf16>, vector<16x32xbf16>, vector<16x32xf32> -> vector<16x32xf32>
    %10 = arith.addf %7, %9 : vector<16x32xf32>
    %c0_13 = arith.constant 0 : index
    %c0_14 = arith.constant 0 : index
    %11 = vector.load %arg7[%c0_13, %c0_14] : memref<1x32xf32, #tpu.memory_space<vmem>>, vector<1x32xf32>
    %12 = vector.broadcast %11 : vector<1x32xf32> to vector<16x32xf32>
    %13 = arith.addf %10, %12 : vector<16x32xf32>
    %cst_15 = arith.constant 0.000000e+00 : f32
    %14 = vector.broadcast %cst_15 : f32 to vector<16x32xf32>
    %15 = arith.maximumf %13, %14 : vector<16x32xf32>
    %16 = arith.truncf %15 : vector<16x32xf32> to vector<16x32xbf16>
    %c0_16 = arith.constant 0 : index
    %c0_17 = arith.constant 0 : index
    %17 = vector.load %arg8[%c0_16, %c0_17] : memref<32x16xbf16, #tpu.memory_space<vmem>>, vector<32x16xbf16>
    %cst_18 = arith.constant dense<0.000000e+00> : vector<16x16xf32>
    %18 = tpu.matmul %16, %17, %cst_18 {dimension_numbers = #tpu.dot_dimension_numbers<[1], [0], [0], [1], [0, 0, 1, 1], [], []>} : vector<16x32xbf16>, vector<32x16xbf16>, vector<16x16xf32> -> vector<16x16xf32>
    %c0_19 = arith.constant 0 : index
    %c0_20 = arith.constant 0 : index
    %19 = vector.load %arg9[%c0_19, %c0_20] : memref<1x16xf32, #tpu.memory_space<vmem>>, vector<1x16xf32>
    %20 = vector.broadcast %19 : vector<1x16xf32> to vector<16x16xf32>
    %21 = arith.addf %18, %20 : vector<16x16xf32>
    %cst_21 = arith.constant 0.000000e+00 : f32
    %22 = vector.broadcast %cst_21 : f32 to vector<16x16xf32>
    %23 = arith.maximumf %21, %22 : vector<16x16xf32>
    %24 = arith.truncf %23 : vector<16x16xf32> to vector<16x16xbf16>
    %c0_22 = arith.constant 0 : index
    %c0_23 = arith.constant 0 : index
    %25 = vector.load %arg10[%c0_22, %c0_23] : memref<16x1xbf16, #tpu.memory_space<vmem>>, vector<16x1xbf16>
    %cst_24 = arith.constant dense<0.000000e+00> : vector<16x1xf32>
    %26 = tpu.matmul %24, %25, %cst_24 {dimension_numbers = #tpu.dot_dimension_numbers<[1], [0], [0], [1], [0, 0, 1, 1], [], []>} : vector<16x16xbf16>, vector<16x1xbf16>, vector<16x1xf32> -> vector<16x1xf32>
    %c0_25 = arith.constant 0 : index
    %c0_26 = arith.constant 0 : index
    %27 = vector.load %arg11[%c0_25, %c0_26] : memref<1x1xf32, #tpu.memory_space<vmem>>, vector<1x1xf32>
    %28 = vector.broadcast %27 : vector<1x1xf32> to vector<16x1xf32>
    %29 = arith.addf %26, %28 : vector<16x1xf32>
    %c0_27 = arith.constant 0 : index
    %c0_28 = arith.constant 0 : index
    %30 = vector.load %arg20[%c0_27, %c0_28] : memref<16x1xf32, #tpu.memory_space<vmem>>, vector<16x1xf32>
    tpu.vector_store %arg20[%c0_27, %c0_28], %29 {strides = array<i32>} : memref<16x1xf32, #tpu.memory_space<vmem>>, vector<16x1xf32>,
    %c0_29 = arith.constant 0 : index
    %c0_30 = arith.constant 0 : index
    %31 = vector.load %arg12[%c0_29, %c0_30] : memref<32x32xbf16, #tpu.memory_space<vmem>>, vector<32x32xbf16>
    %cst_31 = arith.constant dense<0.000000e+00> : vector<16x32xf32>
    %32 = tpu.matmul %0, %31, %cst_31 {dimension_numbers = #tpu.dot_dimension_numbers<[1], [0], [0], [1], [0, 0, 1, 1], [], []>} : vector<16x32xbf16>, vector<32x32xbf16>, vector<16x32xf32> -> vector<16x32xf32>
    %c0_32 = arith.constant 0 : index
    %c0_33 = arith.constant 0 : index
    %33 = vector.load %arg13[%c0_32, %c0_33] : memref<32x32xbf16, #tpu.memory_space<vmem>>, vector<32x32xbf16>
    %cst_34 = arith.constant dense<0.000000e+00> : vector<16x32xf32>
    %34 = tpu.matmul %1, %33, %cst_34 {dimension_numbers = #tpu.dot_dimension_numbers<[1], [0], [0], [1], [0, 0, 1, 1], [], []>} : vector<16x32xbf16>, vector<32x32xbf16>, vector<16x32xf32> -> vector<16x32xf32>
    %35 = arith.addf %32, %34 : vector<16x32xf32>
    %c0_35 = arith.constant 0 : index
    %c0_36 = arith.constant 0 : index
    %36 = vector.load %arg14[%c0_35, %c0_36] : memref<16x32xbf16, #tpu.memory_space<vmem>>, vector<16x32xbf16>
    %cst_37 = arith.constant dense<0.000000e+00> : vector<16x32xf32>
    %37 = tpu.matmul %2, %36, %cst_37 {dimension_numbers = #tpu.dot_dimension_numbers<[1], [0], [0], [1], [0, 0, 1, 1], [], []>} : vector<16x16xbf16>, vector<16x32xbf16>, vector<16x32xf32> -> vector<16x32xf32>
    %38 = arith.addf %35, %37 : vector<16x32xf32>
    %c0_38 = arith.constant 0 : index
    %c0_39 = arith.constant 0 : index
    %39 = vector.load %arg15[%c0_38, %c0_39] : memref<1x32xf32, #tpu.memory_space<vmem>>, vector<1x32xf32>
    %40 = vector.broadcast %39 : vector<1x32xf32> to vector<16x32xf32>
    %41 = arith.addf %38, %40 : vector<16x32xf32>
    %cst_40 = arith.constant 0.000000e+00 : f32
    %42 = vector.broadcast %cst_40 : f32 to vector<16x32xf32>
    %43 = arith.maximumf %41, %42 : vector<16x32xf32>
    %44 = arith.truncf %43 : vector<16x32xf32> to vector<16x32xbf16>
    %c0_41 = arith.constant 0 : index
    %c0_42 = arith.constant 0 : index
    %45 = vector.load %arg16[%c0_41, %c0_42] : memref<32x16xbf16, #tpu.memory_space<vmem>>, vector<32x16xbf16>
    %cst_43 = arith.constant dense<0.000000e+00> : vector<16x16xf32>
    %46 = tpu.matmul %44, %45, %cst_43 {dimension_numbers = #tpu.dot_dimension_numbers<[1], [0], [0], [1], [0, 0, 1, 1], [], []>} : vector<16x32xbf16>, vector<32x16xbf16>, vector<16x16xf32> -> vector<16x16xf32>
    %c0_44 = arith.constant 0 : index
    %c0_45 = arith.constant 0 : index
    %47 = vector.load %arg17[%c0_44, %c0_45] : memref<1x16xf32, #tpu.memory_space<vmem>>, vector<1x16xf32>
    %48 = vector.broadcast %47 : vector<1x16xf32> to vector<16x16xf32>
    %49 = arith.addf %46, %48 : vector<16x16xf32>
    %cst_46 = arith.constant 0.000000e+00 : f32
    %50 = vector.broadcast %cst_46 : f32 to vector<16x16xf32>
    %51 = arith.maximumf %49, %50 : vector<16x16xf32>
    %52 = arith.truncf %51 : vector<16x16xf32> to vector<16x16xbf16>
    %c0_47 = arith.constant 0 : index
    %c0_48 = arith.constant 0 : index
    %53 = vector.load %arg18[%c0_47, %c0_48] : memref<16x3xbf16, #tpu.memory_space<vmem>>, vector<16x3xbf16>
    %cst_49 = arith.constant dense<0.000000e+00> : vector<16x3xf32>
    %54 = tpu.matmul %52, %53, %cst_49 {dimension_numbers = #tpu.dot_dimension_numbers<[1], [0], [0], [1], [0, 0, 1, 1], [], []>} : vector<16x16xbf16>, vector<16x3xbf16>, vector<16x3xf32> -> vector<16x3xf32>
    %c0_50 = arith.constant 0 : index
    %c0_51 = arith.constant 0 : index
    %55 = vector.load %arg19[%c0_50, %c0_51] : memref<1x3xf32, #tpu.memory_space<vmem>>, vector<1x3xf32>
    %56 = vector.broadcast %55 : vector<1x3xf32> to vector<16x3xf32>
    %57 = arith.addf %54, %56 : vector<16x3xf32>
    %cst_52 = arith.constant 2.000000e+01 : f32
    %58 = vector.broadcast %cst_52 : f32 to vector<16x3xf32>
    %59 = arith.cmpf ogt, %57, %58 : vector<16x3xf32>
    %cst_53 = arith.constant 2.000000e+01 : f32
    %60 = vector.broadcast %cst_53 : f32 to vector<16x3xf32>
    %61 = arith.minimumf %57, %60 : vector<16x3xf32>
    %62 = math.exp %61 : vector<16x3xf32>
    %cst_54 = arith.constant 1.000000e+00 : f32
    %63 = vector.broadcast %cst_54 : f32 to vector<16x3xf32>
    %64 = arith.addf %63, %62 : vector<16x3xf32>
    %65 = math.log %64 : vector<16x3xf32>
    %66 = arith.select %59, %57, %65 : vector<16x3xi1>, vector<16x3xf32>
    %cst_55 = arith.constant 9.99999997E-7 : f32
    %67 = vector.broadcast %cst_55 : f32 to vector<16x3xf32>
    %68 = arith.addf %66, %67 : vector<16x3xf32>
    %c0_56 = arith.constant 0 : index
    %c0_57 = arith.constant 0 : index
    %69 = vector.load %arg21[%c0_56, %c0_57] : memref<16x3xf32, #tpu.memory_space<vmem>>, vector<16x3xf32>
    tpu.vector_store %arg21[%c0_56, %c0_57], %68 {strides = array<i32>} : memref<16x3xf32, #tpu.memory_space<vmem>>, vector<16x3xf32>,
    return
  }
  func.func @transform_0(%arg0: i32) -> (i32, i32) {
    %c0_i32 = arith.constant 0 : i32
    %c0_i32_0 = arith.constant 0 : i32
    return %arg0, %c0_i32 : i32, i32
  }
  func.func @transform_1(%arg0: i32) -> (i32, i32) {
    %c0_i32 = arith.constant 0 : i32
    %c0_i32_0 = arith.constant 0 : i32
    return %arg0, %c0_i32 : i32, i32
  }
  func.func @transform_2(%arg0: i32) -> (i32, i32) {
    %c0_i32 = arith.constant 0 : i32
    %c0_i32_0 = arith.constant 0 : i32
    return %arg0, %c0_i32 : i32, i32
  }
  func.func @transform_3(%arg0: i32) -> (i32, i32) {
    %c0_i32 = arith.constant 0 : i32
    %c0_i32_0 = arith.constant 0 : i32
    %c0_i32_1 = arith.constant 0 : i32
    return %c0_i32, %c0_i32_0 : i32, i32
  }
  func.func @transform_4(%arg0: i32) -> (i32, i32) {
    %c0_i32 = arith.constant 0 : i32
    %c0_i32_0 = arith.constant 0 : i32
    %c0_i32_1 = arith.constant 0 : i32
    return %c0_i32, %c0_i32_0 : i32, i32
  }
  func.func @transform_5(%arg0: i32) -> (i32, i32) {
    %c0_i32 = arith.constant 0 : i32
    %c0_i32_0 = arith.constant 0 : i32
    %c0_i32_1 = arith.constant 0 : i32
    return %c0_i32, %c0_i32_0 : i32, i32
  }
  func.func @transform_6(%arg0: i32) -> (i32, i32) {
    %c0_i32 = arith.constant 0 : i32
    %c0_i32_0 = arith.constant 0 : i32
    %c0_i32_1 = arith.constant 0 : i32
    return %c0_i32, %c0_i32_0 : i32, i32
  }
  func.func @transform_7(%arg0: i32) -> (i32, i32) {
    %c0_i32 = arith.constant 0 : i32
    %c0_i32_0 = arith.constant 0 : i32
    %c0_i32_1 = arith.constant 0 : i32
    return %c0_i32, %c0_i32_0 : i32, i32
  }
  func.func @transform_8(%arg0: i32) -> (i32, i32) {
    %c0_i32 = arith.constant 0 : i32
    %c0_i32_0 = arith.constant 0 : i32
    %c0_i32_1 = arith.constant 0 : i32
    return %c0_i32, %c0_i32_0 : i32, i32
  }
  func.func @transform_9(%arg0: i32) -> (i32, i32) {
    %c0_i32 = arith.constant 0 : i32
    %c0_i32_0 = arith.constant 0 : i32
    %c0_i32_1 = arith.constant 0 : i32
    return %c0_i32, %c0_i32_0 : i32, i32
  }
  func.func @transform_10(%arg0: i32) -> (i32, i32) {
    %c0_i32 = arith.constant 0 : i32
    %c0_i32_0 = arith.constant 0 : i32
    %c0_i32_1 = arith.constant 0 : i32
    return %c0_i32, %c0_i32_0 : i32, i32
  }
  func.func @transform_11(%arg0: i32) -> (i32, i32) {
    %c0_i32 = arith.constant 0 : i32
    %c0_i32_0 = arith.constant 0 : i32
    %c0_i32_1 = arith.constant 0 : i32
    return %c0_i32, %c0_i32_0 : i32, i32
  }
  func.func @transform_12(%arg0: i32) -> (i32, i32) {
    %c0_i32 = arith.constant 0 : i32
    %c0_i32_0 = arith.constant 0 : i32
    %c0_i32_1 = arith.constant 0 : i32
    return %c0_i32, %c0_i32_0 : i32, i32
  }
  func.func @transform_13(%arg0: i32) -> (i32, i32) {
    %c0_i32 = arith.constant 0 : i32
    %c0_i32_0 = arith.constant 0 : i32
    %c0_i32_1 = arith.constant 0 : i32
    return %c0_i32, %c0_i32_0 : i32, i32
  }
  func.func @transform_14(%arg0: i32) -> (i32, i32) {
    %c0_i32 = arith.constant 0 : i32
    %c0_i32_0 = arith.constant 0 : i32
    %c0_i32_1 = arith.constant 0 : i32
    return %c0_i32, %c0_i32_0 : i32, i32
  }
  func.func @transform_15(%arg0: i32) -> (i32, i32) {
    %c0_i32 = arith.constant 0 : i32
    %c0_i32_0 = arith.constant 0 : i32
    %c0_i32_1 = arith.constant 0 : i32
    return %c0_i32, %c0_i32_0 : i32, i32
  }
  func.func @transform_16(%arg0: i32) -> (i32, i32) {
    %c0_i32 = arith.constant 0 : i32
    %c0_i32_0 = arith.constant 0 : i32
    %c0_i32_1 = arith.constant 0 : i32
    return %c0_i32, %c0_i32_0 : i32, i32
  }
  func.func @transform_17(%arg0: i32) -> (i32, i32) {
    %c0_i32 = arith.constant 0 : i32
    %c0_i32_0 = arith.constant 0 : i32
    %c0_i32_1 = arith.constant 0 : i32
    return %c0_i32, %c0_i32_0 : i32, i32
  }
  func.func @transform_18(%arg0: i32) -> (i32, i32) {
    %c0_i32 = arith.constant 0 : i32
    %c0_i32_0 = arith.constant 0 : i32
    %c0_i32_1 = arith.constant 0 : i32
    return %c0_i32, %c0_i32_0 : i32, i32
  }
  func.func @transform_19(%arg0: i32) -> (i32, i32) {
    %c0_i32 = arith.constant 0 : i32
    %c0_i32_0 = arith.constant 0 : i32
    return %arg0, %c0_i32 : i32, i32
  }
  func.func @transform_20(%arg0: i32) -> (i32, i32) {
    %c0_i32 = arith.constant 0 : i32
    %c0_i32_0 = arith.constant 0 : i32
    return %arg0, %c0_i32 : i32, i32
  }
}

</mosaic_0001>

<llo_original>
// kernel: hybrid_graph_transformer_forward.8
$region0: #{hybrid_graph_transformer_forward.8}
  #allocation0 [shape = 'u32[]', space=smem, size = 0x4, offset = 0x4, fixed_abs, tag = 'smem constant byte address 0x4 - core index']
  #allocation1 [shape = 'u32[144,128]{1,0:T(1,128)}', space=vmem, size = 0x12000, scoped, tag = 'internal scratch']
  %s0 = inlined_call_operand.vmem [shape: f32[8,8], index: 0, kind: input, shape index: {}]
  %s1 = inlined_call_operand.vmem [shape: bf16[8,32], index: 1, kind: input, shape index: {}]
  %s2 = inlined_call_operand.vmem [shape: f32[1,32], index: 2, kind: input, shape index: {}]
  %s3 = inlined_call_operand.vmem [shape: bf16[8,32], index: 3, kind: output, shape index: {}]
  %s4 = sld [smem:[#allocation0]]
  $region22: #{hybrid_graph_transformer_forward.8} parent=0
    _
  %s6 = ssub.s32 1, %s4
  %s7 = scalar_select 0, %s6, %s4
  // Predicated region
  $region2: #{hybrid_graph_transformer_forward.8} parent=0 // pred_check
    _
  $region3: #{hybrid_graph_transformer_forward.8} parent=0 // pred_check_branch
    %9 = sbr.rel (0) target = $region5
  $region4: #{hybrid_graph_transformer_forward.8} parent=0 // pred_region
    _
  $region5: #{hybrid_graph_transformer_forward.8} parent=0 // pred_fallthru
    _
  // Predicated region
  $region6: #{hybrid_graph_transformer_forward.8} parent=0 // pred_check
    _
  $region7: #{hybrid_graph_transformer_forward.8} parent=0 // pred_check_branch
    %11 = sbr.rel (0) target = $region9
  $region8: #{hybrid_graph_transformer_forward.8} parent=0 // pred_region
    _
  $region9: #{hybrid_graph_transformer_forward.8} parent=0 // pred_fallthru
    _
  // Predicated region
  $region10: #{hybrid_graph_transformer_forward.8} parent=0 // pred_check
    _
  $region11: #{hybrid_graph_transformer_forward.8} parent=0 // pred_check_branch
    %13 = sbr.rel (0) target = $region13
  $region12: #{hybrid_graph_transformer_forward.8} parent=0 // pred_region
    _
  $region13: #{hybrid_graph_transformer_forward.8} parent=0 // pred_fallthru
    _
  %v15 = vld [vmem:[%s0] sm:$0xff]
  %v16 = vpack.c.bf16 %v15, %v15
  %v17 = vld [vmem:[%s1] sm:$0xf]
  %v18 = vld [vmem:[%s2] sm:$0x1]
  %v20 = vlaneseq
  %v21 = vshrl.u32 %v20, 7
  %v22 = vsub.s32 0, %v21
  %v23 = vrot.slane %v18, %v22
  %vm25 = vcmask 64512
  %v27 = vsel %vm25, %v16, 0
  %vm29 = vcmask 1043456
  %v31 = vsel %vm29, %v17, 0
  %33 = vmatprep.subr.bf16.mxu0 0
  %34 = vmatpush1.bf16.msra.mxu0 %v31
  %35 = vmatprep.subr.bf16.mxu0 0
  %36 = vmatpush1.bf16.msra.mxu0 0
  %37 = vmatprep.subr.bf16.mxu0 0
  %38 = vmatpush1.bf16.msra.mxu0 0
  %39 = vmatprep.subr.bf16.mxu0 0
  %40 = vmatpush1.bf16.msra.mxu0 0
  %41 = vmatprep.subr.bf16.mxu0 0
  %42 = vmatpush1.bf16.msra.mxu0 0
  %43 = vmatprep.subr.bf16.mxu0 0
  %44 = vmatpush1.bf16.msra.mxu0 0
  %45 = vmatprep.subr.bf16.mxu0 0
  %46 = vmatpush1.bf16.msra.mxu0 0
  %47 = vmatprep.subr.bf16.mxu0 0
  %48 = vmatpush1.bf16.msra.mxu0 0
  %49 = vmatprep.subr.bf16.mxu0 0
  %50 = vmatpush1.bf16.msra.mxu0 0
  %51 = vmatprep.subr.bf16.mxu0 0
  %52 = vmatpush1.bf16.msra.mxu0 0
  %53 = vmatprep.subr.bf16.mxu0 0
  %54 = vmatpush1.bf16.msra.mxu0 0
  %55 = vmatprep.subr.bf16.mxu0 0
  %56 = vmatpush1.bf16.msra.mxu0 0
  %57 = vmatprep.subr.bf16.mxu0 0
  %58 = vmatpush1.bf16.msra.mxu0 0
  %59 = vmatprep.subr.bf16.mxu0 0
  %60 = vmatpush1.bf16.msra.mxu0 0
  %61 = vmatprep.subr.bf16.mxu0 0
  %62 = vmatpush1.bf16.msra.mxu0 0
  %63 = vmatprep.subr.bf16.mxu0 0
  %64 = vmatpush1.bf16.msra.mxu0 0
  %65 = vmatprep.mubr.bf16.mxu0 0
  %66 = vmatmul.mubr.bf16.gmra.mrb[0].mxu0 %v27
  %v67 = vpop.f32.mrb[0].mxu0
  %v68 = vadd.f32 %v23, %v67
  %v69 = vpop.f32.mrb[0].mxu0
  %v70 = vpop.f32.mrb[0].mxu0
  %v71 = vpop.f32.mrb[0].mxu0
  %72 = vdwg.mxu0
  %v73 = vpack.c.bf16 %v68, %v68
  %vm74 = vcmask 257024
  %75 = vst.msk [vmem:[%s3] sm:$0xf] %vm74, %v73
  // Predicated region
  $region14: #{hybrid_graph_transformer_forward.8} parent=0 // pred_check
    _
  $region15: #{hybrid_graph_transformer_forward.8} parent=0 // pred_check_branch
    %77 = sbr.rel (0) target = $region17
  $region16: #{hybrid_graph_transformer_forward.8} parent=0 // pred_region
    _
  $region17: #{hybrid_graph_transformer_forward.8} parent=0 // pred_fallthru
    _
  // Predicated region
  $region18: #{hybrid_graph_transformer_forward.8} parent=0 // pred_check
    _
  $region19: #{hybrid_graph_transformer_forward.8} parent=0 // pred_check_branch
    %79 = sbr.rel (0) target = $region21
  $region20: #{hybrid_graph_transformer_forward.8} parent=0 // pred_region
    _
  $region21: #{hybrid_graph_transformer_forward.8} parent=0 // pred_fallthru
    _

// kernel: hybrid_graph_transformer_forward.9
$region0: #{hybrid_graph_transformer_forward.9}
  #allocation0 [shape = 'u32[]', space=smem, size = 0x4, offset = 0x4, fixed_abs, tag = 'smem constant byte address 0x4 - core index']
  #allocation1 [shape = 'u32[144,128]{1,0:T(1,128)}', space=vmem, size = 0x12000, scoped, tag = 'internal scratch']
  %s0 = inlined_call_operand.vmem [shape: bf16[8,32], index: 0, kind: input, shape index: {}]
  %s1 = inlined_call_operand.vmem [shape: bf16[32,40], index: 1, kind: input, shape index: {}]
  %s2 = inlined_call_operand.vmem [shape: bf16[8,40], index: 2, kind: output, shape index: {}]
  %s3 = sld [smem:[#allocation0]]
  $region18: #{hybrid_graph_transformer_forward.9} parent=0
    _
  %s5 = ssub.s32 1, %s3
  %s6 = scalar_select 0, %s5, %s3
  // Predicated region
  $region2: #{hybrid_graph_transformer_forward.9} parent=0 // pred_check
    _
  $region3: #{hybrid_graph_transformer_forward.9} parent=0 // pred_check_branch
    %8 = sbr.rel (0) target = $region5
  $region4: #{hybrid_graph_transformer_forward.9} parent=0 // pred_region
    _
  $region5: #{hybrid_graph_transformer_forward.9} parent=0 // pred_fallthru
    _
  // Predicated region
  $region6: #{hybrid_graph_transformer_forward.9} parent=0 // pred_check
    _
  $region7: #{hybrid_graph_transformer_forward.9} parent=0 // pred_check_branch
    %10 = sbr.rel (0) target = $region9
  $region8: #{hybrid_graph_transformer_forward.9} parent=0 // pred_region
    _
  $region9: #{hybrid_graph_transformer_forward.9} parent=0 // pred_fallthru
    _
  %v12 = vld [vmem:[%s0] sm:$0xf]
  %v13 = vld [vmem:[%s1] sm:$0xf]
  %v14 = vld [vmem:[%s1 + $0x4] sm:$0xf]
  %v15 = vld [vmem:[%s1 + $0x8] sm:$0xf]
  %v16 = vld [vmem:[%s1 + $0xc] sm:$0xf]
  %v21 = vunpack.c.l.b16 %v13
  %v22 = vunpack.c.l.b16 %v14
  %v23 = vunpack.c.l.b16 %v15
  %v24 = vunpack.c.l.b16 %v16
  %v25 = vpack.c.b16 %v22, %v21
  %v26 = vpack.c.b16 %v24, %v23
  %vm29 = vcmask 261120
  %v31 = vsel %vm29, %v12, 0
  %33 = vmatprep.subr.bf16.mxu0 0
  %34 = vmatpush1.bf16.msra.mxu0 %v25
  %35 = vmatprep.subr.bf16.mxu0 0
  %36 = vmatpush1.bf16.msra.mxu0 %v26
  %37 = vmatprep.subr.bf16.mxu0 0
  %38 = vmatpush1.bf16.msra.mxu0 0
  %39 = vmatprep.subr.bf16.mxu0 0
  %40 = vmatpush1.bf16.msra.mxu0 0
  %41 = vmatprep.subr.bf16.mxu0 0
  %42 = vmatpush1.bf16.msra.mxu0 0
  %43 = vmatprep.subr.bf16.mxu0 0
  %44 = vmatpush1.bf16.msra.mxu0 0
  %45 = vmatprep.subr.bf16.mxu0 0
  %46 = vmatpush1.bf16.msra.mxu0 0
  %47 = vmatprep.subr.bf16.mxu0 0
  %48 = vmatpush1.bf16.msra.mxu0 0
  %49 = vmatprep.subr.bf16.mxu0 0
  %50 = vmatpush1.bf16.msra.mxu0 0
  %51 = vmatprep.subr.bf16.mxu0 0
  %52 = vmatpush1.bf16.msra.mxu0 0
  %53 = vmatprep.subr.bf16.mxu0 0
  %54 = vmatpush1.bf16.msra.mxu0 0
  %55 = vmatprep.subr.bf16.mxu0 0
  %56 = vmatpush1.bf16.msra.mxu0 0
  %57 = vmatprep.subr.bf16.mxu0 0
  %58 = vmatpush1.bf16.msra.mxu0 0
  %59 = vmatprep.subr.bf16.mxu0 0
  %60 = vmatpush1.bf16.msra.mxu0 0
  %61 = vmatprep.subr.bf16.mxu0 0
  %62 = vmatpush1.bf16.msra.mxu0 0
  %63 = vmatprep.subr.bf16.mxu0 0
  %64 = vmatpush1.bf16.msra.mxu0 0
  %65 = vmatprep.mubr.bf16.mxu0 0
  %66 = vmatmul.mubr.bf16.gmra.mrb[0].mxu0 %v31
  %v67 = vpop.f32.mrb[0].mxu0
  %v68 = vadd.f32 0.0, %v67
  %v69 = vpop.f32.mrb[0].mxu0
  %v70 = vpop.f32.mrb[0].mxu0
  %v71 = vpop.f32.mrb[0].mxu0
  %72 = vdwg.mxu0
  %v73 = vpack.c.bf16 %v68, %v68
  %vm74 = vcmask 322560
  %75 = vst.msk [vmem:[%s2] sm:$0xf] %vm74, %v73
  // Predicated region
  $region10: #{hybrid_graph_transformer_forward.9} parent=0 // pred_check
    _
  $region11: #{hybrid_graph_transformer_forward.9} parent=0 // pred_check_branch
    %77 = sbr.rel (0) target = $region13
  $region12: #{hybrid_graph_transformer_forward.9} parent=0 // pred_region
    _
  $region13: #{hybrid_graph_transformer_forward.9} parent=0 // pred_fallthru
    _
  // Predicated region
  $region14: #{hybrid_graph_transformer_forward.9} parent=0 // pred_check
    _
  $region15: #{hybrid_graph_transformer_forward.9} parent=0 // pred_check_branch
    %79 = sbr.rel (0) target = $region17
  $region16: #{hybrid_graph_transformer_forward.9} parent=0 // pred_region
    _
  $region17: #{hybrid_graph_transformer_forward.9} parent=0 // pred_fallthru
    _

// kernel: hybrid_graph_transformer_forward.10
$region0: #{hybrid_graph_transformer_forward.10}
  #allocation0 [shape = 'u32[]', space=smem, size = 0x4, offset = 0x4, fixed_abs, tag = 'smem constant byte address 0x4 - core index']
  #allocation1 [shape = 'u32[144,128]{1,0:T(1,128)}', space=vmem, size = 0x12000, scoped, tag = 'internal scratch']
  #allocation2 [shape = 'f32[4,8,1]{2,1,0:T(8,128)}', space=vmem, size = 0x4000, scoped, tag = 'scratch operand']
  #allocation3 [shape = 'f32[4,8,1]{2,1,0:T(8,128)}', space=vmem, size = 0x4000, scoped, tag = 'scratch operand']
  #allocation4 [shape = 'f32[4,8,8]{2,1,0:T(8,128)}', space=vmem, size = 0x4000, scoped, tag = 'scratch operand']
  %s0 = inlined_call_operand.vmem [shape: bf16[4,8,8], index: 0, kind: input, shape index: {}]
  %s1 = inlined_call_operand.vmem [shape: f32[4,1,8], index: 1, kind: input, shape index: {}]
  %s2 = inlined_call_operand.vmem [shape: f32[4,8,1], index: 2, kind: input, shape index: {}]
  %s3 = inlined_call_operand.vmem [shape: s8[8,8], index: 3, kind: input, shape index: {}]
  %s4 = inlined_call_operand.vmem [shape: f32[4,1,8], index: 4, kind: input, shape index: {}]
  %s5 = inlined_call_operand.vmem [shape: bf16[4,8,8], index: 5, kind: output, shape index: {}]
  %s6 = sld [smem:[#allocation0]]
  $region38: #{hybrid_graph_transformer_forward.10} parent=0
    _
  %s8 = ssub.s32 1, %s6
  %s9 = scalar_select 0, %s8, %s6
  // Predicated region
  $region2: #{hybrid_graph_transformer_forward.10} parent=0 // pred_check
    _
  $region3: #{hybrid_graph_transformer_forward.10} parent=0 // pred_check_branch
    %11 = sbr.rel (0) target = $region5
  $region4: #{hybrid_graph_transformer_forward.10} parent=0 // pred_region
    _
  $region5: #{hybrid_graph_transformer_forward.10} parent=0 // pred_fallthru
    _
  // Predicated region
  $region6: #{hybrid_graph_transformer_forward.10} parent=0 // pred_check
    _
  $region7: #{hybrid_graph_transformer_forward.10} parent=0 // pred_check_branch
    %13 = sbr.rel (0) target = $region9
  $region8: #{hybrid_graph_transformer_forward.10} parent=0 // pred_region
    _
  $region9: #{hybrid_graph_transformer_forward.10} parent=0 // pred_fallthru
    _
  // Predicated region
  $region10: #{hybrid_graph_transformer_forward.10} parent=0 // pred_check
    _
  $region11: #{hybrid_graph_transformer_forward.10} parent=0 // pred_check_branch
    %15 = sbr.rel (0) target = $region13
  $region12: #{hybrid_graph_transformer_forward.10} parent=0 // pred_region
    _
  $region13: #{hybrid_graph_transformer_forward.10} parent=0 // pred_fallthru
    _
  // Predicated region
  $region14: #{hybrid_graph_transformer_forward.10} parent=0 // pred_check
    _
  $region15: #{hybrid_graph_transformer_forward.10} parent=0 // pred_check_branch
    %17 = sbr.rel (0) target = $region17
  $region16: #{hybrid_graph_transformer_forward.10} parent=0 // pred_region
    _
  $region17: #{hybrid_graph_transformer_forward.10} parent=0 // pred_fallthru
    _
  // Predicated region
  $region18: #{hybrid_graph_transformer_forward.10} parent=0 // pred_check
    _
  $region19: #{hybrid_graph_transformer_forward.10} parent=0 // pred_check_branch
    %19 = sbr.rel (0) target = $region21
  $region20: #{hybrid_graph_transformer_forward.10} parent=0 // pred_region
    _
  $region21: #{hybrid_graph_transformer_forward.10} parent=0 // pred_fallthru
    _
  %p21 = scmp.eq.s32.totalorder 0, 0
  // Predicated region
  $region22: #{hybrid_graph_transformer_forward.10} parent=0 // pred_check
    %p22 = pneg %p21
  $region23: #{hybrid_graph_transformer_forward.10} parent=0 // pred_check_branch
    %24 = sbr.rel (%p22) target = $region25
  $region24: #{hybrid_graph_transformer_forward.10} parent=0 // pred_region
    %vm25 = vcmask 7168
    %26 = vst.msk [vmem:[#allocation2] sm:$0xff] %vm25, -1e+30
    %27 = vst.msk [vmem:[#allocation2 + $0x8] sm:$0xff] %vm25, -1e+30
    %28 = vst.msk [vmem:[#allocation2 + $0x10] sm:$0xff] %vm25, -1e+30
    %29 = vst.msk [vmem:[#allocation2 + $0x18] sm:$0xff] %vm25, -1e+30
    %30 = vst.msk [vmem:[#allocation3] sm:$0xff] %vm25, 0.0
    %31 = vst.msk [vmem:[#allocation3 + $0x8] sm:$0xff] %vm25, 0.0
    %32 = vst.msk [vmem:[#allocation3 + $0x10] sm:$0xff] %vm25, 0.0
    %33 = vst.msk [vmem:[#allocation3 + $0x18] sm:$0xff] %vm25, 0.0
    %vm34 = vcmask 64512
    %35 = vst.msk [vmem:[#allocation4] sm:$0xff] %vm34, 0.0
    %36 = vst.msk [vmem:[#allocation4 + $0x8] sm:$0xff] %vm34, 0.0
    %37 = vst.msk [vmem:[#allocation4 + $0x10] sm:$0xff] %vm34, 0.0
    %38 = vst.msk [vmem:[#allocation4 + $0x18] sm:$0xff] %vm34, 0.0
  $region25: #{hybrid_graph_transformer_forward.10} parent=0 // pred_fallthru
    _
  %v39 = vld [vmem:[%s2] sm:$0xff]
  %v40 = vld [vmem:[%s2 + $0x8] sm:$0xff]
  %v41 = vld [vmem:[%s2 + $0x10] sm:$0xff]
  %v42 = vld [vmem:[%s2 + $0x18] sm:$0xff]
  %v43 = vld [vmem:[%s1] sm:$0x1]
  %v44 = vld [vmem:[%s1 + $0x1] sm:$0x1]
  %v45 = vld [vmem:[%s1 + $0x2] sm:$0x1]
  %v46 = vld [vmem:[%s1 + $0x3] sm:$0x1]
  %48 = vset.pattern.permute.xlu0 0
  %49 = vperm.xlu0 %48, %v39
  %v50 = vpop.permute.xlu0 %49
  %53 = vset.pattern.permute.xlu0 0
  %54 = vperm.xlu0 %53, %v40
  %v55 = vpop.permute.xlu0 %54
  %58 = vset.pattern.permute.xlu0 0
  %59 = vperm.xlu0 %58, %v41
  %v60 = vpop.permute.xlu0 %59
  %63 = vset.pattern.permute.xlu0 0
  %64 = vperm.xlu0 %63, %v42
  %v65 = vpop.permute.xlu0 %64
  %v71 = vlaneseq
  %v72 = vshrl.u32 %v71, 7
  %v73 = vsub.s32 0, %v72
  %v74 = vrot.slane %v43, %v73
  %v75 = vlaneseq
  %v76 = vshrl.u32 %v75, 7
  %v77 = vsub.s32 0, %v76
  %v78 = vrot.slane %v44, %v77
  %v79 = vlaneseq
  %v80 = vshrl.u32 %v79, 7
  %v81 = vsub.s32 0, %v80
  %v82 = vrot.slane %v45, %v81
  %v83 = vlaneseq
  %v84 = vshrl.u32 %v83, 7
  %v85 = vsub.s32 0, %v84
  %v86 = vrot.slane %v46, %v85
  %v91 = vadd.f32 %v50, %v74
  %v92 = vadd.f32 %v55, %v78
  %v93 = vadd.f32 %v60, %v82
  %v94 = vadd.f32 %v65, %v86
  %vm95 = vcmp.gt.f32.partialorder %v91, 0.0
  %vm96 = vcmp.gt.f32.partialorder %v92, 0.0
  %vm97 = vcmp.gt.f32.partialorder %v93, 0.0
  %vm98 = vcmp.gt.f32.partialorder %v94, 0.0
  %v99 = vmul.f32 %v91, 0.2
  %v100 = vmul.f32 %v92, 0.2
  %v101 = vmul.f32 %v93, 0.2
  %v102 = vmul.f32 %v94, 0.2
  %v103 = vsel %vm95, %v91, %v99
  %v104 = vsel %vm96, %v92, %v100
  %v105 = vsel %vm97, %v93, %v101
  %v106 = vsel %vm98, %v94, %v102
  %v107 = vld [vmem:[%s3] sm:$0x3]
  %v108 = vunpack.c.0.s8 %v107
  %v109 = vcvt.s32.f32 %v108
  %vm110 = vcmp.gt.f32.partialorder %v109, 0.0
  %v111 = vsel %vm110, 1, 0
  %vm112 = vcmp.eq.s32.totalorder %v111, 1
  %v113 = vsel %vm112, %v103, -1e+30
  %v114 = vsel %vm112, %v104, -1e+30
  %v115 = vsel %vm112, %v105, -1e+30
  %v116 = vsel %vm112, %v106, -1e+30
  %v117 = vld [vmem:[#allocation2] sm:$0xff]
  %v118 = vld [vmem:[#allocation2 + $0x8] sm:$0xff]
  %v119 = vld [vmem:[#allocation2 + $0x10] sm:$0xff]
  %v120 = vld [vmem:[#allocation2 + $0x18] sm:$0xff]
  %vm121 = vcmask 64512
  %v122 = vsel %vm121, %v113, -inf
  %123 = vmax.xlane.f32.xlu0 %v122
  %v124 = vpop.xlane.xlu0 %123
  %v125 = vsel %vm121, %v114, -inf
  %126 = vmax.xlane.f32.xlu0 %v125
  %v127 = vpop.xlane.xlu0 %126
  %v128 = vsel %vm121, %v115, -inf
  %129 = vmax.xlane.f32.xlu0 %v128
  %v130 = vpop.xlane.xlu0 %129
  %v131 = vsel %vm121, %v116, -inf
  %132 = vmax.xlane.f32.xlu0 %v131
  %v133 = vpop.xlane.xlu0 %132
  %v134 = vmax.f32 %v117, %v124
  %v135 = vmax.f32 %v118, %v127
  %v136 = vmax.f32 %v119, %v130
  %v137 = vmax.f32 %v120, %v133
  %v138 = vsub.f32 %v117, %v134
  %v139 = vsub.f32 %v118, %v135
  %v140 = vsub.f32 %v119, %v136
  %v141 = vsub.f32 %v120, %v137
  %v142 = vmul.f32 %v138, 1.442695
  %v143 = vpow.pop %v142
  %v144 = vmul.f32 %v139, 1.442695
  %v145 = vpow.pop %v144
  %v146 = vmul.f32 %v140, 1.442695
  %v147 = vpow.pop %v146
  %v148 = vmul.f32 %v141, 1.442695
  %v149 = vpow.pop %v148
  %151 = vset.pattern.permute.xlu0 0
  %152 = vperm.xlu0 %151, %v134
  %v153 = vpop.permute.xlu0 %152
  %156 = vset.pattern.permute.xlu0 0
  %157 = vperm.xlu0 %156, %v135
  %v158 = vpop.permute.xlu0 %157
  %161 = vset.pattern.permute.xlu0 0
  %162 = vperm.xlu0 %161, %v136
  %v163 = vpop.permute.xlu0 %162
  %166 = vset.pattern.permute.xlu0 0
  %167 = vperm.xlu0 %166, %v137
  %v168 = vpop.permute.xlu0 %167
  %v170 = vsub.f32 %v113, %v153
  %v171 = vsub.f32 %v114, %v158
  %v172 = vsub.f32 %v115, %v163
  %v173 = vsub.f32 %v116, %v168
  %v174 = vmul.f32 %v170, 1.442695
  %v175 = vpow.pop %v174
  %v176 = vmul.f32 %v171, 1.442695
  %v177 = vpow.pop %v176
  %v178 = vmul.f32 %v172, 1.442695
  %v179 = vpow.pop %v178
  %v180 = vmul.f32 %v173, 1.442695
  %v181 = vpow.pop %v180
  %v182 = vsel %vm112, %v175, 0.0
  %v183 = vsel %vm112, %v177, 0.0
  %v184 = vsel %vm112, %v179, 0.0
  %v185 = vsel %vm112, %v181, 0.0
  %v186 = vld [vmem:[#allocation3] sm:$0xff]
  %v187 = vld [vmem:[#allocation3 + $0x8] sm:$0xff]
  %v188 = vld [vmem:[#allocation3 + $0x10] sm:$0xff]
  %v189 = vld [vmem:[#allocation3 + $0x18] sm:$0xff]
  %v190 = vmul.f32 %v143, %v186
  %v191 = vmul.f32 %v145, %v187
  %v192 = vmul.f32 %v147, %v188
  %v193 = vmul.f32 %v149, %v189
  %v194 = vsel %vm121, %v182, 0.0
  %195 = vadd.xlane.f32.xlu0 %v194
  %v196 = vpop.xlane.xlu0 %195
  %v197 = vsel %vm121, %v183, 0.0
  %198 = vadd.xlane.f32.xlu0 %v197
  %v199 = vpop.xlane.xlu0 %198
  %v200 = vsel %vm121, %v184, 0.0
  %201 = vadd.xlane.f32.xlu0 %v200
  %v202 = vpop.xlane.xlu0 %201
  %v203 = vsel %vm121, %v185, 0.0
  %204 = vadd.xlane.f32.xlu0 %v203
  %v205 = vpop.xlane.xlu0 %204
  %v206 = vadd.f32 %v190, %v196
  %v207 = vadd.f32 %v191, %v199
  %v208 = vadd.f32 %v192, %v202
  %v209 = vadd.f32 %v193, %v205
  %vm210 = vcmask 7168
  %211 = vst.msk [vmem:[#allocation3] sm:$0xff] %vm210, %v206
  %212 = vst.msk [vmem:[#allocation3 + $0x8] sm:$0xff] %vm210, %v207
  %213 = vst.msk [vmem:[#allocation3 + $0x10] sm:$0xff] %vm210, %v208
  %214 = vst.msk [vmem:[#allocation3 + $0x18] sm:$0xff] %vm210, %v209
  %v215 = vld [vmem:[#allocation4] sm:$0xff]
  %v216 = vld [vmem:[#allocation4 + $0x8] sm:$0xff]
  %v217 = vld [vmem:[#allocation4 + $0x10] sm:$0xff]
  %v218 = vld [vmem:[#allocation4 + $0x18] sm:$0xff]
  %220 = vset.pattern.permute.xlu0 0
  %221 = vperm.xlu0 %220, %v143
  %v222 = vpop.permute.xlu0 %221
  %225 = vset.pattern.permute.xlu0 0
  %226 = vperm.xlu0 %225, %v145
  %v227 = vpop.permute.xlu0 %226
  %230 = vset.pattern.permute.xlu0 0
  %231 = vperm.xlu0 %230, %v147
  %v232 = vpop.permute.xlu0 %231
  %235 = vset.pattern.permute.xlu0 0
  %236 = vperm.xlu0 %235, %v149
  %v237 = vpop.permute.xlu0 %236
  %v239 = vmul.f32 %v222, %v215
  %v240 = vmul.f32 %v227, %v216
  %v241 = vmul.f32 %v232, %v217
  %v242 = vmul.f32 %v237, %v218
  %v243 = vpack.c.bf16 %v182, %v182
  %v244 = vpack.c.bf16 %v183, %v183
  %v245 = vpack.c.bf16 %v184, %v184
  %v246 = vpack.c.bf16 %v185, %v185
  %v247 = vld [vmem:[%s0] sm:$0xf]
  %v248 = vld [vmem:[%s0 + $0x4] sm:$0xf]
  %v249 = vld [vmem:[%s0 + $0x8] sm:$0xf]
  %v250 = vld [vmem:[%s0 + $0xc] sm:$0xf]
  %v252 = vsel %vm121, %v243, 0
  %vm254 = vcmask 1043456
  %v256 = vsel %vm254, %v247, 0
  %258 = vmatprep.subr.bf16.mxu0 0
  %259 = vmatpush1.bf16.msra.mxu0 %v256
  %260 = vmatprep.subr.bf16.mxu0 0
  %261 = vmatpush1.bf16.msra.mxu0 0
  %262 = vmatprep.subr.bf16.mxu0 0
  %263 = vmatpush1.bf16.msra.mxu0 0
  %264 = vmatprep.subr.bf16.mxu0 0
  %265 = vmatpush1.bf16.msra.mxu0 0
  %266 = vmatprep.subr.bf16.mxu0 0
  %267 = vmatpush1.bf16.msra.mxu0 0
  %268 = vmatprep.subr.bf16.mxu0 0
  %269 = vmatpush1.bf16.msra.mxu0 0
  %270 = vmatprep.subr.bf16.mxu0 0
  %271 = vmatpush1.bf16.msra.mxu0 0
  %272 = vmatprep.subr.bf16.mxu0 0
  %273 = vmatpush1.bf16.msra.mxu0 0
  %274 = vmatprep.subr.bf16.mxu0 0
  %275 = vmatpush1.bf16.msra.mxu0 0
  %276 = vmatprep.subr.bf16.mxu0 0
  %277 = vmatpush1.bf16.msra.mxu0 0
  %278 = vmatprep.subr.bf16.mxu0 0
  %279 = vmatpush1.bf16.msra.mxu0 0
  %280 = vmatprep.subr.bf16.mxu0 0
  %281 = vmatpush1.bf16.msra.mxu0 0
  %282 = vmatprep.subr.bf16.mxu0 0
  %283 = vmatpush1.bf16.msra.mxu0 0
  %284 = vmatprep.subr.bf16.mxu0 0
  %285 = vmatpush1.bf16.msra.mxu0 0
  %286 = vmatprep.subr.bf16.mxu0 0
  %287 = vmatpush1.bf16.msra.mxu0 0
  %288 = vmatprep.subr.bf16.mxu0 0
  %289 = vmatpush1.bf16.msra.mxu0 0
  %290 = vmatprep.mubr.bf16.mxu0 0
  %291 = vmatmul.mubr.bf16.gmra.mrb[0].mxu0 %v252
  %v292 = vpop.f32.mrb[0].mxu0
  %v293 = vadd.f32 0.0, %v292
  %v294 = vpop.f32.mrb[0].mxu0
  %v295 = vpop.f32.mrb[0].mxu0
  %v296 = vpop.f32.mrb[0].mxu0
  %297 = vdwg.mxu0
  %v299 = vsel %vm121, %v244, 0
  %v302 = vsel %vm254, %v248, 0
  %304 = vmatprep.subr.bf16.mxu0 0
  %305 = vmatpush1.bf16.msra.mxu0 %v302
  %306 = vmatprep.subr.bf16.mxu0 0
  %307 = vmatpush1.bf16.msra.mxu0 0
  %308 = vmatprep.subr.bf16.mxu0 0
  %309 = vmatpush1.bf16.msra.mxu0 0
  %310 = vmatprep.subr.bf16.mxu0 0
  %311 = vmatpush1.bf16.msra.mxu0 0
  %312 = vmatprep.subr.bf16.mxu0 0
  %313 = vmatpush1.bf16.msra.mxu0 0
  %314 = vmatprep.subr.bf16.mxu0 0
  %315 = vmatpush1.bf16.msra.mxu0 0
  %316 = vmatprep.subr.bf16.mxu0 0
  %317 = vmatpush1.bf16.msra.mxu0 0
  %318 = vmatprep.subr.bf16.mxu0 0
  %319 = vmatpush1.bf16.msra.mxu0 0
  %320 = vmatprep.subr.bf16.mxu0 0
  %321 = vmatpush1.bf16.msra.mxu0 0
  %322 = vmatprep.subr.bf16.mxu0 0
  %323 = vmatpush1.bf16.msra.mxu0 0
  %324 = vmatprep.subr.bf16.mxu0 0
  %325 = vmatpush1.bf16.msra.mxu0 0
  %326 = vmatprep.subr.bf16.mxu0 0
  %327 = vmatpush1.bf16.msra.mxu0 0
  %328 = vmatprep.subr.bf16.mxu0 0
  %329 = vmatpush1.bf16.msra.mxu0 0
  %330 = vmatprep.subr.bf16.mxu0 0
  %331 = vmatpush1.bf16.msra.mxu0 0
  %332 = vmatprep.subr.bf16.mxu0 0
  %333 = vmatpush1.bf16.msra.mxu0 0
  %334 = vmatprep.subr.bf16.mxu0 0
  %335 = vmatpush1.bf16.msra.mxu0 0
  %336 = vmatprep.mubr.bf16.mxu0 0
  %337 = vmatmul.mubr.bf16.gmra.mrb[0].mxu0 %v299
  %v338 = vpop.f32.mrb[0].mxu0
  %v339 = vadd.f32 0.0, %v338
  %v340 = vpop.f32.mrb[0].mxu0
  %v341 = vpop.f32.mrb[0].mxu0
  %v342 = vpop.f32.mrb[0].mxu0
  %343 = vdwg.mxu0
  %v345 = vsel %vm121, %v245, 0
  %v348 = vsel %vm254, %v249, 0
  %350 = vmatprep.subr.bf16.mxu0 0
  %351 = vmatpush1.bf16.msra.mxu0 %v348
  %352 = vmatprep.subr.bf16.mxu0 0
  %353 = vmatpush1.bf16.msra.mxu0 0
  %354 = vmatprep.subr.bf16.mxu0 0
  %355 = vmatpush1.bf16.msra.mxu0 0
  %356 = vmatprep.subr.bf16.mxu0 0
  %357 = vmatpush1.bf16.msra.mxu0 0
  %358 = vmatprep.subr.bf16.mxu0 0
  %359 = vmatpush1.bf16.msra.mxu0 0
  %360 = vmatprep.subr.bf16.mxu0 0
  %361 = vmatpush1.bf16.msra.mxu0 0
  %362 = vmatprep.subr.bf16.mxu0 0
  %363 = vmatpush1.bf16.msra.mxu0 0
  %364 = vmatprep.subr.bf16.mxu0 0
  %365 = vmatpush1.bf16.msra.mxu0 0
  %366 = vmatprep.subr.bf16.mxu0 0
  %367 = vmatpush1.bf16.msra.mxu0 0
  %368 = vmatprep.subr.bf16.mxu0 0
  %369 = vmatpush1.bf16.msra.mxu0 0
  %370 = vmatprep.subr.bf16.mxu0 0
  %371 = vmatpush1.bf16.msra.mxu0 0
  %372 = vmatprep.subr.bf16.mxu0 0
  %373 = vmatpush1.bf16.msra.mxu0 0
  %374 = vmatprep.subr.bf16.mxu0 0
  %375 = vmatpush1.bf16.msra.mxu0 0
  %376 = vmatprep.subr.bf16.mxu0 0
  %377 = vmatpush1.bf16.msra.mxu0 0
  %378 = vmatprep.subr.bf16.mxu0 0
  %379 = vmatpush1.bf16.msra.mxu0 0
  %380 = vmatprep.subr.bf16.mxu0 0
  %381 = vmatpush1.bf16.msra.mxu0 0
  %382 = vmatprep.mubr.bf16.mxu0 0
  %383 = vmatmul.mubr.bf16.gmra.mrb[0].mxu0 %v345
  %v384 = vpop.f32.mrb[0].mxu0
  %v385 = vadd.f32 0.0, %v384
  %v386 = vpop.f32.mrb[0].mxu0
  %v387 = vpop.f32.mrb[0].mxu0
  %v388 = vpop.f32.mrb[0].mxu0
  %389 = vdwg.mxu0
  %v391 = vsel %vm121, %v246, 0
  %v394 = vsel %vm254, %v250, 0
  %396 = vmatprep.subr.bf16.mxu0 0
  %397 = vmatpush1.bf16.msra.mxu0 %v394
  %398 = vmatprep.subr.bf16.mxu0 0
  %399 = vmatpush1.bf16.msra.mxu0 0
  %400 = vmatprep.subr.bf16.mxu0 0
  %401 = vmatpush1.bf16.msra.mxu0 0
  %402 = vmatprep.subr.bf16.mxu0 0
  %403 = vmatpush1.bf16.msra.mxu0 0
  %404 = vmatprep.subr.bf16.mxu0 0
  %405 = vmatpush1.bf16.msra.mxu0 0
  %406 = vmatprep.subr.bf16.mxu0 0
  %407 = vmatpush1.bf16.msra.mxu0 0
  %408 = vmatprep.subr.bf16.mxu0 0
  %409 = vmatpush1.bf16.msra.mxu0 0
  %410 = vmatprep.subr.bf16.mxu0 0
  %411 = vmatpush1.bf16.msra.mxu0 0
  %412 = vmatprep.subr.bf16.mxu0 0
  %413 = vmatpush1.bf16.msra.mxu0 0
  %414 = vmatprep.subr.bf16.mxu0 0
  %415 = vmatpush1.bf16.msra.mxu0 0
  %416 = vmatprep.subr.bf16.mxu0 0
  %417 = vmatpush1.bf16.msra.mxu0 0
  %418 = vmatprep.subr.bf16.mxu0 0
  %419 = vmatpush1.bf16.msra.mxu0 0
  %420 = vmatprep.subr.bf16.mxu0 0
  %421 = vmatpush1.bf16.msra.mxu0 0
  %422 = vmatprep.subr.bf16.mxu0 0
  %423 = vmatpush1.bf16.msra.mxu0 0
  %424 = vmatprep.subr.bf16.mxu0 0
  %425 = vmatpush1.bf16.msra.mxu0 0
  %426 = vmatprep.subr.bf16.mxu0 0
  %427 = vmatpush1.bf16.msra.mxu0 0
  %428 = vmatprep.mubr.bf16.mxu0 0
  %429 = vmatmul.mubr.bf16.gmra.mrb[0].mxu0 %v391
  %v430 = vpop.f32.mrb[0].mxu0
  %v431 = vadd.f32 0.0, %v430
  %v432 = vpop.f32.mrb[0].mxu0
  %v433 = vpop.f32.mrb[0].mxu0
  %v434 = vpop.f32.mrb[0].mxu0
  %435 = vdwg.mxu0
  %v436 = vadd.f32 %v239, %v293
  %v437 = vadd.f32 %v240, %v339
  %v438 = vadd.f32 %v241, %v385
  %v439 = vadd.f32 %v242, %v431
  %440 = vst.msk [vmem:[#allocation4] sm:$0xff] %vm121, %v436
  %441 = vst.msk [vmem:[#allocation4 + $0x8] sm:$0xff] %vm121, %v437
  %442 = vst.msk [vmem:[#allocation4 + $0x10] sm:$0xff] %vm121, %v438
  %443 = vst.msk [vmem:[#allocation4 + $0x18] sm:$0xff] %vm121, %v439
  %444 = vst.msk [vmem:[#allocation2] sm:$0xff] %vm210, %v134
  %445 = vst.msk [vmem:[#allocation2 + $0x8] sm:$0xff] %vm210, %v135
  %446 = vst.msk [vmem:[#allocation2 + $0x10] sm:$0xff] %vm210, %v136
  %447 = vst.msk [vmem:[#allocation2 + $0x18] sm:$0xff] %vm210, %v137
  // Predicated region
  $region26: #{hybrid_graph_transformer_forward.10} parent=0 // pred_check
    %p448 = pneg %p21
  $region27: #{hybrid_graph_transformer_forward.10} parent=0 // pred_check_branch
    %450 = sbr.rel (%p448) target = $region29
  $region28: #{hybrid_graph_transformer_forward.10} parent=0 // pred_region
    %v451 = vld [vmem:[#allocation4] sm:$0xff]
    %v452 = vld [vmem:[#allocation4 + $0x8] sm:$0xff]
    %v453 = vld [vmem:[#allocation4 + $0x10] sm:$0xff]
    %v454 = vld [vmem:[#allocation4 + $0x18] sm:$0xff]
    %v455 = vld [vmem:[#allocation3] sm:$0xff]
    %v456 = vld [vmem:[#allocation3 + $0x8] sm:$0xff]
    %v457 = vld [vmem:[#allocation3 + $0x10] sm:$0xff]
    %v458 = vld [vmem:[#allocation3 + $0x18] sm:$0xff]
    %460 = vset.pattern.permute.xlu0 0
    %461 = vperm.xlu0 %460, %v455
    %v462 = vpop.permute.xlu0 %461
    %465 = vset.pattern.permute.xlu0 0
    %466 = vperm.xlu0 %465, %v456
    %v467 = vpop.permute.xlu0 %466
    %470 = vset.pattern.permute.xlu0 0
    %471 = vperm.xlu0 %470, %v457
    %v472 = vpop.permute.xlu0 %471
    %475 = vset.pattern.permute.xlu0 0
    %476 = vperm.xlu0 %475, %v458
    %v477 = vpop.permute.xlu0 %476
    %v479 = vrcp.pop %v462
    %v480 = vmul.f32 %v451, %v479
    %v481 = vrcp.pop %v467
    %v482 = vmul.f32 %v452, %v481
    %v483 = vrcp.pop %v472
    %v484 = vmul.f32 %v453, %v483
    %v485 = vrcp.pop %v477
    %v486 = vmul.f32 %v454, %v485
    %v487 = vld [vmem:[%s4] sm:$0x1]
    %v488 = vld [vmem:[%s4 + $0x1] sm:$0x1]
    %v489 = vld [vmem:[%s4 + $0x2] sm:$0x1]
    %v490 = vld [vmem:[%s4 + $0x3] sm:$0x1]
    %v495 = vlaneseq
    %v496 = vshrl.u32 %v495, 7
    %v497 = vsub.s32 0, %v496
    %v498 = vrot.slane %v487, %v497
    %v499 = vlaneseq
    %v500 = vshrl.u32 %v499, 7
    %v501 = vsub.s32 0, %v500
    %v502 = vrot.slane %v488, %v501
    %v503 = vlaneseq
    %v504 = vshrl.u32 %v503, 7
    %v505 = vsub.s32 0, %v504
    %v506 = vrot.slane %v489, %v505
    %v507 = vlaneseq
    %v508 = vshrl.u32 %v507, 7
    %v509 = vsub.s32 0, %v508
    %v510 = vrot.slane %v490, %v509
    %v515 = vadd.f32 %v480, %v498
    %v516 = vadd.f32 %v482, %v502
    %v517 = vadd.f32 %v484, %v506
    %v518 = vadd.f32 %v486, %v510
    %v519 = vmax.f32 %v515, 0.0
    %v520 = vmax.f32 %v516, 0.0
    %v521 = vmax.f32 %v517, 0.0
    %v522 = vmax.f32 %v518, 0.0
    %v523 = vpack.c.bf16 %v519, %v519
    %v524 = vpack.c.bf16 %v520, %v520
    %v525 = vpack.c.bf16 %v521, %v521
    %v526 = vpack.c.bf16 %v522, %v522
    %vm527 = vcmask 60416
    %528 = vst.msk [vmem:[%s5] sm:$0xf] %vm527, %v523
    %529 = vst.msk [vmem:[%s5 + $0x4] sm:$0xf] %vm527, %v524
    %530 = vst.msk [vmem:[%s5 + $0x8] sm:$0xf] %vm527, %v525
    %531 = vst.msk [vmem:[%s5 + $0xc] sm:$0xf] %vm527, %v526
  $region29: #{hybrid_graph_transformer_forward.10} parent=0 // pred_fallthru
    _
  // Predicated region
  $region30: #{hybrid_graph_transformer_forward.10} parent=0 // pred_check
    _
  $region31: #{hybrid_graph_transformer_forward.10} parent=0 // pred_check_branch
    %533 = sbr.rel (0) target = $region33
  $region32: #{hybrid_graph_transformer_forward.10} parent=0 // pred_region
    _
  $region33: #{hybrid_graph_transformer_forward.10} parent=0 // pred_fallthru
    _
  // Predicated region
  $region34: #{hybrid_graph_transformer_forward.10} parent=0 // pred_check
    _
  $region35: #{hybrid_graph_transformer_forward.10} parent=0 // pred_check_branch
    %535 = sbr.rel (0) target = $region37
  $region36: #{hybrid_graph_transformer_forward.10} parent=0 // pred_region
    _
  $region37: #{hybrid_graph_transformer_forward.10} parent=0 // pred_fallthru
    _

// kernel: hybrid_graph_transformer_forward.11
$region0: #{hybrid_graph_transformer_forward.11}
  #allocation0 [shape = 'u32[]', space=smem, size = 0x4, offset = 0x4, fixed_abs, tag = 'smem constant byte address 0x4 - core index']
  #allocation1 [shape = 'u32[144,128]{1,0:T(1,128)}', space=vmem, size = 0x12000, scoped, tag = 'internal scratch']
  %s0 = inlined_call_operand.vmem [shape: bf16[8,32], index: 0, kind: input, shape index: {}]
  %s1 = inlined_call_operand.vmem [shape: bf16[32,32], index: 1, kind: input, shape index: {}]
  %s2 = inlined_call_operand.vmem [shape: bf16[8,32], index: 2, kind: output, shape index: {}]
  %s3 = sld [smem:[#allocation0]]
  $region18: #{hybrid_graph_transformer_forward.11} parent=0
    _
  %s5 = ssub.s32 1, %s3
  %s6 = scalar_select 0, %s5, %s3
  // Predicated region
  $region2: #{hybrid_graph_transformer_forward.11} parent=0 // pred_check
    _
  $region3: #{hybrid_graph_transformer_forward.11} parent=0 // pred_check_branch
    %8 = sbr.rel (0) target = $region5
  $region4: #{hybrid_graph_transformer_forward.11} parent=0 // pred_region
    _
  $region5: #{hybrid_graph_transformer_forward.11} parent=0 // pred_fallthru
    _
  // Predicated region
  $region6: #{hybrid_graph_transformer_forward.11} parent=0 // pred_check
    _
  $region7: #{hybrid_graph_transformer_forward.11} parent=0 // pred_check_branch
    %10 = sbr.rel (0) target = $region9
  $region8: #{hybrid_graph_transformer_forward.11} parent=0 // pred_region
    _
  $region9: #{hybrid_graph_transformer_forward.11} parent=0 // pred_fallthru
    _
  %v12 = vld [vmem:[%s0] sm:$0xf]
  %v13 = vld [vmem:[%s1] sm:$0xf]
  %v14 = vld [vmem:[%s1 + $0x4] sm:$0xf]
  %v15 = vld [vmem:[%s1 + $0x8] sm:$0xf]
  %v16 = vld [vmem:[%s1 + $0xc] sm:$0xf]
  %v21 = vunpack.c.l.b16 %v13
  %v22 = vunpack.c.l.b16 %v14
  %v23 = vunpack.c.l.b16 %v15
  %v24 = vunpack.c.l.b16 %v16
  %v25 = vpack.c.b16 %v22, %v21
  %v26 = vpack.c.b16 %v24, %v23
  %vm29 = vcmask 261120
  %v31 = vsel %vm29, %v12, 0
  %33 = vmatprep.subr.bf16.mxu0 0
  %34 = vmatpush1.bf16.msra.mxu0 %v25
  %35 = vmatprep.subr.bf16.mxu0 0
  %36 = vmatpush1.bf16.msra.mxu0 %v26
  %37 = vmatprep.subr.bf16.mxu0 0
  %38 = vmatpush1.bf16.msra.mxu0 0
  %39 = vmatprep.subr.bf16.mxu0 0
  %40 = vmatpush1.bf16.msra.mxu0 0
  %41 = vmatprep.subr.bf16.mxu0 0
  %42 = vmatpush1.bf16.msra.mxu0 0
  %43 = vmatprep.subr.bf16.mxu0 0
  %44 = vmatpush1.bf16.msra.mxu0 0
  %45 = vmatprep.subr.bf16.mxu0 0
  %46 = vmatpush1.bf16.msra.mxu0 0
  %47 = vmatprep.subr.bf16.mxu0 0
  %48 = vmatpush1.bf16.msra.mxu0 0
  %49 = vmatprep.subr.bf16.mxu0 0
  %50 = vmatpush1.bf16.msra.mxu0 0
  %51 = vmatprep.subr.bf16.mxu0 0
  %52 = vmatpush1.bf16.msra.mxu0 0
  %53 = vmatprep.subr.bf16.mxu0 0
  %54 = vmatpush1.bf16.msra.mxu0 0
  %55 = vmatprep.subr.bf16.mxu0 0
  %56 = vmatpush1.bf16.msra.mxu0 0
  %57 = vmatprep.subr.bf16.mxu0 0
  %58 = vmatpush1.bf16.msra.mxu0 0
  %59 = vmatprep.subr.bf16.mxu0 0
  %60 = vmatpush1.bf16.msra.mxu0 0
  %61 = vmatprep.subr.bf16.mxu0 0
  %62 = vmatpush1.bf16.msra.mxu0 0
  %63 = vmatprep.subr.bf16.mxu0 0
  %64 = vmatpush1.bf16.msra.mxu0 0
  %65 = vmatprep.mubr.bf16.mxu0 0
  %66 = vmatmul.mubr.bf16.gmra.mrb[0].mxu0 %v31
  %v67 = vpop.f32.mrb[0].mxu0
  %v68 = vadd.f32 0.0, %v67
  %v69 = vpop.f32.mrb[0].mxu0
  %v70 = vpop.f32.mrb[0].mxu0
  %v71 = vpop.f32.mrb[0].mxu0
  %72 = vdwg.mxu0
  %v73 = vpack.c.bf16 %v68, %v68
  %vm74 = vcmask 257024
  %75 = vst.msk [vmem:[%s2] sm:$0xf] %vm74, %v73
  // Predicated region
  $region10: #{hybrid_graph_transformer_forward.11} parent=0 // pred_check
    _
  $region11: #{hybrid_graph_transformer_forward.11} parent=0 // pred_check_branch
    %77 = sbr.rel (0) target = $region13
  $region12: #{hybrid_graph_transformer_forward.11} parent=0 // pred_region
    _
  $region13: #{hybrid_graph_transformer_forward.11} parent=0 // pred_fallthru
    _
  // Predicated region
  $region14: #{hybrid_graph_transformer_forward.11} parent=0 // pred_check
    _
  $region15: #{hybrid_graph_transformer_forward.11} parent=0 // pred_check_branch
    %79 = sbr.rel (0) target = $region17
  $region16: #{hybrid_graph_transformer_forward.11} parent=0 // pred_region
    _
  $region17: #{hybrid_graph_transformer_forward.11} parent=0 // pred_fallthru
    _

// kernel: hybrid_graph_transformer_forward.13
$region0: #{hybrid_graph_transformer_forward.13}
  #allocation0 [shape = 'u32[]', space=smem, size = 0x4, offset = 0x4, fixed_abs, tag = 'smem constant byte address 0x4 - core index']
  #allocation1 [shape = 'u32[144,128]{1,0:T(1,128)}', space=vmem, size = 0x12000, scoped, tag = 'internal scratch']
  %s0 = inlined_call_operand.vmem [shape: bf16[8,32], index: 0, kind: input, shape index: {}]
  %s1 = inlined_call_operand.vmem [shape: bf16[8,32], index: 1, kind: input, shape index: {}]
  %s2 = inlined_call_operand.vmem [shape: bf16[32,32], index: 2, kind: input, shape index: {}]
  %s3 = inlined_call_operand.vmem [shape: bf16[32,32], index: 3, kind: input, shape index: {}]
  %s4 = inlined_call_operand.vmem [shape: f32[1,32], index: 4, kind: input, shape index: {}]
  %s5 = inlined_call_operand.vmem [shape: bf16[8,32], index: 5, kind: output, shape index: {}]
  %s6 = sld [smem:[#allocation0]]
  $region30: #{hybrid_graph_transformer_forward.13} parent=0
    _
  %s8 = ssub.s32 1, %s6
  %s9 = scalar_select 0, %s8, %s6
  // Predicated region
  $region2: #{hybrid_graph_transformer_forward.13} parent=0 // pred_check
    _
  $region3: #{hybrid_graph_transformer_forward.13} parent=0 // pred_check_branch
    %11 = sbr.rel (0) target = $region5
  $region4: #{hybrid_graph_transformer_forward.13} parent=0 // pred_region
    _
  $region5: #{hybrid_graph_transformer_forward.13} parent=0 // pred_fallthru
    _
  // Predicated region
  $region6: #{hybrid_graph_transformer_forward.13} parent=0 // pred_check
    _
  $region7: #{hybrid_graph_transformer_forward.13} parent=0 // pred_check_branch
    %13 = sbr.rel (0) target = $region9
  $region8: #{hybrid_graph_transformer_forward.13} parent=0 // pred_region
    _
  $region9: #{hybrid_graph_transformer_forward.13} parent=0 // pred_fallthru
    _
  // Predicated region
  $region10: #{hybrid_graph_transformer_forward.13} parent=0 // pred_check
    _
  $region11: #{hybrid_graph_transformer_forward.13} parent=0 // pred_check_branch
    %15 = sbr.rel (0) target = $region13
  $region12: #{hybrid_graph_transformer_forward.13} parent=0 // pred_region
    _
  $region13: #{hybrid_graph_transformer_forward.13} parent=0 // pred_fallthru
    _
  // Predicated region
  $region14: #{hybrid_graph_transformer_forward.13} parent=0 // pred_check
    _
  $region15: #{hybrid_graph_transformer_forward.13} parent=0 // pred_check_branch
    %17 = sbr.rel (0) target = $region17
  $region16: #{hybrid_graph_transformer_forward.13} parent=0 // pred_region
    _
  $region17: #{hybrid_graph_transformer_forward.13} parent=0 // pred_fallthru
    _
  // Predicated region
  $region18: #{hybrid_graph_transformer_forward.13} parent=0 // pred_check
    _
  $region19: #{hybrid_graph_transformer_forward.13} parent=0 // pred_check_branch
    %19 = sbr.rel (0) target = $region21
  $region20: #{hybrid_graph_transformer_forward.13} parent=0 // pred_region
    _
  $region21: #{hybrid_graph_transformer_forward.13} parent=0 // pred_fallthru
    _
  %v21 = vld [vmem:[%s0] sm:$0xf]
  %v22 = vld [vmem:[%s2] sm:$0xf]
  %v23 = vld [vmem:[%s2 + $0x4] sm:$0xf]
  %v24 = vld [vmem:[%s2 + $0x8] sm:$0xf]
  %v25 = vld [vmem:[%s2 + $0xc] sm:$0xf]
  %v26 = vld [vmem:[%s1] sm:$0xf]
  %v27 = vld [vmem:[%s3] sm:$0xf]
  %v28 = vld [vmem:[%s3 + $0x4] sm:$0xf]
  %v29 = vld [vmem:[%s3 + $0x8] sm:$0xf]
  %v30 = vld [vmem:[%s3 + $0xc] sm:$0xf]
  %v35 = vunpack.c.l.b16 %v27
  %v36 = vunpack.c.l.b16 %v28
  %v37 = vunpack.c.l.b16 %v29
  %v38 = vunpack.c.l.b16 %v30
  %v39 = vpack.c.b16 %v36, %v35
  %v40 = vpack.c.b16 %v38, %v37
  %vm43 = vcmask 261120
  %v45 = vsel %vm43, %v26, 0
  %47 = vmatprep.subr.bf16.mxu0 0
  %48 = vmatpush1.bf16.msra.mxu0 %v39
  %49 = vmatprep.subr.bf16.mxu0 0
  %50 = vmatpush1.bf16.msra.mxu0 %v40
  %51 = vmatprep.subr.bf16.mxu0 0
  %52 = vmatpush1.bf16.msra.mxu0 0
  %53 = vmatprep.subr.bf16.mxu0 0
  %54 = vmatpush1.bf16.msra.mxu0 0
  %55 = vmatprep.subr.bf16.mxu0 0
  %56 = vmatpush1.bf16.msra.mxu0 0
  %57 = vmatprep.subr.bf16.mxu0 0
  %58 = vmatpush1.bf16.msra.mxu0 0
  %59 = vmatprep.subr.bf16.mxu0 0
  %60 = vmatpush1.bf16.msra.mxu0 0
  %61 = vmatprep.subr.bf16.mxu0 0
  %62 = vmatpush1.bf16.msra.mxu0 0
  %63 = vmatprep.subr.bf16.mxu0 0
  %64 = vmatpush1.bf16.msra.mxu0 0
  %65 = vmatprep.subr.bf16.mxu0 0
  %66 = vmatpush1.bf16.msra.mxu0 0
  %67 = vmatprep.subr.bf16.mxu0 0
  %68 = vmatpush1.bf16.msra.mxu0 0
  %69 = vmatprep.subr.bf16.mxu0 0
  %70 = vmatpush1.bf16.msra.mxu0 0
  %71 = vmatprep.subr.bf16.mxu0 0
  %72 = vmatpush1.bf16.msra.mxu0 0
  %73 = vmatprep.subr.bf16.mxu0 0
  %74 = vmatpush1.bf16.msra.mxu0 0
  %75 = vmatprep.subr.bf16.mxu0 0
  %76 = vmatpush1.bf16.msra.mxu0 0
  %77 = vmatprep.subr.bf16.mxu0 0
  %78 = vmatpush1.bf16.msra.mxu0 0
  %79 = vmatprep.mubr.bf16.mxu0 0
  %80 = vmatmul.mubr.bf16.gmra.mrb[0].mxu0 %v45
  %v81 = vpop.f32.mrb[0].mxu0
  %v82 = vadd.f32 0.0, %v81
  %v83 = vpop.f32.mrb[0].mxu0
  %v84 = vpop.f32.mrb[0].mxu0
  %v85 = vpop.f32.mrb[0].mxu0
  %86 = vdwg.mxu0
  %v91 = vunpack.c.l.b16 %v22
  %v92 = vunpack.c.l.b16 %v23
  %v93 = vunpack.c.l.b16 %v24
  %v94 = vunpack.c.l.b16 %v25
  %v95 = vpack.c.b16 %v92, %v91
  %v96 = vpack.c.b16 %v94, %v93
  %v100 = vsel %vm43, %v21, 0
  %102 = vmatprep.subr.bf16.mxu0 0
  %103 = vmatpush1.bf16.msra.mxu0 %v95
  %104 = vmatprep.subr.bf16.mxu0 0
  %105 = vmatpush1.bf16.msra.mxu0 %v96
  %106 = vmatprep.subr.bf16.mxu0 0
  %107 = vmatpush1.bf16.msra.mxu0 0
  %108 = vmatprep.subr.bf16.mxu0 0
  %109 = vmatpush1.bf16.msra.mxu0 0
  %110 = vmatprep.subr.bf16.mxu0 0
  %111 = vmatpush1.bf16.msra.mxu0 0
  %112 = vmatprep.subr.bf16.mxu0 0
  %113 = vmatpush1.bf16.msra.mxu0 0
  %114 = vmatprep.subr.bf16.mxu0 0
  %115 = vmatpush1.bf16.msra.mxu0 0
  %116 = vmatprep.subr.bf16.mxu0 0
  %117 = vmatpush1.bf16.msra.mxu0 0
  %118 = vmatprep.subr.bf16.mxu0 0
  %119 = vmatpush1.bf16.msra.mxu0 0
  %120 = vmatprep.subr.bf16.mxu0 0
  %121 = vmatpush1.bf16.msra.mxu0 0
  %122 = vmatprep.subr.bf16.mxu0 0
  %123 = vmatpush1.bf16.msra.mxu0 0
  %124 = vmatprep.subr.bf16.mxu0 0
  %125 = vmatpush1.bf16.msra.mxu0 0
  %126 = vmatprep.subr.bf16.mxu0 0
  %127 = vmatpush1.bf16.msra.mxu0 0
  %128 = vmatprep.subr.bf16.mxu0 0
  %129 = vmatpush1.bf16.msra.mxu0 0
  %130 = vmatprep.subr.bf16.mxu0 0
  %131 = vmatpush1.bf16.msra.mxu0 0
  %132 = vmatprep.subr.bf16.mxu0 0
  %133 = vmatpush1.bf16.msra.mxu0 0
  %134 = vmatprep.mubr.bf16.mxu0 0
  %135 = vmatmul.mubr.bf16.gmra.mrb[0].mxu0 %v100
  %v136 = vpop.f32.mrb[0].mxu0
  %v137 = vadd.f32 %v82, %v136
  %v138 = vpop.f32.mrb[0].mxu0
  %v139 = vpop.f32.mrb[0].mxu0
  %v140 = vpop.f32.mrb[0].mxu0
  %141 = vdwg.mxu0
  %v142 = vld [vmem:[%s4] sm:$0x1]
  %v144 = vlaneseq
  %v145 = vshrl.u32 %v144, 7
  %v146 = vsub.s32 0, %v145
  %v147 = vrot.slane %v142, %v146
  %v149 = vadd.f32 %v137, %v147
  %v150 = vpack.c.bf16 %v149, %v149
  %vm151 = vcmask 257024
  %152 = vst.msk [vmem:[%s5] sm:$0xf] %vm151, %v150
  // Predicated region
  $region22: #{hybrid_graph_transformer_forward.13} parent=0 // pred_check
    _
  $region23: #{hybrid_graph_transformer_forward.13} parent=0 // pred_check_branch
    %154 = sbr.rel (0) target = $region25
  $region24: #{hybrid_graph_transformer_forward.13} parent=0 // pred_region
    _
  $region25: #{hybrid_graph_transformer_forward.13} parent=0 // pred_fallthru
    _
  // Predicated region
  $region26: #{hybrid_graph_transformer_forward.13} parent=0 // pred_check
    _
  $region27: #{hybrid_graph_transformer_forward.13} parent=0 // pred_check_branch
    %156 = sbr.rel (0) target = $region29
  $region28: #{hybrid_graph_transformer_forward.13} parent=0 // pred_region
    _
  $region29: #{hybrid_graph_transformer_forward.13} parent=0 // pred_fallthru
    _

// kernel: hybrid_graph_transformer_forward.12
$region0: #{hybrid_graph_transformer_forward.12}
  #allocation0 [shape = 'u32[]', space=smem, size = 0x4, offset = 0x4, fixed_abs, tag = 'smem constant byte address 0x4 - core index']
  #allocation1 [shape = 'u32[144,128]{1,0:T(1,128)}', space=vmem, size = 0x12000, scoped, tag = 'internal scratch']
  #allocation2 [shape = 'f32[8,32]{1,0:T(8,128)}', space=vmem, size = 0x1000, scoped, tag = 'scratch operand']
  %s0 = inlined_call_operand.vmem [shape: bf16[8,8], index: 0, kind: input, shape index: {}]
  %s1 = inlined_call_operand.vmem [shape: bf16[8,32], index: 1, kind: input, shape index: {}]
  %s2 = inlined_call_operand.vmem [shape: f32[1,32], index: 2, kind: input, shape index: {}]
  %s3 = inlined_call_operand.vmem [shape: bf16[8,32], index: 3, kind: output, shape index: {}]
  %s4 = sld [smem:[#allocation0]]
  $region30: #{hybrid_graph_transformer_forward.12} parent=0
    _
  %s6 = ssub.s32 1, %s4
  %s7 = scalar_select 0, %s6, %s4
  // Predicated region
  $region2: #{hybrid_graph_transformer_forward.12} parent=0 // pred_check
    _
  $region3: #{hybrid_graph_transformer_forward.12} parent=0 // pred_check_branch
    %9 = sbr.rel (0) target = $region5
  $region4: #{hybrid_graph_transformer_forward.12} parent=0 // pred_region
    _
  $region5: #{hybrid_graph_transformer_forward.12} parent=0 // pred_fallthru
    _
  // Predicated region
  $region6: #{hybrid_graph_transformer_forward.12} parent=0 // pred_check
    _
  $region7: #{hybrid_graph_transformer_forward.12} parent=0 // pred_check_branch
    %11 = sbr.rel (0) target = $region9
  $region8: #{hybrid_graph_transformer_forward.12} parent=0 // pred_region
    _
  $region9: #{hybrid_graph_transformer_forward.12} parent=0 // pred_fallthru
    _
  // Predicated region
  $region10: #{hybrid_graph_transformer_forward.12} parent=0 // pred_check
    _
  $region11: #{hybrid_graph_transformer_forward.12} parent=0 // pred_check_branch
    %13 = sbr.rel (0) target = $region13
  $region12: #{hybrid_graph_transformer_forward.12} parent=0 // pred_region
    _
  $region13: #{hybrid_graph_transformer_forward.12} parent=0 // pred_fallthru
    _
  %p15 = scmp.eq.s32.totalorder 0, 0
  // Predicated region
  $region14: #{hybrid_graph_transformer_forward.12} parent=0 // pred_check
    %p16 = pneg %p15
  $region15: #{hybrid_graph_transformer_forward.12} parent=0 // pred_check_branch
    %18 = sbr.rel (%p16) target = $region17
  $region16: #{hybrid_graph_transformer_forward.12} parent=0 // pred_region
    %vm19 = vcmask 261120
    %20 = vst.msk [vmem:[#allocation2] sm:$0xff] %vm19, 0.0
  $region17: #{hybrid_graph_transformer_forward.12} parent=0 // pred_fallthru
    _
  %v21 = vld [vmem:[#allocation2] sm:$0xff]
  %v22 = vld [vmem:[%s0] sm:$0xf]
  %v23 = vld [vmem:[%s1] sm:$0xf]
  %vm24 = vcmask 64512
  %v26 = vsel %vm24, %v22, 0
  %vm28 = vcmask 1043456
  %v30 = vsel %vm28, %v23, 0
  %32 = vmatprep.subr.bf16.mxu0 0
  %33 = vmatpush1.bf16.msra.mxu0 %v30
  %34 = vmatprep.subr.bf16.mxu0 0
  %35 = vmatpush1.bf16.msra.mxu0 0
  %36 = vmatprep.subr.bf16.mxu0 0
  %37 = vmatpush1.bf16.msra.mxu0 0
  %38 = vmatprep.subr.bf16.mxu0 0
  %39 = vmatpush1.bf16.msra.mxu0 0
  %40 = vmatprep.subr.bf16.mxu0 0
  %41 = vmatpush1.bf16.msra.mxu0 0
  %42 = vmatprep.subr.bf16.mxu0 0
  %43 = vmatpush1.bf16.msra.mxu0 0
  %44 = vmatprep.subr.bf16.mxu0 0
  %45 = vmatpush1.bf16.msra.mxu0 0
  %46 = vmatprep.subr.bf16.mxu0 0
  %47 = vmatpush1.bf16.msra.mxu0 0
  %48 = vmatprep.subr.bf16.mxu0 0
  %49 = vmatpush1.bf16.msra.mxu0 0
  %50 = vmatprep.subr.bf16.mxu0 0
  %51 = vmatpush1.bf16.msra.mxu0 0
  %52 = vmatprep.subr.bf16.mxu0 0
  %53 = vmatpush1.bf16.msra.mxu0 0
  %54 = vmatprep.subr.bf16.mxu0 0
  %55 = vmatpush1.bf16.msra.mxu0 0
  %56 = vmatprep.subr.bf16.mxu0 0
  %57 = vmatpush1.bf16.msra.mxu0 0
  %58 = vmatprep.subr.bf16.mxu0 0
  %59 = vmatpush1.bf16.msra.mxu0 0
  %60 = vmatprep.subr.bf16.mxu0 0
  %61 = vmatpush1.bf16.msra.mxu0 0
  %62 = vmatprep.subr.bf16.mxu0 0
  %63 = vmatpush1.bf16.msra.mxu0 0
  %64 = vmatprep.mubr.bf16.mxu0 0
  %65 = vmatmul.mubr.bf16.gmra.mrb[0].mxu0 %v26
  %v66 = vpop.f32.mrb[0].mxu0
  %v67 = vadd.f32 0.0, %v66
  %v68 = vpop.f32.mrb[0].mxu0
  %v69 = vpop.f32.mrb[0].mxu0
  %v70 = vpop.f32.mrb[0].mxu0
  %71 = vdwg.mxu0
  %v72 = vadd.f32 %v21, %v67
  %vm73 = vcmask 261120
  %74 = vst.msk [vmem:[#allocation2] sm:$0xff] %vm73, %v72
  // Predicated region
  $region18: #{hybrid_graph_transformer_forward.12} parent=0 // pred_check
    %p75 = pneg %p15
  $region19: #{hybrid_graph_transformer_forward.12} parent=0 // pred_check_branch
    %77 = sbr.rel (%p75) target = $region21
  $region20: #{hybrid_graph_transformer_forward.12} parent=0 // pred_region
    %v78 = vld [vmem:[#allocation2] sm:$0xff]
    %v79 = vld [vmem:[%s2] sm:$0x1]
    %v81 = vlaneseq
    %v82 = vshrl.u32 %v81, 7
    %v83 = vsub.s32 0, %v82
    %v84 = vrot.slane %v79, %v83
    %v86 = vadd.f32 %v78, %v84
    %v87 = vmax.f32 %v86, 0.0
    %v88 = vpack.c.bf16 %v87, %v87
    %vm89 = vcmask 257024
    %90 = vst.msk [vmem:[%s3] sm:$0xf] %vm89, %v88
  $region21: #{hybrid_graph_transformer_forward.12} parent=0 // pred_fallthru
    _
  // Predicated region
  $region22: #{hybrid_graph_transformer_forward.12} parent=0 // pred_check
    _
  $region23: #{hybrid_graph_transformer_forward.12} parent=0 // pred_check_branch
    %92 = sbr.rel (0) target = $region25
  $region24: #{hybrid_graph_transformer_forward.12} parent=0 // pred_region
    _
  $region25: #{hybrid_graph_transformer_forward.12} parent=0 // pred_fallthru
    _
  // Predicated region
  $region26: #{hybrid_graph_transformer_forward.12} parent=0 // pred_check
    _
  $region27: #{hybrid_graph_transformer_forward.12} parent=0 // pred_check_branch
    %94 = sbr.rel (0) target = $region29
  $region28: #{hybrid_graph_transformer_forward.12} parent=0 // pred_region
    _
  $region29: #{hybrid_graph_transformer_forward.12} parent=0 // pred_fallthru
    _

// kernel: hybrid_graph_transformer_forward.14
$region0: #{hybrid_graph_transformer_forward.14}
  #allocation0 [shape = 'u32[]', space=smem, size = 0x4, offset = 0x4, fixed_abs, tag = 'smem constant byte address 0x4 - core index']
  #allocation1 [shape = 'u32[144,128]{1,0:T(1,128)}', space=vmem, size = 0x12000, scoped, tag = 'internal scratch']
  %s0 = inlined_call_operand.vmem [shape: f32[16,1], index: 0, kind: input, shape index: {}]
  %s1 = inlined_call_operand.vmem [shape: f32[1,8], index: 1, kind: input, shape index: {}]
  %s2 = inlined_call_operand.vmem [shape: f32[1,8], index: 2, kind: input, shape index: {}]
  %s3 = inlined_call_operand.vmem [shape: bf16[8,16], index: 3, kind: input, shape index: {}]
  %s4 = inlined_call_operand.vmem [shape: f32[1,16], index: 4, kind: input, shape index: {}]
  %s5 = inlined_call_operand.vmem [shape: bf16[16,16], index: 5, kind: output, shape index: {}]
  %s6 = sld [smem:[#allocation0]]
  $region30: #{hybrid_graph_transformer_forward.14} parent=0
    _
  %s8 = ssub.s32 1, %s6
  %s9 = scalar_select 0, %s8, %s6
  // Predicated region
  $region2: #{hybrid_graph_transformer_forward.14} parent=0 // pred_check
    _
  $region3: #{hybrid_graph_transformer_forward.14} parent=0 // pred_check_branch
    %11 = sbr.rel (0) target = $region5
  $region4: #{hybrid_graph_transformer_forward.14} parent=0 // pred_region
    _
  $region5: #{hybrid_graph_transformer_forward.14} parent=0 // pred_fallthru
    _
  // Predicated region
  $region6: #{hybrid_graph_transformer_forward.14} parent=0 // pred_check
    _
  $region7: #{hybrid_graph_transformer_forward.14} parent=0 // pred_check_branch
    %13 = sbr.rel (0) target = $region9
  $region8: #{hybrid_graph_transformer_forward.14} parent=0 // pred_region
    _
  $region9: #{hybrid_graph_transformer_forward.14} parent=0 // pred_fallthru
    _
  // Predicated region
  $region10: #{hybrid_graph_transformer_forward.14} parent=0 // pred_check
    _
  $region11: #{hybrid_graph_transformer_forward.14} parent=0 // pred_check_branch
    %15 = sbr.rel (0) target = $region13
  $region12: #{hybrid_graph_transformer_forward.14} parent=0 // pred_region
    _
  $region13: #{hybrid_graph_transformer_forward.14} parent=0 // pred_fallthru
    _
  // Predicated region
  $region14: #{hybrid_graph_transformer_forward.14} parent=0 // pred_check
    _
  $region15: #{hybrid_graph_transformer_forward.14} parent=0 // pred_check_branch
    %17 = sbr.rel (0) target = $region17
  $region16: #{hybrid_graph_transformer_forward.14} parent=0 // pred_region
    _
  $region17: #{hybrid_graph_transformer_forward.14} parent=0 // pred_fallthru
    _
  // Predicated region
  $region18: #{hybrid_graph_transformer_forward.14} parent=0 // pred_check
    _
  $region19: #{hybrid_graph_transformer_forward.14} parent=0 // pred_check_branch
    %19 = sbr.rel (0) target = $region21
  $region20: #{hybrid_graph_transformer_forward.14} parent=0 // pred_region
    _
  $region21: #{hybrid_graph_transformer_forward.14} parent=0 // pred_fallthru
    _
  %v21 = vld [vmem:[%s0] sm:$0xff]
  %v22 = vld [vmem:[%s0 + $0x8] sm:$0xff]
  %v23 = vld [vmem:[%s1] sm:$0x1]
  %25 = vset.pattern.permute.xlu0 0
  %26 = vperm.xlu0 %25, %v21
  %v27 = vpop.permute.xlu0 %26
  %30 = vset.pattern.permute.xlu0 0
  %31 = vperm.xlu0 %30, %v22
  %v32 = vpop.permute.xlu0 %31
  %v35 = vlaneseq
  %v36 = vshrl.u32 %v35, 7
  %v37 = vsub.s32 0, %v36
  %v38 = vrot.slane %v23, %v37
  %v40 = vmul.f32 %v27, %v38
  %v41 = vmul.f32 %v32, %v38
  %v42 = vld [vmem:[%s2] sm:$0x1]
  %v44 = vlaneseq
  %v45 = vshrl.u32 %v44, 7
  %v46 = vsub.s32 0, %v45
  %v47 = vrot.slane %v42, %v46
  %v49 = vadd.f32 %v40, %v47
  %v50 = vadd.f32 %v41, %v47
  %v51 = vmax.f32 %v49, 0.0
  %v52 = vmax.f32 %v50, 0.0
  %v53 = vpack.c.bf16 %v52, %v51
  %v54 = vld [vmem:[%s3] sm:$0xf]
  %v55 = vld [vmem:[%s4] sm:$0x1]
  %v57 = vlaneseq
  %v58 = vshrl.u32 %v57, 7
  %v59 = vsub.s32 0, %v58
  %v60 = vrot.slane %v55, %v59
  %vm62 = vcmask 64512
  %v64 = vsel %vm62, %v53, 0
  %vm66 = vcmask 1043456
  %v68 = vsel %vm66, %v54, 0
  %70 = vmatprep.subr.bf16.mxu0 0
  %71 = vmatpush1.bf16.msra.mxu0 %v68
  %72 = vmatprep.subr.bf16.mxu0 0
  %73 = vmatpush1.bf16.msra.mxu0 0
  %74 = vmatprep.subr.bf16.mxu0 0
  %75 = vmatpush1.bf16.msra.mxu0 0
  %76 = vmatprep.subr.bf16.mxu0 0
  %77 = vmatpush1.bf16.msra.mxu0 0
  %78 = vmatprep.subr.bf16.mxu0 0
  %79 = vmatpush1.bf16.msra.mxu0 0
  %80 = vmatprep.subr.bf16.mxu0 0
  %81 = vmatpush1.bf16.msra.mxu0 0
  %82 = vmatprep.subr.bf16.mxu0 0
  %83 = vmatpush1.bf16.msra.mxu0 0
  %84 = vmatprep.subr.bf16.mxu0 0
  %85 = vmatpush1.bf16.msra.mxu0 0
  %86 = vmatprep.subr.bf16.mxu0 0
  %87 = vmatpush1.bf16.msra.mxu0 0
  %88 = vmatprep.subr.bf16.mxu0 0
  %89 = vmatpush1.bf16.msra.mxu0 0
  %90 = vmatprep.subr.bf16.mxu0 0
  %91 = vmatpush1.bf16.msra.mxu0 0
  %92 = vmatprep.subr.bf16.mxu0 0
  %93 = vmatpush1.bf16.msra.mxu0 0
  %94 = vmatprep.subr.bf16.mxu0 0
  %95 = vmatpush1.bf16.msra.mxu0 0
  %96 = vmatprep.subr.bf16.mxu0 0
  %97 = vmatpush1.bf16.msra.mxu0 0
  %98 = vmatprep.subr.bf16.mxu0 0
  %99 = vmatpush1.bf16.msra.mxu0 0
  %100 = vmatprep.subr.bf16.mxu0 0
  %101 = vmatpush1.bf16.msra.mxu0 0
  %102 = vmatprep.mubr.bf16.mxu0 0
  %103 = vmatmul.mubr.bf16.gmra.mrb[0].mxu0 %v64
  %v104 = vpop.f32.mrb[0].mxu0
  %v105 = vadd.f32 %v60, %v104
  %v106 = vpop.f32.mrb[0].mxu0
  %v107 = vpop.f32.mrb[0].mxu0
  %v108 = vadd.f32 %v60, %v107
  %v109 = vpop.f32.mrb[0].mxu0
  %110 = vdwg.mxu0
  %v111 = vpack.c.bf16 %v108, %v105
  %v113 = vunpack.c.l.b16 %v111
  %v114 = vunpack.c.h.b16 %v111
  %v115 = vpack.c.b16 %v113, %v113
  %v116 = vpack.c.b16 %v114, %v114
  %vm119 = vcmask 125952
  %120 = vst.msk [vmem:[%s5] sm:$0xf] %vm119, %v115
  %121 = vst.msk [vmem:[%s5 + $0x4] sm:$0xf] %vm119, %v116
  // Predicated region
  $region22: #{hybrid_graph_transformer_forward.14} parent=0 // pred_check
    _
  $region23: #{hybrid_graph_transformer_forward.14} parent=0 // pred_check_branch
    %123 = sbr.rel (0) target = $region25
  $region24: #{hybrid_graph_transformer_forward.14} parent=0 // pred_region
    _
  $region25: #{hybrid_graph_transformer_forward.14} parent=0 // pred_fallthru
    _
  // Predicated region
  $region26: #{hybrid_graph_transformer_forward.14} parent=0 // pred_check
    _
  $region27: #{hybrid_graph_transformer_forward.14} parent=0 // pred_check_branch
    %125 = sbr.rel (0) target = $region29
  $region28: #{hybrid_graph_transformer_forward.14} parent=0 // pred_region
    _
  $region29: #{hybrid_graph_transformer_forward.14} parent=0 // pred_fallthru
    _

// kernel: hybrid_graph_transformer_forward.15
$region0: #{hybrid_graph_transformer_forward.15}
  #allocation0 [shape = 'u32[]', space=smem, size = 0x4, offset = 0x4, fixed_abs, tag = 'smem constant byte address 0x4 - core index']
  #allocation1 [shape = 'u32[144,128]{1,0:T(1,128)}', space=vmem, size = 0x12000, scoped, tag = 'internal scratch']
  #allocation2 [shape = 'f32[1,1]{1,0:T(1,128)S(1)}', space=vmem, size = 0x200, scoped, tag = 'scoped memory for hybrid_graph_transformer_forward.15']
  %s0 = inlined_call_operand.vmem [shape: bf16[16,32], index: 0, kind: input, shape index: {}]
  %s1 = inlined_call_operand.vmem [shape: bf16[16,32], index: 1, kind: input, shape index: {}]
  %s2 = inlined_call_operand.vmem [shape: bf16[16,16], index: 2, kind: input, shape index: {}]
  %s3 = inlined_call_operand.vmem [shape: bf16[32,32], index: 3, kind: input, shape index: {}]
  %s4 = inlined_call_operand.vmem [shape: bf16[32,32], index: 4, kind: input, shape index: {}]
  %s5 = inlined_call_operand.vmem [shape: bf16[16,32], index: 5, kind: input, shape index: {}]
  %s6 = inlined_call_operand.vmem [shape: f32[1,32], index: 6, kind: input, shape index: {}]
  %s7 = inlined_call_operand.vmem [shape: bf16[32,16], index: 7, kind: input, shape index: {}]
  %s8 = inlined_call_operand.vmem [shape: f32[1,16], index: 8, kind: input, shape index: {}]
  %s9 = inlined_call_operand.vmem [shape: bf16[16,1], index: 9, kind: input, shape index: {}]
  %s10 = inlined_call_operand.<no memory space> [shape: f32[1,1], index: 10, kind: input, shape index: {}]
  %s11 = inlined_call_operand.vmem [shape: bf16[32,32], index: 11, kind: input, shape index: {}]
  %s12 = inlined_call_operand.vmem [shape: bf16[32,32], index: 12, kind: input, shape index: {}]
  %s13 = inlined_call_operand.vmem [shape: bf16[16,32], index: 13, kind: input, shape index: {}]
  %s14 = inlined_call_operand.vmem [shape: f32[1,32], index: 14, kind: input, shape index: {}]
  %s15 = inlined_call_operand.vmem [shape: bf16[32,16], index: 15, kind: input, shape index: {}]
  %s16 = inlined_call_operand.vmem [shape: f32[1,16], index: 16, kind: input, shape index: {}]
  %s17 = inlined_call_operand.vmem [shape: bf16[16,3], index: 17, kind: input, shape index: {}]
  %s18 = inlined_call_operand.vmem [shape: f32[1,3], index: 18, kind: input, shape index: {}]
  %s19 = inlined_call_operand.vmem [shape: f32[16,1], index: 19, kind: output, shape index: {0}]
  %s20 = inlined_call_operand.vmem [shape: f32[16,3], index: 20, kind: output, shape index: {1}]
  %21 = xla_tuple %s19, %s20
  %s22 = sld [smem:[#allocation0]]
  $region94: #{hybrid_graph_transformer_forward.15} parent=0
    _
  %s24 = ssub.s32 1, %s22
  %s25 = scalar_select 0, %s24, %s22
  %v26 = vstv %s10
  %27 = vst [vmem:[#allocation2] sm:$0x1] %v26
  // Predicated region
  $region2: #{hybrid_graph_transformer_forward.15} parent=0 // pred_check
    _
  $region3: #{hybrid_graph_transformer_forward.15} parent=0 // pred_check_branch
    %29 = sbr.rel (0) target = $region5
  $region4: #{hybrid_graph_transformer_forward.15} parent=0 // pred_region
    _
  $region5: #{hybrid_graph_transformer_forward.15} parent=0 // pred_fallthru
    _
  // Predicated region
  $region6: #{hybrid_graph_transformer_forward.15} parent=0 // pred_check
    _
  $region7: #{hybrid_graph_transformer_forward.15} parent=0 // pred_check_branch
    %31 = sbr.rel (0) target = $region9
  $region8: #{hybrid_graph_transformer_forward.15} parent=0 // pred_region
    _
  $region9: #{hybrid_graph_transformer_forward.15} parent=0 // pred_fallthru
    _
  // Predicated region
  $region10: #{hybrid_graph_transformer_forward.15} parent=0 // pred_check
    _
  $region11: #{hybrid_graph_transformer_forward.15} parent=0 // pred_check_branch
    %33 = sbr.rel (0) target = $region13
  $region12: #{hybrid_graph_transformer_forward.15} parent=0 // pred_region
    _
  $region13: #{hybrid_graph_transformer_forward.15} parent=0 // pred_fallthru
    _
  // Predicated region
  $region14: #{hybrid_graph_transformer_forward.15} parent=0 // pred_check
    _
  $region15: #{hybrid_graph_transformer_forward.15} parent=0 // pred_check_branch
    %35 = sbr.rel (0) target = $region17
  $region16: #{hybrid_graph_transformer_forward.15} parent=0 // pred_region
    _
  $region17: #{hybrid_graph_transformer_forward.15} parent=0 // pred_fallthru
    _
  // Predicated region
  $region18: #{hybrid_graph_transformer_forward.15} parent=0 // pred_check
    _
  $region19: #{hybrid_graph_transformer_forward.15} parent=0 // pred_check_branch
    %37 = sbr.rel (0) target = $region21
  $region20: #{hybrid_graph_transformer_forward.15} parent=0 // pred_region
    _
  $region21: #{hybrid_graph_transformer_forward.15} parent=0 // pred_fallthru
    _
  // Predicated region
  $region22: #{hybrid_graph_transformer_forward.15} parent=0 // pred_check
    _
  $region23: #{hybrid_graph_transformer_forward.15} parent=0 // pred_check_branch
    %39 = sbr.rel (0) target = $region25
  $region24: #{hybrid_graph_transformer_forward.15} parent=0 // pred_region
    _
  $region25: #{hybrid_graph_transformer_forward.15} parent=0 // pred_fallthru
    _
  // Predicated region
  $region26: #{hybrid_graph_transformer_forward.15} parent=0 // pred_check
    _
  $region27: #{hybrid_graph_transformer_forward.15} parent=0 // pred_check_branch
    %41 = sbr.rel (0) target = $region29
  $region28: #{hybrid_graph_transformer_forward.15} parent=0 // pred_region
    _
  $region29: #{hybrid_graph_transformer_forward.15} parent=0 // pred_fallthru
    _
  // Predicated region
  $region30: #{hybrid_graph_transformer_forward.15} parent=0 // pred_check
    _
  $region31: #{hybrid_graph_transformer_forward.15} parent=0 // pred_check_branch
    %43 = sbr.rel (0) target = $region33
  $region32: #{hybrid_graph_transformer_forward.15} parent=0 // pred_region
    _
  $region33: #{hybrid_graph_transformer_forward.15} parent=0 // pred_fallthru
    _
  // Predicated region
  $region34: #{hybrid_graph_transformer_forward.15} parent=0 // pred_check
    _
  $region35: #{hybrid_graph_transformer_forward.15} parent=0 // pred_check_branch
    %45 = sbr.rel (0) target = $region37
  $region36: #{hybrid_graph_transformer_forward.15} parent=0 // pred_region
    _
  $region37: #{hybrid_graph_transformer_forward.15} parent=0 // pred_fallthru
    _
  // Predicated region
  $region38: #{hybrid_graph_transformer_forward.15} parent=0 // pred_check
    _
  $region39: #{hybrid_graph_transformer_forward.15} parent=0 // pred_check_branch
    %47 = sbr.rel (0) target = $region41
  $region40: #{hybrid_graph_transformer_forward.15} parent=0 // pred_region
    _
  $region41: #{hybrid_graph_transformer_forward.15} parent=0 // pred_fallthru
    _
  // Predicated region
  $region42: #{hybrid_graph_transformer_forward.15} parent=0 // pred_check
    _
  $region43: #{hybrid_graph_transformer_forward.15} parent=0 // pred_check_branch
    %49 = sbr.rel (0) target = $region45
  $region44: #{hybrid_graph_transformer_forward.15} parent=0 // pred_region
    _
  $region45: #{hybrid_graph_transformer_forward.15} parent=0 // pred_fallthru
    _
  // Predicated region
  $region46: #{hybrid_graph_transformer_forward.15} parent=0 // pred_check
    _
  $region47: #{hybrid_graph_transformer_forward.15} parent=0 // pred_check_branch
    %51 = sbr.rel (0) target = $region49
  $region48: #{hybrid_graph_transformer_forward.15} parent=0 // pred_region
    _
  $region49: #{hybrid_graph_transformer_forward.15} parent=0 // pred_fallthru
    _
  // Predicated region
  $region50: #{hybrid_graph_transformer_forward.15} parent=0 // pred_check
    _
  $region51: #{hybrid_graph_transformer_forward.15} parent=0 // pred_check_branch
    %53 = sbr.rel (0) target = $region53
  $region52: #{hybrid_graph_transformer_forward.15} parent=0 // pred_region
    _
  $region53: #{hybrid_graph_transformer_forward.15} parent=0 // pred_fallthru
    _
  // Predicated region
  $region54: #{hybrid_graph_transformer_forward.15} parent=0 // pred_check
    _
  $region55: #{hybrid_graph_transformer_forward.15} parent=0 // pred_check_branch
    %55 = sbr.rel (0) target = $region57
  $region56: #{hybrid_graph_transformer_forward.15} parent=0 // pred_region
    _
  $region57: #{hybrid_graph_transformer_forward.15} parent=0 // pred_fallthru
    _
  // Predicated region
  $region58: #{hybrid_graph_transformer_forward.15} parent=0 // pred_check
    _
  $region59: #{hybrid_graph_transformer_forward.15} parent=0 // pred_check_branch
    %57 = sbr.rel (0) target = $region61
  $region60: #{hybrid_graph_transformer_forward.15} parent=0 // pred_region
    _
  $region61: #{hybrid_graph_transformer_forward.15} parent=0 // pred_fallthru
    _
  // Predicated region
  $region62: #{hybrid_graph_transformer_forward.15} parent=0 // pred_check
    _
  $region63: #{hybrid_graph_transformer_forward.15} parent=0 // pred_check_branch
    %59 = sbr.rel (0) target = $region65
  $region64: #{hybrid_graph_transformer_forward.15} parent=0 // pred_region
    _
  $region65: #{hybrid_graph_transformer_forward.15} parent=0 // pred_fallthru
    _
  // Predicated region
  $region66: #{hybrid_graph_transformer_forward.15} parent=0 // pred_check
    _
  $region67: #{hybrid_graph_transformer_forward.15} parent=0 // pred_check_branch
    %61 = sbr.rel (0) target = $region69
  $region68: #{hybrid_graph_transformer_forward.15} parent=0 // pred_region
    _
  $region69: #{hybrid_graph_transformer_forward.15} parent=0 // pred_fallthru
    _
  // Predicated region
  $region70: #{hybrid_graph_transformer_forward.15} parent=0 // pred_check
    _
  $region71: #{hybrid_graph_transformer_forward.15} parent=0 // pred_check_branch
    %63 = sbr.rel (0) target = $region73
  $region72: #{hybrid_graph_transformer_forward.15} parent=0 // pred_region
    _
  $region73: #{hybrid_graph_transformer_forward.15} parent=0 // pred_fallthru
    _
  // Predicated region
  $region74: #{hybrid_graph_transformer_forward.15} parent=0 // pred_check
    _
  $region75: #{hybrid_graph_transformer_forward.15} parent=0 // pred_check_branch
    %65 = sbr.rel (0) target = $region77
  $region76: #{hybrid_graph_transformer_forward.15} parent=0 // pred_region
    _
  $region77: #{hybrid_graph_transformer_forward.15} parent=0 // pred_fallthru
    _
  %v67 = vld [vmem:[%s0] sm:$0xf]
  %v68 = vld [vmem:[%s0 + $0x4] sm:$0xf]
  %v69 = vld [vmem:[%s1] sm:$0xf]
  %v70 = vld [vmem:[%s1 + $0x4] sm:$0xf]
  %v71 = vld [vmem:[%s2] sm:$0xf]
  %v72 = vld [vmem:[%s2 + $0x4] sm:$0xf]
  %v73 = vld [vmem:[%s3] sm:$0xf]
  %v74 = vld [vmem:[%s3 + $0x4] sm:$0xf]
  %v75 = vld [vmem:[%s3 + $0x8] sm:$0xf]
  %v76 = vld [vmem:[%s3 + $0xc] sm:$0xf]
  %v77 = vld [vmem:[%s4] sm:$0xf]
  %v78 = vld [vmem:[%s4 + $0x4] sm:$0xf]
  %v79 = vld [vmem:[%s4 + $0x8] sm:$0xf]
  %v80 = vld [vmem:[%s4 + $0xc] sm:$0xf]
  %v83 = vunpack.c.l.b16 %v69
  %v84 = vunpack.c.l.b16 %v70
  %v85 = vpack.c.b16 %v84, %v83
  %v90 = vunpack.c.l.b16 %v77
  %v91 = vunpack.c.l.b16 %v78
  %v92 = vunpack.c.l.b16 %v79
  %v93 = vunpack.c.l.b16 %v80
  %v94 = vpack.c.b16 %v91, %v90
  %v95 = vpack.c.b16 %v93, %v92
  %vm98 = vcmask 261120
  %v100 = vsel %vm98, %v85, 0
  %102 = vmatprep.subr.bf16.mxu0 0
  %103 = vmatpush1.bf16.msra.mxu0 %v94
  %104 = vmatprep.subr.bf16.mxu0 0
  %105 = vmatpush1.bf16.msra.mxu0 %v95
  %106 = vmatprep.subr.bf16.mxu0 0
  %107 = vmatpush1.bf16.msra.mxu0 0
  %108 = vmatprep.subr.bf16.mxu0 0
  %109 = vmatpush1.bf16.msra.mxu0 0
  %110 = vmatprep.subr.bf16.mxu0 0
  %111 = vmatpush1.bf16.msra.mxu0 0
  %112 = vmatprep.subr.bf16.mxu0 0
  %113 = vmatpush1.bf16.msra.mxu0 0
  %114 = vmatprep.subr.bf16.mxu0 0
  %115 = vmatpush1.bf16.msra.mxu0 0
  %116 = vmatprep.subr.bf16.mxu0 0
  %117 = vmatpush1.bf16.msra.mxu0 0
  %118 = vmatprep.subr.bf16.mxu0 0
  %119 = vmatpush1.bf16.msra.mxu0 0
  %120 = vmatprep.subr.bf16.mxu0 0
  %121 = vmatpush1.bf16.msra.mxu0 0
  %122 = vmatprep.subr.bf16.mxu0 0
  %123 = vmatpush1.bf16.msra.mxu0 0
  %124 = vmatprep.subr.bf16.mxu0 0
  %125 = vmatpush1.bf16.msra.mxu0 0
  %126 = vmatprep.subr.bf16.mxu0 0
  %127 = vmatpush1.bf16.msra.mxu0 0
  %128 = vmatprep.subr.bf16.mxu0 0
  %129 = vmatpush1.bf16.msra.mxu0 0
  %130 = vmatprep.subr.bf16.mxu0 0
  %131 = vmatpush1.bf16.msra.mxu0 0
  %132 = vmatprep.subr.bf16.mxu0 0
  %133 = vmatpush1.bf16.msra.mxu0 0
  %134 = vmatprep.mubr.bf16.mxu0 0
  %135 = vmatmul.mubr.bf16.gmra.mrb[0].mxu0 %v100
  %v136 = vpop.f32.mrb[0].mxu0
  %v137 = vadd.f32 0.0, %v136
  %v138 = vpop.f32.mrb[0].mxu0
  %v139 = vpop.f32.mrb[0].mxu0
  %v140 = vadd.f32 0.0, %v139
  %v141 = vpop.f32.mrb[0].mxu0
  %142 = vdwg.mxu0
  %v145 = vunpack.c.l.b16 %v67
  %v146 = vunpack.c.l.b16 %v68
  %v147 = vpack.c.b16 %v146, %v145
  %v152 = vunpack.c.l.b16 %v73
  %v153 = vunpack.c.l.b16 %v74
  %v154 = vunpack.c.l.b16 %v75
  %v155 = vunpack.c.l.b16 %v76
  %v156 = vpack.c.b16 %v153, %v152
  %v157 = vpack.c.b16 %v155, %v154
  %v161 = vsel %vm98, %v147, 0
  %163 = vmatprep.subr.bf16.mxu0 0
  %164 = vmatpush1.bf16.msra.mxu0 %v156
  %165 = vmatprep.subr.bf16.mxu0 0
  %166 = vmatpush1.bf16.msra.mxu0 %v157
  %167 = vmatprep.subr.bf16.mxu0 0
  %168 = vmatpush1.bf16.msra.mxu0 0
  %169 = vmatprep.subr.bf16.mxu0 0
  %170 = vmatpush1.bf16.msra.mxu0 0
  %171 = vmatprep.subr.bf16.mxu0 0
  %172 = vmatpush1.bf16.msra.mxu0 0
  %173 = vmatprep.subr.bf16.mxu0 0
  %174 = vmatpush1.bf16.msra.mxu0 0
  %175 = vmatprep.subr.bf16.mxu0 0
  %176 = vmatpush1.bf16.msra.mxu0 0
  %177 = vmatprep.subr.bf16.mxu0 0
  %178 = vmatpush1.bf16.msra.mxu0 0
  %179 = vmatprep.subr.bf16.mxu0 0
  %180 = vmatpush1.bf16.msra.mxu0 0
  %181 = vmatprep.subr.bf16.mxu0 0
  %182 = vmatpush1.bf16.msra.mxu0 0
  %183 = vmatprep.subr.bf16.mxu0 0
  %184 = vmatpush1.bf16.msra.mxu0 0
  %185 = vmatprep.subr.bf16.mxu0 0
  %186 = vmatpush1.bf16.msra.mxu0 0
  %187 = vmatprep.subr.bf16.mxu0 0
  %188 = vmatpush1.bf16.msra.mxu0 0
  %189 = vmatprep.subr.bf16.mxu0 0
  %190 = vmatpush1.bf16.msra.mxu0 0
  %191 = vmatprep.subr.bf16.mxu0 0
  %192 = vmatpush1.bf16.msra.mxu0 0
  %193 = vmatprep.subr.bf16.mxu0 0
  %194 = vmatpush1.bf16.msra.mxu0 0
  %195 = vmatprep.mubr.bf16.mxu0 0
  %196 = vmatmul.mubr.bf16.gmra.mrb[0].mxu0 %v161
  %v197 = vpop.f32.mrb[0].mxu0
  %v198 = vadd.f32 %v137, %v197
  %v199 = vpop.f32.mrb[0].mxu0
  %v200 = vpop.f32.mrb[0].mxu0
  %v201 = vadd.f32 %v140, %v200
  %v202 = vpop.f32.mrb[0].mxu0
  %203 = vdwg.mxu0
  %v204 = vld [vmem:[%s5] sm:$0xf]
  %v205 = vld [vmem:[%s5 + $0x4] sm:$0xf]
  %v208 = vunpack.c.l.b16 %v71
  %v209 = vunpack.c.l.b16 %v72
  %v210 = vpack.c.b16 %v209, %v208
  %v213 = vunpack.c.l.b16 %v204
  %v214 = vunpack.c.l.b16 %v205
  %v215 = vpack.c.b16 %v214, %v213
  %vm217 = vcmask 130048
  %v219 = vsel %vm217, %v210, 0
  %221 = vmatprep.subr.bf16.mxu0 0
  %222 = vmatpush1.bf16.msra.mxu0 %v215
  %223 = vmatprep.subr.bf16.mxu0 0
  %224 = vmatpush1.bf16.msra.mxu0 0
  %225 = vmatprep.subr.bf16.mxu0 0
  %226 = vmatpush1.bf16.msra.mxu0 0
  %227 = vmatprep.subr.bf16.mxu0 0
  %228 = vmatpush1.bf16.msra.mxu0 0
  %229 = vmatprep.subr.bf16.mxu0 0
  %230 = vmatpush1.bf16.msra.mxu0 0
  %231 = vmatprep.subr.bf16.mxu0 0
  %232 = vmatpush1.bf16.msra.mxu0 0
  %233 = vmatprep.subr.bf16.mxu0 0
  %234 = vmatpush1.bf16.msra.mxu0 0
  %235 = vmatprep.subr.bf16.mxu0 0
  %236 = vmatpush1.bf16.msra.mxu0 0
  %237 = vmatprep.subr.bf16.mxu0 0
  %238 = vmatpush1.bf16.msra.mxu0 0
  %239 = vmatprep.subr.bf16.mxu0 0
  %240 = vmatpush1.bf16.msra.mxu0 0
  %241 = vmatprep.subr.bf16.mxu0 0
  %242 = vmatpush1.bf16.msra.mxu0 0
  %243 = vmatprep.subr.bf16.mxu0 0
  %244 = vmatpush1.bf16.msra.mxu0 0
  %245 = vmatprep.subr.bf16.mxu0 0
  %246 = vmatpush1.bf16.msra.mxu0 0
  %247 = vmatprep.subr.bf16.mxu0 0
  %248 = vmatpush1.bf16.msra.mxu0 0
  %249 = vmatprep.subr.bf16.mxu0 0
  %250 = vmatpush1.bf16.msra.mxu0 0
  %251 = vmatprep.subr.bf16.mxu0 0
  %252 = vmatpush1.bf16.msra.mxu0 0
  %253 = vmatprep.mubr.bf16.mxu0 0
  %254 = vmatmul.mubr.bf16.gmra.mrb[0].mxu0 %v219
  %v255 = vpop.f32.mrb[0].mxu0
  %v256 = vadd.f32 0.0, %v255
  %v257 = vpop.f32.mrb[0].mxu0
  %v258 = vpop.f32.mrb[0].mxu0
  %v259 = vadd.f32 0.0, %v258
  %v260 = vpop.f32.mrb[0].mxu0
  %261 = vdwg.mxu0
  %v262 = vadd.f32 %v198, %v256
  %v263 = vadd.f32 %v201, %v259
  %v264 = vld [vmem:[%s6] sm:$0x1]
  %v266 = vlaneseq
  %v267 = vshrl.u32 %v266, 7
  %v268 = vsub.s32 0, %v267
  %v269 = vrot.slane %v264, %v268
  %v271 = vadd.f32 %v262, %v269
  %v272 = vadd.f32 %v263, %v269
  %v273 = vmax.f32 %v271, 0.0
  %v274 = vmax.f32 %v272, 0.0
  %v275 = vpack.c.bf16 %v274, %v273
  %v276 = vld [vmem:[%s7] sm:$0xf]
  %v277 = vld [vmem:[%s7 + $0x4] sm:$0xf]
  %v278 = vld [vmem:[%s7 + $0x8] sm:$0xf]
  %v279 = vld [vmem:[%s7 + $0xc] sm:$0xf]
  %v280 = vld [vmem:[%s8] sm:$0x1]
  %v282 = vlaneseq
  %v283 = vshrl.u32 %v282, 7
  %v284 = vsub.s32 0, %v283
  %v285 = vrot.slane %v280, %v284
  %v291 = vunpack.c.l.b16 %v276
  %v292 = vunpack.c.l.b16 %v277
  %v293 = vunpack.c.l.b16 %v278
  %v294 = vunpack.c.l.b16 %v279
  %v295 = vpack.c.b16 %v292, %v291
  %v296 = vpack.c.b16 %v294, %v293
  %v300 = vsel %vm98, %v275, 0
  %302 = vmatprep.subr.bf16.mxu0 0
  %303 = vmatpush1.bf16.msra.mxu0 %v295
  %304 = vmatprep.subr.bf16.mxu0 0
  %305 = vmatpush1.bf16.msra.mxu0 %v296
  %306 = vmatprep.subr.bf16.mxu0 0
  %307 = vmatpush1.bf16.msra.mxu0 0
  %308 = vmatprep.subr.bf16.mxu0 0
  %309 = vmatpush1.bf16.msra.mxu0 0
  %310 = vmatprep.subr.bf16.mxu0 0
  %311 = vmatpush1.bf16.msra.mxu0 0
  %312 = vmatprep.subr.bf16.mxu0 0
  %313 = vmatpush1.bf16.msra.mxu0 0
  %314 = vmatprep.subr.bf16.mxu0 0
  %315 = vmatpush1.bf16.msra.mxu0 0
  %316 = vmatprep.subr.bf16.mxu0 0
  %317 = vmatpush1.bf16.msra.mxu0 0
  %318 = vmatprep.subr.bf16.mxu0 0
  %319 = vmatpush1.bf16.msra.mxu0 0
  %320 = vmatprep.subr.bf16.mxu0 0
  %321 = vmatpush1.bf16.msra.mxu0 0
  %322 = vmatprep.subr.bf16.mxu0 0
  %323 = vmatpush1.bf16.msra.mxu0 0
  %324 = vmatprep.subr.bf16.mxu0 0
  %325 = vmatpush1.bf16.msra.mxu0 0
  %326 = vmatprep.subr.bf16.mxu0 0
  %327 = vmatpush1.bf16.msra.mxu0 0
  %328 = vmatprep.subr.bf16.mxu0 0
  %329 = vmatpush1.bf16.msra.mxu0 0
  %330 = vmatprep.subr.bf16.mxu0 0
  %331 = vmatpush1.bf16.msra.mxu0 0
  %332 = vmatprep.subr.bf16.mxu0 0
  %333 = vmatpush1.bf16.msra.mxu0 0
  %334 = vmatprep.mubr.bf16.mxu0 0
  %335 = vmatmul.mubr.bf16.gmra.mrb[0].mxu0 %v300
  %v336 = vpop.f32.mrb[0].mxu0
  %v337 = vadd.f32 %v285, %v336
  %v338 = vpop.f32.mrb[0].mxu0
  %v339 = vpop.f32.mrb[0].mxu0
  %v340 = vadd.f32 %v285, %v339
  %v341 = vpop.f32.mrb[0].mxu0
  %342 = vdwg.mxu0
  %v343 = vmax.f32 %v337, 0.0
  %v344 = vmax.f32 %v340, 0.0
  %v345 = vpack.c.bf16 %v344, %v343
  %v346 = vld [vmem:[%s9] sm:$0xf]
  %v347 = vld [vmem:[%s9 + $0x4] sm:$0xf]
  %v348 = vld [vmem:[#allocation2] sm:$0x1]
  %v350 = vlaneseq
  %v351 = vshrl.u32 %v350, 7
  %v352 = vsub.s32 0, %v351
  %v353 = vrot.slane %v348, %v352
  %v357 = vunpack.c.l.b16 %v346
  %v358 = vunpack.c.l.b16 %v347
  %v359 = vpack.c.b16 %v358, %v357
  %v362 = vsel %vm217, %v345, 0
  %364 = vmatprep.subr.bf16.mxu0 0
  %365 = vmatpush1.bf16.msra.mxu0 %v359
  %366 = vmatprep.subr.bf16.mxu0 0
  %367 = vmatpush1.bf16.msra.mxu0 0
  %368 = vmatprep.subr.bf16.mxu0 0
  %369 = vmatpush1.bf16.msra.mxu0 0
  %370 = vmatprep.subr.bf16.mxu0 0
  %371 = vmatpush1.bf16.msra.mxu0 0
  %372 = vmatprep.subr.bf16.mxu0 0
  %373 = vmatpush1.bf16.msra.mxu0 0
  %374 = vmatprep.subr.bf16.mxu0 0
  %375 = vmatpush1.bf16.msra.mxu0 0
  %376 = vmatprep.subr.bf16.mxu0 0
  %377 = vmatpush1.bf16.msra.mxu0 0
  %378 = vmatprep.subr.bf16.mxu0 0
  %379 = vmatpush1.bf16.msra.mxu0 0
  %380 = vmatprep.subr.bf16.mxu0 0
  %381 = vmatpush1.bf16.msra.mxu0 0
  %382 = vmatprep.subr.bf16.mxu0 0
  %383 = vmatpush1.bf16.msra.mxu0 0
  %384 = vmatprep.subr.bf16.mxu0 0
  %385 = vmatpush1.bf16.msra.mxu0 0
  %386 = vmatprep.subr.bf16.mxu0 0
  %387 = vmatpush1.bf16.msra.mxu0 0
  %388 = vmatprep.subr.bf16.mxu0 0
  %389 = vmatpush1.bf16.msra.mxu0 0
  %390 = vmatprep.subr.bf16.mxu0 0
  %391 = vmatpush1.bf16.msra.mxu0 0
  %392 = vmatprep.subr.bf16.mxu0 0
  %393 = vmatpush1.bf16.msra.mxu0 0
  %394 = vmatprep.subr.bf16.mxu0 0
  %395 = vmatpush1.bf16.msra.mxu0 0
  %396 = vmatprep.mubr.bf16.mxu0 0
  %397 = vmatmul.mubr.bf16.gmra.mrb[0].mxu0 %v362
  %v398 = vpop.f32.mrb[0].mxu0
  %v399 = vadd.f32 %v353, %v398
  %v400 = vpop.f32.mrb[0].mxu0
  %v401 = vpop.f32.mrb[0].mxu0
  %v402 = vadd.f32 %v353, %v401
  %v403 = vpop.f32.mrb[0].mxu0
  %404 = vdwg.mxu0
  %vm405 = vcmask 7168
  %406 = vst.msk [vmem:[%s19] sm:$0xff] %vm405, %v399
  %407 = vst.msk [vmem:[%s19 + $0x8] sm:$0xff] %vm405, %v402
  %v408 = vld [vmem:[%s11] sm:$0xf]
  %v409 = vld [vmem:[%s11 + $0x4] sm:$0xf]
  %v410 = vld [vmem:[%s11 + $0x8] sm:$0xf]
  %v411 = vld [vmem:[%s11 + $0xc] sm:$0xf]
  %v412 = vld [vmem:[%s12] sm:$0xf]
  %v413 = vld [vmem:[%s12 + $0x4] sm:$0xf]
  %v414 = vld [vmem:[%s12 + $0x8] sm:$0xf]
  %v415 = vld [vmem:[%s12 + $0xc] sm:$0xf]
  %v420 = vunpack.c.l.b16 %v412
  %v421 = vunpack.c.l.b16 %v413
  %v422 = vunpack.c.l.b16 %v414
  %v423 = vunpack.c.l.b16 %v415
  %v424 = vpack.c.b16 %v421, %v420
  %v425 = vpack.c.b16 %v423, %v422
  %428 = vmatprep.subr.bf16.mxu0 0
  %429 = vmatpush1.bf16.msra.mxu0 %v424
  %430 = vmatprep.subr.bf16.mxu0 0
  %431 = vmatpush1.bf16.msra.mxu0 %v425
  %432 = vmatprep.subr.bf16.mxu0 0
  %433 = vmatpush1.bf16.msra.mxu0 0
  %434 = vmatprep.subr.bf16.mxu0 0
  %435 = vmatpush1.bf16.msra.mxu0 0
  %436 = vmatprep.subr.bf16.mxu0 0
  %437 = vmatpush1.bf16.msra.mxu0 0
  %438 = vmatprep.subr.bf16.mxu0 0
  %439 = vmatpush1.bf16.msra.mxu0 0
  %440 = vmatprep.subr.bf16.mxu0 0
  %441 = vmatpush1.bf16.msra.mxu0 0
  %442 = vmatprep.subr.bf16.mxu0 0
  %443 = vmatpush1.bf16.msra.mxu0 0
  %444 = vmatprep.subr.bf16.mxu0 0
  %445 = vmatpush1.bf16.msra.mxu0 0
  %446 = vmatprep.subr.bf16.mxu0 0
  %447 = vmatpush1.bf16.msra.mxu0 0
  %448 = vmatprep.subr.bf16.mxu0 0
  %449 = vmatpush1.bf16.msra.mxu0 0
  %450 = vmatprep.subr.bf16.mxu0 0
  %451 = vmatpush1.bf16.msra.mxu0 0
  %452 = vmatprep.subr.bf16.mxu0 0
  %453 = vmatpush1.bf16.msra.mxu0 0
  %454 = vmatprep.subr.bf16.mxu0 0
  %455 = vmatpush1.bf16.msra.mxu0 0
  %456 = vmatprep.subr.bf16.mxu0 0
  %457 = vmatpush1.bf16.msra.mxu0 0
  %458 = vmatprep.subr.bf16.mxu0 0
  %459 = vmatpush1.bf16.msra.mxu0 0
  %460 = vmatprep.mubr.bf16.mxu0 0
  %461 = vmatmul.mubr.bf16.gmra.mrb[0].mxu0 %v100
  %v462 = vpop.f32.mrb[0].mxu0
  %v463 = vadd.f32 0.0, %v462
  %v464 = vpop.f32.mrb[0].mxu0
  %v465 = vpop.f32.mrb[0].mxu0
  %v466 = vadd.f32 0.0, %v465
  %v467 = vpop.f32.mrb[0].mxu0
  %468 = vdwg.mxu0
  %v473 = vunpack.c.l.b16 %v408
  %v474 = vunpack.c.l.b16 %v409
  %v475 = vunpack.c.l.b16 %v410
  %v476 = vunpack.c.l.b16 %v411
  %v477 = vpack.c.b16 %v474, %v473
  %v478 = vpack.c.b16 %v476, %v475
  %481 = vmatprep.subr.bf16.mxu0 0
  %482 = vmatpush1.bf16.msra.mxu0 %v477
  %483 = vmatprep.subr.bf16.mxu0 0
  %484 = vmatpush1.bf16.msra.mxu0 %v478
  %485 = vmatprep.subr.bf16.mxu0 0
  %486 = vmatpush1.bf16.msra.mxu0 0
  %487 = vmatprep.subr.bf16.mxu0 0
  %488 = vmatpush1.bf16.msra.mxu0 0
  %489 = vmatprep.subr.bf16.mxu0 0
  %490 = vmatpush1.bf16.msra.mxu0 0
  %491 = vmatprep.subr.bf16.mxu0 0
  %492 = vmatpush1.bf16.msra.mxu0 0
  %493 = vmatprep.subr.bf16.mxu0 0
  %494 = vmatpush1.bf16.msra.mxu0 0
  %495 = vmatprep.subr.bf16.mxu0 0
  %496 = vmatpush1.bf16.msra.mxu0 0
  %497 = vmatprep.subr.bf16.mxu0 0
  %498 = vmatpush1.bf16.msra.mxu0 0
  %499 = vmatprep.subr.bf16.mxu0 0
  %500 = vmatpush1.bf16.msra.mxu0 0
  %501 = vmatprep.subr.bf16.mxu0 0
  %502 = vmatpush1.bf16.msra.mxu0 0
  %503 = vmatprep.subr.bf16.mxu0 0
  %504 = vmatpush1.bf16.msra.mxu0 0
  %505 = vmatprep.subr.bf16.mxu0 0
  %506 = vmatpush1.bf16.msra.mxu0 0
  %507 = vmatprep.subr.bf16.mxu0 0
  %508 = vmatpush1.bf16.msra.mxu0 0
  %509 = vmatprep.subr.bf16.mxu0 0
  %510 = vmatpush1.bf16.msra.mxu0 0
  %511 = vmatprep.subr.bf16.mxu0 0
  %512 = vmatpush1.bf16.msra.mxu0 0
  %513 = vmatprep.mubr.bf16.mxu0 0
  %514 = vmatmul.mubr.bf16.gmra.mrb[0].mxu0 %v161
  %v515 = vpop.f32.mrb[0].mxu0
  %v516 = vadd.f32 %v463, %v515
  %v517 = vpop.f32.mrb[0].mxu0
  %v518 = vpop.f32.mrb[0].mxu0
  %v519 = vadd.f32 %v466, %v518
  %v520 = vpop.f32.mrb[0].mxu0
  %521 = vdwg.mxu0
  %v522 = vld [vmem:[%s13] sm:$0xf]
  %v523 = vld [vmem:[%s13 + $0x4] sm:$0xf]
  %v526 = vunpack.c.l.b16 %v522
  %v527 = vunpack.c.l.b16 %v523
  %v528 = vpack.c.b16 %v527, %v526
  %530 = vmatprep.subr.bf16.mxu0 0
  %531 = vmatpush1.bf16.msra.mxu0 %v528
  %532 = vmatprep.subr.bf16.mxu0 0
  %533 = vmatpush1.bf16.msra.mxu0 0
  %534 = vmatprep.subr.bf16.mxu0 0
  %535 = vmatpush1.bf16.msra.mxu0 0
  %536 = vmatprep.subr.bf16.mxu0 0
  %537 = vmatpush1.bf16.msra.mxu0 0
  %538 = vmatprep.subr.bf16.mxu0 0
  %539 = vmatpush1.bf16.msra.mxu0 0
  %540 = vmatprep.subr.bf16.mxu0 0
  %541 = vmatpush1.bf16.msra.mxu0 0
  %542 = vmatprep.subr.bf16.mxu0 0
  %543 = vmatpush1.bf16.msra.mxu0 0
  %544 = vmatprep.subr.bf16.mxu0 0
  %545 = vmatpush1.bf16.msra.mxu0 0
  %546 = vmatprep.subr.bf16.mxu0 0
  %547 = vmatpush1.bf16.msra.mxu0 0
  %548 = vmatprep.subr.bf16.mxu0 0
  %549 = vmatpush1.bf16.msra.mxu0 0
  %550 = vmatprep.subr.bf16.mxu0 0
  %551 = vmatpush1.bf16.msra.mxu0 0
  %552 = vmatprep.subr.bf16.mxu0 0
  %553 = vmatpush1.bf16.msra.mxu0 0
  %554 = vmatprep.subr.bf16.mxu0 0
  %555 = vmatpush1.bf16.msra.mxu0 0
  %556 = vmatprep.subr.bf16.mxu0 0
  %557 = vmatpush1.bf16.msra.mxu0 0
  %558 = vmatprep.subr.bf16.mxu0 0
  %559 = vmatpush1.bf16.msra.mxu0 0
  %560 = vmatprep.subr.bf16.mxu0 0
  %561 = vmatpush1.bf16.msra.mxu0 0
  %562 = vmatprep.mubr.bf16.mxu0 0
  %563 = vmatmul.mubr.bf16.gmra.mrb[0].mxu0 %v219
  %v564 = vpop.f32.mrb[0].mxu0
  %v565 = vadd.f32 0.0, %v564
  %v566 = vpop.f32.mrb[0].mxu0
  %v567 = vpop.f32.mrb[0].mxu0
  %v568 = vadd.f32 0.0, %v567
  %v569 = vpop.f32.mrb[0].mxu0
  %570 = vdwg.mxu0
  %v571 = vadd.f32 %v516, %v565
  %v572 = vadd.f32 %v519, %v568
  %v573 = vld [vmem:[%s14] sm:$0x1]
  %v575 = vlaneseq
  %v576 = vshrl.u32 %v575, 7
  %v577 = vsub.s32 0, %v576
  %v578 = vrot.slane %v573, %v577
  %v580 = vadd.f32 %v571, %v578
  %v581 = vadd.f32 %v572, %v578
  %v582 = vmax.f32 %v580, 0.0
  %v583 = vmax.f32 %v581, 0.0
  %v584 = vpack.c.bf16 %v583, %v582
  %v585 = vld [vmem:[%s15] sm:$0xf]
  %v586 = vld [vmem:[%s15 + $0x4] sm:$0xf]
  %v587 = vld [vmem:[%s15 + $0x8] sm:$0xf]
  %v588 = vld [vmem:[%s15 + $0xc] sm:$0xf]
  %v589 = vld [vmem:[%s16] sm:$0x1]
  %v591 = vlaneseq
  %v592 = vshrl.u32 %v591, 7
  %v593 = vsub.s32 0, %v592
  %v594 = vrot.slane %v589, %v593
  %v600 = vunpack.c.l.b16 %v585
  %v601 = vunpack.c.l.b16 %v586
  %v602 = vunpack.c.l.b16 %v587
  %v603 = vunpack.c.l.b16 %v588
  %v604 = vpack.c.b16 %v601, %v600
  %v605 = vpack.c.b16 %v603, %v602
  %v609 = vsel %vm98, %v584, 0
  %611 = vmatprep.subr.bf16.mxu0 0
  %612 = vmatpush1.bf16.msra.mxu0 %v604
  %613 = vmatprep.subr.bf16.mxu0 0
  %614 = vmatpush1.bf16.msra.mxu0 %v605
  %615 = vmatprep.subr.bf16.mxu0 0
  %616 = vmatpush1.bf16.msra.mxu0 0
  %617 = vmatprep.subr.bf16.mxu0 0
  %618 = vmatpush1.bf16.msra.mxu0 0
  %619 = vmatprep.subr.bf16.mxu0 0
  %620 = vmatpush1.bf16.msra.mxu0 0
  %621 = vmatprep.subr.bf16.mxu0 0
  %622 = vmatpush1.bf16.msra.mxu0 0
  %623 = vmatprep.subr.bf16.mxu0 0
  %624 = vmatpush1.bf16.msra.mxu0 0
  %625 = vmatprep.subr.bf16.mxu0 0
  %626 = vmatpush1.bf16.msra.mxu0 0
  %627 = vmatprep.subr.bf16.mxu0 0
  %628 = vmatpush1.bf16.msra.mxu0 0
  %629 = vmatprep.subr.bf16.mxu0 0
  %630 = vmatpush1.bf16.msra.mxu0 0
  %631 = vmatprep.subr.bf16.mxu0 0
  %632 = vmatpush1.bf16.msra.mxu0 0
  %633 = vmatprep.subr.bf16.mxu0 0
  %634 = vmatpush1.bf16.msra.mxu0 0
  %635 = vmatprep.subr.bf16.mxu0 0
  %636 = vmatpush1.bf16.msra.mxu0 0
  %637 = vmatprep.subr.bf16.mxu0 0
  %638 = vmatpush1.bf16.msra.mxu0 0
  %639 = vmatprep.subr.bf16.mxu0 0
  %640 = vmatpush1.bf16.msra.mxu0 0
  %641 = vmatprep.subr.bf16.mxu0 0
  %642 = vmatpush1.bf16.msra.mxu0 0
  %643 = vmatprep.mubr.bf16.mxu0 0
  %644 = vmatmul.mubr.bf16.gmra.mrb[0].mxu0 %v609
  %v645 = vpop.f32.mrb[0].mxu0
  %v646 = vadd.f32 %v594, %v645
  %v647 = vpop.f32.mrb[0].mxu0
  %v648 = vpop.f32.mrb[0].mxu0
  %v649 = vadd.f32 %v594, %v648
  %v650 = vpop.f32.mrb[0].mxu0
  %651 = vdwg.mxu0
  %v652 = vmax.f32 %v646, 0.0
  %v653 = vmax.f32 %v649, 0.0
  %v654 = vpack.c.bf16 %v653, %v652
  %v655 = vld [vmem:[%s17] sm:$0xf]
  %v656 = vld [vmem:[%s17 + $0x4] sm:$0xf]
  %v657 = vld [vmem:[%s18] sm:$0x1]
  %v659 = vlaneseq
  %v660 = vshrl.u32 %v659, 7
  %v661 = vsub.s32 0, %v660
  %v662 = vrot.slane %v657, %v661
  %v666 = vunpack.c.l.b16 %v655
  %v667 = vunpack.c.l.b16 %v656
  %v668 = vpack.c.b16 %v667, %v666
  %v671 = vsel %vm217, %v654, 0
  %673 = vmatprep.subr.bf16.mxu0 0
  %674 = vmatpush1.bf16.msra.mxu0 %v668
  %675 = vmatprep.subr.bf16.mxu0 0
  %676 = vmatpush1.bf16.msra.mxu0 0
  %677 = vmatprep.subr.bf16.mxu0 0
  %678 = vmatpush1.bf16.msra.mxu0 0
  %679 = vmatprep.subr.bf16.mxu0 0
  %680 = vmatpush1.bf16.msra.mxu0 0
  %681 = vmatprep.subr.bf16.mxu0 0
  %682 = vmatpush1.bf16.msra.mxu0 0
  %683 = vmatprep.subr.bf16.mxu0 0
  %684 = vmatpush1.bf16.msra.mxu0 0
  %685 = vmatprep.subr.bf16.mxu0 0
  %686 = vmatpush1.bf16.msra.mxu0 0
  %687 = vmatprep.subr.bf16.mxu0 0
  %688 = vmatpush1.bf16.msra.mxu0 0
  %689 = vmatprep.subr.bf16.mxu0 0
  %690 = vmatpush1.bf16.msra.mxu0 0
  %691 = vmatprep.subr.bf16.mxu0 0
  %692 = vmatpush1.bf16.msra.mxu0 0
  %693 = vmatprep.subr.bf16.mxu0 0
  %694 = vmatpush1.bf16.msra.mxu0 0
  %695 = vmatprep.subr.bf16.mxu0 0
  %696 = vmatpush1.bf16.msra.mxu0 0
  %697 = vmatprep.subr.bf16.mxu0 0
  %698 = vmatpush1.bf16.msra.mxu0 0
  %699 = vmatprep.subr.bf16.mxu0 0
  %700 = vmatpush1.bf16.msra.mxu0 0
  %701 = vmatprep.subr.bf16.mxu0 0
  %702 = vmatpush1.bf16.msra.mxu0 0
  %703 = vmatprep.subr.bf16.mxu0 0
  %704 = vmatpush1.bf16.msra.mxu0 0
  %705 = vmatprep.mubr.bf16.mxu0 0
  %706 = vmatmul.mubr.bf16.gmra.mrb[0].mxu0 %v671
  %v707 = vpop.f32.mrb[0].mxu0
  %v708 = vadd.f32 %v662, %v707
  %v709 = vpop.f32.mrb[0].mxu0
  %v710 = vpop.f32.mrb[0].mxu0
  %v711 = vadd.f32 %v662, %v710
  %v712 = vpop.f32.mrb[0].mxu0
  %713 = vdwg.mxu0
  %vm714 = vcmp.gt.f32.partialorder %v708, 20.0
  %vm715 = vcmp.gt.f32.partialorder %v711, 20.0
  %v716 = vmin.f32 %v708, 20.0
  %v717 = vmin.f32 %v711, 20.0
  %v718 = vmul.f32 %v716, 1.442695
  %v719 = vpow.pop %v718
  %v720 = vmul.f32 %v717, 1.442695
  %v721 = vpow.pop %v720
  %v722 = vadd.f32 %v719, 1.0
  %v723 = vadd.f32 %v721, 1.0
  %v724 = vlog2.pop %v722
  %v725 = vmul.f32 %v724, 0.6931472
  %v726 = vlog2.pop %v723
  %v727 = vmul.f32 %v726, 0.6931472
  %v728 = vsel %vm714, %v708, %v725
  %v729 = vsel %vm715, %v711, %v727
  %v730 = vadd.f32 %v728, 1e-06
  %v731 = vadd.f32 %v729, 1e-06
  %vm732 = vcmask 23552
  %733 = vst.msk [vmem:[%s20] sm:$0xff] %vm732, %v730
  %734 = vst.msk [vmem:[%s20 + $0x8] sm:$0xff] %vm732, %v731
  // Predicated region
  $region78: #{hybrid_graph_transformer_forward.15} parent=0 // pred_check
    _
  $region79: #{hybrid_graph_transformer_forward.15} parent=0 // pred_check_branch
    %736 = sbr.rel (0) target = $region81
  $region80: #{hybrid_graph_transformer_forward.15} parent=0 // pred_region
    _
  $region81: #{hybrid_graph_transformer_forward.15} parent=0 // pred_fallthru
    _
  // Predicated region
  $region82: #{hybrid_graph_transformer_forward.15} parent=0 // pred_check
    _
  $region83: #{hybrid_graph_transformer_forward.15} parent=0 // pred_check_branch
    %738 = sbr.rel (0) target = $region85
  $region84: #{hybrid_graph_transformer_forward.15} parent=0 // pred_region
    _
  $region85: #{hybrid_graph_transformer_forward.15} parent=0 // pred_fallthru
    _
  // Predicated region
  $region86: #{hybrid_graph_transformer_forward.15} parent=0 // pred_check
    _
  $region87: #{hybrid_graph_transformer_forward.15} parent=0 // pred_check_branch
    %740 = sbr.rel (0) target = $region89
  $region88: #{hybrid_graph_transformer_forward.15} parent=0 // pred_region
    _
  $region89: #{hybrid_graph_transformer_forward.15} parent=0 // pred_fallthru
    _
  // Predicated region
  $region90: #{hybrid_graph_transformer_forward.15} parent=0 // pred_check
    _
  $region91: #{hybrid_graph_transformer_forward.15} parent=0 // pred_check_branch
    %742 = sbr.rel (0) target = $region93
  $region92: #{hybrid_graph_transformer_forward.15} parent=0 // pred_region
    _
  $region93: #{hybrid_graph_transformer_forward.15} parent=0 // pred_fallthru
    _

</llo_original>
